<compile_context>
chip_gen: v7x
topology: tpu7x:2x2x1
jax: 0.10.0
libtpu: 0.0.40
codegen_flags: <defaults>
</compile_context>

<pallas_src>
import functools
import math

import jax
import jax.numpy as jnp
from jax.experimental import pallas as pl
from jax.experimental.pallas import tpu as pltpu


def _round_up(v, m):
    return ((v + m - 1) // m) * m


def _vmem_capacity_bytes():
    try:
        info = pltpu.get_tpu_info()
        cap = getattr(info, "vmem_capacity_bytes", None)
        if cap:
            return int(cap)
    except Exception:
        pass
    return 64 << 20  # conservative fallback: v7x per-TensorCore VMEM


def _mlp_kernel(*refs, n_layers, compute_dtype, precision, relu_last):
    """Fused MLP over one tile of rows.

    refs = (x, w0, b0, w1, b1, ..., wL, bL, out)
    Weights are (f_in, f_out) in the compute dtype; biases are (1, f_out) f32.
    Matmuls accumulate in f32 on the MXU; bias-add / ReLU run in f32; hidden
    activations are cast back to the compute dtype before the next matmul.
    """
    x_ref = refs[0]
    o_ref = refs[-1]
    params = refs[1:-1]

    h = x_ref[...].astype(compute_dtype)              # in-kernel cast (no HBM pass)
    for l in range(n_layers):
        w = params[2 * l][...]                        # (f_in, f_out), compute dtype
        b = params[2 * l + 1][...]                    # (1, f_out), f32
        acc = jnp.dot(h, w, preferred_element_type=jnp.float32,
                      precision=precision) + b
        last = l == n_layers - 1
        if (not last) or relu_last:
            acc = jnp.maximum(acc, 0.0)               # ReLU in f32 (v5e-safe)
        h = acc if last else acc.astype(compute_dtype)
    o_ref[...] = h.astype(o_ref.dtype)


def _run_fused(x2d, ws, bs, *, out_dtype, compute_dtype, precision,
               relu_last, tile_rows):
    rows, in_dim = x2d.shape
    out_dim = ws[-1].shape[1]
    n_layers = len(ws)
    pdims = [in_dim] + [w.shape[1] for w in ws]
    max_pdim = max(pdims)

    budget = int(_vmem_capacity_bytes() * 0.85)
    bytes_params = sum(int(a.size) * a.dtype.itemsize for a in list(ws) + list(bs))

    # Per-row VMEM bytes: double-buffered in/out tiles + live f32 accumulator
    # and compute-dtype activation per layer (x2 headroom).
    c_item = jnp.dtype(compute_dtype).itemsize
    per_row = (2 * in_dim * x2d.dtype.itemsize
               + 2 * out_dim * jnp.dtype(out_dtype).itemsize
               + 2 * max_pdim * (4 + c_item))

    # Row tile: as large as the VMEM budget allows, up to tile_rows, multiple of 8.
    avail = budget - bytes_params - (2 << 20)
    max_tr = max(8, (max(avail, 0) // per_row) // 8 * 8)
    tr = max(8, min(_round_up(min(tile_rows, rows), 8), max_tr))
    grid = (pl.cdiv(rows, tr),)                        # partial last block is masked

    flat_params = []
    for w, b in zip(ws, bs):
        flat_params += [w, b]

    flops = 2 * rows * sum(pdims[l] * pdims[l + 1] for l in range(n_layers))
    bytes_accessed = (int(x2d.size) * x2d.dtype.itemsize + bytes_params
                      + rows * out_dim * jnp.dtype(out_dtype).itemsize)
    cost = pl.CostEstimate(flops=flops, transcendentals=0,
                           bytes_accessed=bytes_accessed)

    kernel = functools.partial(_mlp_kernel, n_layers=n_layers,
                               compute_dtype=compute_dtype,
                               precision=precision, relu_last=relu_last)

    def _call(single_buffer_params):
        param_kw = {}
        if single_buffer_params:
            # Constant index_map -> nothing to double-buffer; halve VMEM use.
            param_kw = {"pipeline_mode": pl.Buffered(1)}
        in_specs = [pl.BlockSpec((tr, in_dim), lambda i: (i, 0))]
        for w, b in zip(ws, bs):
            in_specs.append(pl.BlockSpec(w.shape, lambda i: (0, 0), **param_kw))
            in_specs.append(pl.BlockSpec(b.shape, lambda i: (0, 0), **param_kw))
        out_spec = pl.BlockSpec((tr, out_dim), lambda i: (i, 0))
        return pl.pallas_call(
            kernel,
            out_shape=jax.ShapeDtypeStruct((rows, out_dim), out_dtype),
            grid_spec=pltpu.PrefetchScalarGridSpec(
                num_scalar_prefetch=0,
                grid=grid,
                in_specs=in_specs,
                out_specs=out_spec,
            ),
            compiler_params=pltpu.CompilerParams(
                dimension_semantics=("parallel",),
                vmem_limit_bytes=budget,
            ),
            cost_estimate=cost,
        )(x2d, *flat_params)

    try:
        return _call(True)      # single-buffered resident weights/biases
    except Exception:
        return _call(False)     # fall back to default double-buffering


def prepare_mlp_params(weights, biases, compute_dtype=jnp.float32):
    """One-time parameter prep (hoisted out of the per-call hot path).

    weights[l]: (f_in_l, f_out_l)  (transpose of torch.nn.Linear.weight)
    biases[l]:  (f_out_l,)
    Hidden feature dims are zero-padded to multiples of 128 (lane-dense and
    mathematically inert since the matching bias entries are zero); the input
    and output dims stay unpadded so activations need no HBM pad/slice passes.
    """
    n = len(weights)
    dims = [weights[0].shape[0]] + [w.shape[1] for w in weights]
    pdims = list(dims)
    for i in range(1, n):                      # hidden dims only
        pdims[i] = _round_up(dims[i], 128)
    pw, pb = [], []
    for l, (w, b) in enumerate(zip(weights, biases)):
        wp = jnp.pad(w.astype(compute_dtype),
                     ((0, pdims[l] - w.shape[0]), (0, pdims[l + 1] - w.shape[1])))
        bp = jnp.pad(b.astype(jnp.float32).reshape(1, -1),
                     ((0, 0), (0, pdims[l + 1] - b.shape[0])))
        pw.append(wp)
        pb.append(bp)
    return {"weights": pw, "biases": pb, "compute_dtype": jnp.dtype(compute_dtype)}


def mlp_forward(x, prepared, *, tile_rows=512):
    """Apply the prepared MLP to x of shape (..., in_dim)."""
    pw, pb = prepared["weights"], prepared["biases"]
    compute_dtype = prepared["compute_dtype"]
    precision = (jax.lax.Precision.HIGHEST
                 if compute_dtype == jnp.dtype(jnp.float32)
                 else jax.lax.Precision.DEFAULT)
    in_dim = pw[0].shape[0]
    out_dim = pw[-1].shape[1]
    assert x.shape[-1] == in_dim, (x.shape, in_dim)

    lead_shape = x.shape[:-1]
    x2d = x.reshape(-1, in_dim)                # free reshape, no copy
    out_dtype = x.dtype

    budget = int(_vmem_capacity_bytes() * 0.85)
    bytes_params = sum(int(a.size) * a.dtype.itemsize for a in pw + pb)

    if bytes_params <= int(0.7 * budget):
        out2d = _run_fused(x2d, pw, pb, out_dtype=out_dtype,
                           compute_dtype=compute_dtype, precision=precision,
                           relu_last=False, tile_rows=tile_rows)
    else:
        # Non-resident fallback: run layer-by-layer so only one layer's weights
        # must be VMEM-resident at a time (intermediates round-trip HBM).
        # TODO(synk): true N-tiling of a single oversized layer via a second grid axis.
        h = x2d
        n = len(pw)
        for l in range(n):
            lbytes = (int(pw[l].size) * pw[l].dtype.itemsize
                      + int(pb[l].size) * pb[l].dtype.itemsize)
            if lbytes > int(0.7 * budget):
                raise ValueError(
                    f"layer {l} parameters ({lbytes} B) exceed the VMEM budget "
                    f"({budget} B); N-tiling is not implemented")
            last = l == n - 1
            h = _run_fused(h, [pw[l]], [pb[l]],
                           out_dtype=(out_dtype if last else compute_dtype),
                           compute_dtype=compute_dtype, precision=precision,
                           relu_last=not last, tile_rows=tile_rows)
        out2d = h
    return out2d.reshape(*lead_shape, out_dim)


def init_mlp_params(key, in_dim, out_dim, hidden_list, dtype=jnp.float32):
    """torch.nn.Linear-style init: U(-1/sqrt(fan_in), 1/sqrt(fan_in))."""
    dims = [in_dim] + list(hidden_list) + [out_dim]
    weights, biases = [], []
    for l in range(len(dims) - 1):
        f_in, f_out = dims[l], dims[l + 1]
        key, wk, bk = jax.random.split(key, 3)
        bound = 1.0 / math.sqrt(f_in)
        weights.append(jax.random.uniform(wk, (f_in, f_out), dtype, -bound, bound))
        biases.append(jax.random.uniform(bk, (f_out,), dtype, -bound, bound))
    return weights, biases


def _reference_mlp(x, weights, biases):
    lead = x.shape[:-1]
    h = x.reshape(-1, x.shape[-1]).astype(jnp.float32)
    for l, (w, b) in enumerate(zip(weights, biases)):
        h = jnp.dot(h, w.astype(jnp.float32),
                    precision=jax.lax.Precision.HIGHEST) + b.astype(jnp.float32)
        if l < len(weights) - 1:
            h = jnp.maximum(h, 0.0)
    return h.reshape(*lead, -1)


if __name__ == "__main__":
    key = jax.random.PRNGKey(0)

    # Small shapes consistent with the module: feature axis last.
    batch, seq = 2, 8
    in_dim, out_dim = 16, 8
    hidden_list = [32, 32]

    key, pk, xk = jax.random.split(key, 3)
    weights, biases = init_mlp_params(pk, in_dim, out_dim, hidden_list)
    x = jax.random.normal(xk, (batch, seq, in_dim), jnp.float32)

    ref = _reference_mlp(x, weights, biases)

    # Default path: f32 operands + HIGHEST-precision MXU -> faithful to the
    # PyTorch f32 module, tight tolerance.
    prep_f32 = prepare_mlp_params(weights, biases)        # compute_dtype=f32
    out_f32 = jax.block_until_ready(mlp_forward(x, prep_f32))
    assert out_f32.shape == (batch, seq, out_dim), out_f32.shape
    assert jnp.allclose(out_f32, ref, atol=1e-5, rtol=1e-5)

    # Opt-in fast MXU path (bf16 operands, f32 accumulation): loose tolerance.
    prep_bf16 = prepare_mlp_params(weights, biases, compute_dtype=jnp.bfloat16)
    out_bf16 = jax.block_until_ready(mlp_forward(x, prep_bf16))
    assert out_bf16.shape == (batch, seq, out_dim), out_bf16.shape
    assert jnp.allclose(out_bf16, ref, atol=3e-2, rtol=3e-2)

    print("KERNEL_OK")
</pallas_src>

<mosaic_0001>
module attributes {stable_mosaic.version = 11 : i64} {
  func.func @_mlp_kernel(%arg0: i32, %arg1: memref<16x16xf32, #tpu.memory_space<vmem>>, %arg2: memref<16x128xf32, #tpu.memory_space<vmem>>, %arg3: memref<1x128xf32, #tpu.memory_space<vmem>>, %arg4: memref<128x128xf32, #tpu.memory_space<vmem>>, %arg5: memref<1x128xf32, #tpu.memory_space<vmem>>, %arg6: memref<128x8xf32, #tpu.memory_space<vmem>>, %arg7: memref<1x8xf32, #tpu.memory_space<vmem>>, %arg8: memref<16x8xf32, #tpu.memory_space<vmem>>) attributes {dimension_semantics = [#tpu.dimension_semantics<parallel>], iteration_bounds = array<i64: 1>, scalar_prefetch = 0 : i64, scratch_operands = 0 : i64, tpu.core_type = #tpu.core_type<tc>, window_params = [{transform_indices = @transform_0, window_bounds = array<i64: 16, 16>}, {pipeline_mode = #tpu.pipeline_mode<synchronous>, transform_indices = @transform_1, window_bounds = array<i64: 16, 128>}, {pipeline_mode = #tpu.pipeline_mode<synchronous>, transform_indices = @transform_2, window_bounds = array<i64: 1, 128>}, {pipeline_mode = #tpu.pipeline_mode<synchronous>, transform_indices = @transform_3, window_bounds = array<i64: 128, 128>}, {pipeline_mode = #tpu.pipeline_mode<synchronous>, transform_indices = @transform_4, window_bounds = array<i64: 1, 128>}, {pipeline_mode = #tpu.pipeline_mode<synchronous>, transform_indices = @transform_5, window_bounds = array<i64: 128, 8>}, {pipeline_mode = #tpu.pipeline_mode<synchronous>, transform_indices = @transform_6, window_bounds = array<i64: 1, 8>}, {transform_indices = @transform_7, window_bounds = array<i64: 16, 8>}]} {
    %c0 = arith.constant 0 : index
    %c0_0 = arith.constant 0 : index
    %0 = vector.load %arg1[%c0, %c0_0] : memref<16x16xf32, #tpu.memory_space<vmem>>, vector<16x16xf32>
    %c0_1 = arith.constant 0 : index
    %c0_2 = arith.constant 0 : index
    %1 = vector.load %arg2[%c0_1, %c0_2] : memref<16x128xf32, #tpu.memory_space<vmem>>, vector<16x128xf32>
    %c0_3 = arith.constant 0 : index
    %c0_4 = arith.constant 0 : index
    %2 = vector.load %arg3[%c0_3, %c0_4] : memref<1x128xf32, #tpu.memory_space<vmem>>, vector<1x128xf32>
    %cst = arith.constant dense<0.000000e+00> : vector<16x128xf32>
    %3 = tpu.matmul %0, %1, %cst {dimension_numbers = #tpu.dot_dimension_numbers<[1], [0], [0], [1], [0, 0, 1, 1], [], []>, precision = #tpu.contract_precision<fp32>} : vector<16x16xf32>, vector<16x128xf32>, vector<16x128xf32> -> vector<16x128xf32>
    %4 = vector.broadcast %2 : vector<1x128xf32> to vector<16x128xf32>
    %5 = arith.addf %3, %4 : vector<16x128xf32>
    %cst_5 = arith.constant 0.000000e+00 : f32
    %6 = vector.broadcast %cst_5 : f32 to vector<16x128xf32>
    %7 = arith.maximumf %5, %6 : vector<16x128xf32>
    %c0_6 = arith.constant 0 : index
    %c0_7 = arith.constant 0 : index
    %8 = vector.load %arg4[%c0_6, %c0_7] : memref<128x128xf32, #tpu.memory_space<vmem>>, vector<128x128xf32>
    %c0_8 = arith.constant 0 : index
    %c0_9 = arith.constant 0 : index
    %9 = vector.load %arg5[%c0_8, %c0_9] : memref<1x128xf32, #tpu.memory_space<vmem>>, vector<1x128xf32>
    %cst_10 = arith.constant dense<0.000000e+00> : vector<16x128xf32>
    %10 = tpu.matmul %7, %8, %cst_10 {dimension_numbers = #tpu.dot_dimension_numbers<[1], [0], [0], [1], [0, 0, 1, 1], [], []>, precision = #tpu.contract_precision<fp32>} : vector<16x128xf32>, vector<128x128xf32>, vector<16x128xf32> -> vector<16x128xf32>
    %11 = vector.broadcast %9 : vector<1x128xf32> to vector<16x128xf32>
    %12 = arith.addf %10, %11 : vector<16x128xf32>
    %cst_11 = arith.constant 0.000000e+00 : f32
    %13 = vector.broadcast %cst_11 : f32 to vector<16x128xf32>
    %14 = arith.maximumf %12, %13 : vector<16x128xf32>
    %c0_12 = arith.constant 0 : index
    %c0_13 = arith.constant 0 : index
    %15 = vector.load %arg6[%c0_12, %c0_13] : memref<128x8xf32, #tpu.memory_space<vmem>>, vector<128x8xf32>
    %c0_14 = arith.constant 0 : index
    %c0_15 = arith.constant 0 : index
    %16 = vector.load %arg7[%c0_14, %c0_15] : memref<1x8xf32, #tpu.memory_space<vmem>>, vector<1x8xf32>
    %cst_16 = arith.constant dense<0.000000e+00> : vector<16x8xf32>
    %17 = tpu.matmul %14, %15, %cst_16 {dimension_numbers = #tpu.dot_dimension_numbers<[1], [0], [0], [1], [0, 0, 1, 1], [], []>, precision = #tpu.contract_precision<fp32>} : vector<16x128xf32>, vector<128x8xf32>, vector<16x8xf32> -> vector<16x8xf32>
    %18 = vector.broadcast %16 : vector<1x8xf32> to vector<16x8xf32>
    %19 = arith.addf %17, %18 : vector<16x8xf32>
    %c0_17 = arith.constant 0 : index
    %c0_18 = arith.constant 0 : index
    %20 = vector.load %arg8[%c0_17, %c0_18] : memref<16x8xf32, #tpu.memory_space<vmem>>, vector<16x8xf32>
    tpu.vector_store %arg8[%c0_17, %c0_18], %19 {strides = array<i32>} : memref<16x8xf32, #tpu.memory_space<vmem>>, vector<16x8xf32>,
    return
  }
  func.func @transform_0(%arg0: i32) -> (i32, i32) {
    %c0_i32 = arith.constant 0 : i32
    %c0_i32_0 = arith.constant 0 : i32
    return %arg0, %c0_i32 : i32, i32
  }
  func.func @transform_1(%arg0: i32) -> (i32, i32) {
    %c0_i32 = arith.constant 0 : i32
    %c0_i32_0 = arith.constant 0 : i32
    %c0_i32_1 = arith.constant 0 : i32
    return %c0_i32, %c0_i32_0 : i32, i32
  }
  func.func @transform_2(%arg0: i32) -> (i32, i32) {
    %c0_i32 = arith.constant 0 : i32
    %c0_i32_0 = arith.constant 0 : i32
    %c0_i32_1 = arith.constant 0 : i32
    return %c0_i32, %c0_i32_0 : i32, i32
  }
  func.func @transform_3(%arg0: i32) -> (i32, i32) {
    %c0_i32 = arith.constant 0 : i32
    %c0_i32_0 = arith.constant 0 : i32
    %c0_i32_1 = arith.constant 0 : i32
    return %c0_i32, %c0_i32_0 : i32, i32
  }
  func.func @transform_4(%arg0: i32) -> (i32, i32) {
    %c0_i32 = arith.constant 0 : i32
    %c0_i32_0 = arith.constant 0 : i32
    %c0_i32_1 = arith.constant 0 : i32
    return %c0_i32, %c0_i32_0 : i32, i32
  }
  func.func @transform_5(%arg0: i32) -> (i32, i32) {
    %c0_i32 = arith.constant 0 : i32
    %c0_i32_0 = arith.constant 0 : i32
    %c0_i32_1 = arith.constant 0 : i32
    return %c0_i32, %c0_i32_0 : i32, i32
  }
  func.func @transform_6(%arg0: i32) -> (i32, i32) {
    %c0_i32 = arith.constant 0 : i32
    %c0_i32_0 = arith.constant 0 : i32
    %c0_i32_1 = arith.constant 0 : i32
    return %c0_i32, %c0_i32_0 : i32, i32
  }
  func.func @transform_7(%arg0: i32) -> (i32, i32) {
    %c0_i32 = arith.constant 0 : i32
    %c0_i32_0 = arith.constant 0 : i32
    return %arg0, %c0_i32 : i32, i32
  }
}

module attributes {stable_mosaic.version = 11 : i64} {
  func.func @_mlp_kernel(%arg0: i32, %arg1: memref<16x16xf32, #tpu.memory_space<vmem>>, %arg2: memref<16x128xf32, #tpu.memory_space<vmem>>, %arg3: memref<1x128xf32, #tpu.memory_space<vmem>>, %arg4: memref<128x128xf32, #tpu.memory_space<vmem>>, %arg5: memref<1x128xf32, #tpu.memory_space<vmem>>, %arg6: memref<128x8xf32, #tpu.memory_space<vmem>>, %arg7: memref<1x8xf32, #tpu.memory_space<vmem>>, %arg8: memref<16x8xf32, #tpu.memory_space<vmem>>) attributes {dimension_semantics = [#tpu.dimension_semantics<parallel>], iteration_bounds = array<i64: 1>, scalar_prefetch = 0 : i64, scratch_operands = 0 : i64, tpu.core_type = #tpu.core_type<tc>, window_params = [{transform_indices = @transform_0, window_bounds = array<i64: 16, 16>}, {pipeline_mode = #tpu.pipeline_mode<synchronous>, transform_indices = @transform_1, window_bounds = array<i64: 16, 128>}, {pipeline_mode = #tpu.pipeline_mode<synchronous>, transform_indices = @transform_2, window_bounds = array<i64: 1, 128>}, {pipeline_mode = #tpu.pipeline_mode<synchronous>, transform_indices = @transform_3, window_bounds = array<i64: 128, 128>}, {pipeline_mode = #tpu.pipeline_mode<synchronous>, transform_indices = @transform_4, window_bounds = array<i64: 1, 128>}, {pipeline_mode = #tpu.pipeline_mode<synchronous>, transform_indices = @transform_5, window_bounds = array<i64: 128, 8>}, {pipeline_mode = #tpu.pipeline_mode<synchronous>, transform_indices = @transform_6, window_bounds = array<i64: 1, 8>}, {transform_indices = @transform_7, window_bounds = array<i64: 16, 8>}]} {
    %c0 = arith.constant 0 : index
    %c0_0 = arith.constant 0 : index
    %0 = vector.load %arg1[%c0, %c0_0] : memref<16x16xf32, #tpu.memory_space<vmem>>, vector<16x16xf32>
    %c0_1 = arith.constant 0 : index
    %c0_2 = arith.constant 0 : index
    %1 = vector.load %arg2[%c0_1, %c0_2] : memref<16x128xf32, #tpu.memory_space<vmem>>, vector<16x128xf32>
    %c0_3 = arith.constant 0 : index
    %c0_4 = arith.constant 0 : index
    %2 = vector.load %arg3[%c0_3, %c0_4] : memref<1x128xf32, #tpu.memory_space<vmem>>, vector<1x128xf32>
    %cst = arith.constant dense<0.000000e+00> : vector<16x128xf32>
    %3 = tpu.matmul %0, %1, %cst {dimension_numbers = #tpu.dot_dimension_numbers<[1], [0], [0], [1], [0, 0, 1, 1], [], []>, precision = #tpu.contract_precision<fp32>} : vector<16x16xf32>, vector<16x128xf32>, vector<16x128xf32> -> vector<16x128xf32>
    %4 = vector.broadcast %2 : vector<1x128xf32> to vector<16x128xf32>
    %5 = arith.addf %3, %4 : vector<16x128xf32>
    %cst_5 = arith.constant 0.000000e+00 : f32
    %6 = vector.broadcast %cst_5 : f32 to vector<16x128xf32>
    %7 = arith.maximumf %5, %6 : vector<16x128xf32>
    %c0_6 = arith.constant 0 : index
    %c0_7 = arith.constant 0 : index
    %8 = vector.load %arg4[%c0_6, %c0_7] : memref<128x128xf32, #tpu.memory_space<vmem>>, vector<128x128xf32>
    %c0_8 = arith.constant 0 : index
    %c0_9 = arith.constant 0 : index
    %9 = vector.load %arg5[%c0_8, %c0_9] : memref<1x128xf32, #tpu.memory_space<vmem>>, vector<1x128xf32>
    %cst_10 = arith.constant dense<0.000000e+00> : vector<16x128xf32>
    %10 = tpu.matmul %7, %8, %cst_10 {dimension_numbers = #tpu.dot_dimension_numbers<[1], [0], [0], [1], [0, 0, 1, 1], [], []>, precision = #tpu.contract_precision<fp32>} : vector<16x128xf32>, vector<128x128xf32>, vector<16x128xf32> -> vector<16x128xf32>
    %11 = vector.broadcast %9 : vector<1x128xf32> to vector<16x128xf32>
    %12 = arith.addf %10, %11 : vector<16x128xf32>
    %cst_11 = arith.constant 0.000000e+00 : f32
    %13 = vector.broadcast %cst_11 : f32 to vector<16x128xf32>
    %14 = arith.maximumf %12, %13 : vector<16x128xf32>
    %c0_12 = arith.constant 0 : index
    %c0_13 = arith.constant 0 : index
    %15 = vector.load %arg6[%c0_12, %c0_13] : memref<128x8xf32, #tpu.memory_space<vmem>>, vector<128x8xf32>
    %c0_14 = arith.constant 0 : index
    %c0_15 = arith.constant 0 : index
    %16 = vector.load %arg7[%c0_14, %c0_15] : memref<1x8xf32, #tpu.memory_space<vmem>>, vector<1x8xf32>
    %cst_16 = arith.constant dense<0.000000e+00> : vector<16x8xf32>
    %17 = tpu.matmul %14, %15, %cst_16 {dimension_numbers = #tpu.dot_dimension_numbers<[1], [0], [0], [1], [0, 0, 1, 1], [], []>, precision = #tpu.contract_precision<fp32>} : vector<16x128xf32>, vector<128x8xf32>, vector<16x8xf32> -> vector<16x8xf32>
    %18 = vector.broadcast %16 : vector<1x8xf32> to vector<16x8xf32>
    %19 = arith.addf %17, %18 : vector<16x8xf32>
    %c0_17 = arith.constant 0 : index
    %c0_18 = arith.constant 0 : index
    %20 = vector.load %arg8[%c0_17, %c0_18] : memref<16x8xf32, #tpu.memory_space<vmem>>, vector<16x8xf32>
    tpu.vector_store %arg8[%c0_17, %c0_18], %19 {strides = array<i32>} : memref<16x8xf32, #tpu.memory_space<vmem>>, vector<16x8xf32>,
    return
  }
  func.func @transform_0(%arg0: i32) -> (i32, i32) {
    %c0_i32 = arith.constant 0 : i32
    %c0_i32_0 = arith.constant 0 : i32
    return %arg0, %c0_i32 : i32, i32
  }
  func.func @transform_1(%arg0: i32) -> (i32, i32) {
    %c0_i32 = arith.constant 0 : i32
    %c0_i32_0 = arith.constant 0 : i32
    %c0_i32_1 = arith.constant 0 : i32
    return %c0_i32, %c0_i32_0 : i32, i32
  }
  func.func @transform_2(%arg0: i32) -> (i32, i32) {
    %c0_i32 = arith.constant 0 : i32
    %c0_i32_0 = arith.constant 0 : i32
    %c0_i32_1 = arith.constant 0 : i32
    return %c0_i32, %c0_i32_0 : i32, i32
  }
  func.func @transform_3(%arg0: i32) -> (i32, i32) {
    %c0_i32 = arith.constant 0 : i32
    %c0_i32_0 = arith.constant 0 : i32
    %c0_i32_1 = arith.constant 0 : i32
    return %c0_i32, %c0_i32_0 : i32, i32
  }
  func.func @transform_4(%arg0: i32) -> (i32, i32) {
    %c0_i32 = arith.constant 0 : i32
    %c0_i32_0 = arith.constant 0 : i32
    %c0_i32_1 = arith.constant 0 : i32
    return %c0_i32, %c0_i32_0 : i32, i32
  }
  func.func @transform_5(%arg0: i32) -> (i32, i32) {
    %c0_i32 = arith.constant 0 : i32
    %c0_i32_0 = arith.constant 0 : i32
    %c0_i32_1 = arith.constant 0 : i32
    return %c0_i32, %c0_i32_0 : i32, i32
  }
  func.func @transform_6(%arg0: i32) -> (i32, i32) {
    %c0_i32 = arith.constant 0 : i32
    %c0_i32_0 = arith.constant 0 : i32
    %c0_i32_1 = arith.constant 0 : i32
    return %c0_i32, %c0_i32_0 : i32, i32
  }
  func.func @transform_7(%arg0: i32) -> (i32, i32) {
    %c0_i32 = arith.constant 0 : i32
    %c0_i32_0 = arith.constant 0 : i32
    return %arg0, %c0_i32 : i32, i32
  }
}

</mosaic_0001>

<llo_original>
// kernel: tpu_custom_call.1
$region0: #{tpu_custom_call.1}
  #allocation0 [shape = 'u32[]', space=smem, size = 0x4, offset = 0x4, fixed_abs, tag = 'smem constant byte address 0x4 - core index']
  #allocation1 [shape = 'u32[144,128]{1,0:T(1,128)}', space=vmem, size = 0x12000, scoped, tag = 'internal scratch']
  %s0 = inlined_call_operand.vmem [shape: f32[16,16], index: 0, kind: input, shape index: {}]
  %s1 = inlined_call_operand.hbm [shape: f32[16,128], index: 1, kind: input, shape index: {}]
  %s2 = inlined_call_operand.vmem [shape: f32[1,128], index: 2, kind: input, shape index: {}]
  %s3 = inlined_call_operand.vmem [shape: f32[128,128], index: 3, kind: input, shape index: {}]
  %s4 = inlined_call_operand.vmem [shape: f32[1,128], index: 4, kind: input, shape index: {}]
  %s5 = inlined_call_operand.vmem [shape: f32[128,8], index: 5, kind: input, shape index: {}]
  %s6 = inlined_call_operand.vmem [shape: f32[1,8], index: 6, kind: input, shape index: {}]
  %s7 = inlined_call_operand.vmem [shape: f32[16,8], index: 7, kind: output, shape index: {}]
  %s8 = sld [smem:[#allocation0]]
  $region42: #{tpu_custom_call.1} parent=0
    _
  %s10 = ssub.s32 1, %s8
  %s11 = scalar_select 0, %s10, %s8
  $region1: #{tpu_custom_call.1} parent=0
    #allocation2 [shape = 'u8[8192]{0}', space=vmem, size = 0x2000, scoped, tag = 'input window, operand 1, single buffered']
    #allocation3 [shape = 's32[1]{0}', space=sflag, size = 0x4, scoped, tag = 'scoped memory for tpu_custom_call.1']
    %12 = vsyncpa [#allocation3], 0
    // Predicated region
    $region2: #{tpu_custom_call.1} parent=1 // pred_check
      _
    $region3: #{tpu_custom_call.1} parent=1 // pred_check_branch
      %14 = sbr.rel (0) target = $region5
    $region4: #{tpu_custom_call.1} parent=1 // pred_region
      _
    $region5: #{tpu_custom_call.1} parent=1 // pred_fallthru
      _
    // Predicated region
    $region6: #{tpu_custom_call.1} parent=1 // pred_check
      _
    $region7: #{tpu_custom_call.1} parent=1 // pred_check_branch
      %16 = sbr.rel (0) target = $region9
    $region8: #{tpu_custom_call.1} parent=1 // pred_region
      %s18 = ssub.s32 256, 256
      %19 = vsyncadd [#allocation3], %s18
      %s20 = sshll.u32 [#allocation2], 4
      %s21 = int_to_ptr.vmem [resolvable:$true] %s20
      %26 = dma.hbm_to_vmem [thread:$0]  %s1, 256, %s21, [#allocation3], 128, 128, 8
    $region9: #{tpu_custom_call.1} parent=1 // pred_fallthru
      _
    // Predicated region
    $region10: #{tpu_custom_call.1} parent=1 // pred_check
      _
    $region11: #{tpu_custom_call.1} parent=1 // pred_check_branch
      %28 = sbr.rel (0) target = $region13
    $region12: #{tpu_custom_call.1} parent=1 // pred_region
      _
    $region13: #{tpu_custom_call.1} parent=1 // pred_fallthru
      _
    // Predicated region
    $region14: #{tpu_custom_call.1} parent=1 // pred_check
      _
    $region15: #{tpu_custom_call.1} parent=1 // pred_check_branch
      %30 = sbr.rel (0) target = $region17
    $region16: #{tpu_custom_call.1} parent=1 // pred_region
      _
    $region17: #{tpu_custom_call.1} parent=1 // pred_fallthru
      _
    // Predicated region
    $region18: #{tpu_custom_call.1} parent=1 // pred_check
      _
    $region19: #{tpu_custom_call.1} parent=1 // pred_check_branch
      %32 = sbr.rel (0) target = $region21
    $region20: #{tpu_custom_call.1} parent=1 // pred_region
      _
    $region21: #{tpu_custom_call.1} parent=1 // pred_fallthru
      _
    // Predicated region
    $region22: #{tpu_custom_call.1} parent=1 // pred_check
      _
    $region23: #{tpu_custom_call.1} parent=1 // pred_check_branch
      %34 = sbr.rel (0) target = $region25
    $region24: #{tpu_custom_call.1} parent=1 // pred_region
      _
    $region25: #{tpu_custom_call.1} parent=1 // pred_fallthru
      _
    // Predicated region
    $region26: #{tpu_custom_call.1} parent=1 // pred_check
      _
    $region27: #{tpu_custom_call.1} parent=1 // pred_check_branch
      %36 = sbr.rel (0) target = $region29
    $region28: #{tpu_custom_call.1} parent=1 // pred_region
      _
    $region29: #{tpu_custom_call.1} parent=1 // pred_fallthru
      _
    // Predicated region
    $region30: #{tpu_custom_call.1} parent=1 // pred_check
      _
    $region31: #{tpu_custom_call.1} parent=1 // pred_check_branch
      %38 = sbr.rel (0) target = $region33
    $region32: #{tpu_custom_call.1} parent=1 // pred_region
      %39 = dma.done [#allocation3], 256
    $region33: #{tpu_custom_call.1} parent=1 // pred_fallthru
      _
    %v40 = vld [vmem:[%s0] sm:$0xff]
    %v41 = vld [vmem:[%s0 + $0x8] sm:$0xff]
    %v42 = vld [vmem:[#allocation2] sm:$0xff]
    %v43 = vld [vmem:[#allocation2 + $0x8] sm:$0xff]
    %v44 = vld [vmem:[%s2] sm:$0x1]
    %v46 = vlaneseq
    %v47 = vshrl.u32 %v46, 7
    %v48 = vsub.s32 0, %v47
    %v49 = vrot.slane %v44, %v48
    %vm51 = vcmask 130048
    %v53 = vsel %vm51, %v40, 0
    %v56 = vsel %vm51, %v41, 0
    %58 = vmatprep.subr.mxu0 0.0
    %v59 = vand.u32 %v42, 4294901760
    %60 = vmatpush1.msra.mxu0 %v59
    %61 = vmatprep.subr.mxu0 0.0
    %v62 = vand.u32 %v43, 4294901760
    %63 = vmatpush1.msra.mxu0 %v62
    %64 = vmatprep.subr.mxu0 0.0
    %65 = vmatpush1.msra.mxu0 0.0
    %66 = vmatprep.subr.mxu0 0.0
    %67 = vmatpush1.msra.mxu0 0.0
    %68 = vmatprep.subr.mxu0 0.0
    %69 = vmatpush1.msra.mxu0 0.0
    %70 = vmatprep.subr.mxu0 0.0
    %71 = vmatpush1.msra.mxu0 0.0
    %72 = vmatprep.subr.mxu0 0.0
    %73 = vmatpush1.msra.mxu0 0.0
    %74 = vmatprep.subr.mxu0 0.0
    %75 = vmatpush1.msra.mxu0 0.0
    %76 = vmatprep.subr.mxu0 0.0
    %77 = vmatpush1.msra.mxu0 0.0
    %78 = vmatprep.subr.mxu0 0.0
    %79 = vmatpush1.msra.mxu0 0.0
    %80 = vmatprep.subr.mxu0 0.0
    %81 = vmatpush1.msra.mxu0 0.0
    %82 = vmatprep.subr.mxu0 0.0
    %83 = vmatpush1.msra.mxu0 0.0
    %84 = vmatprep.subr.mxu0 0.0
    %85 = vmatpush1.msra.mxu0 0.0
    %86 = vmatprep.subr.mxu0 0.0
    %87 = vmatpush1.msra.mxu0 0.0
    %88 = vmatprep.subr.mxu0 0.0
    %89 = vmatpush1.msra.mxu0 0.0
    %90 = vmatprep.subr.mxu0 0.0
    %91 = vmatpush1.msra.mxu0 0.0
    %92 = vmatprep.subr.mxu0 0.0
    %93 = vmatpush1.msra.mxu0 0.0
    %94 = vmatprep.subr.mxu0 0.0
    %95 = vmatpush1.msra.mxu0 0.0
    %96 = vmatprep.subr.mxu0 0.0
    %97 = vmatpush1.msra.mxu0 0.0
    %98 = vmatprep.subr.mxu0 0.0
    %99 = vmatpush1.msra.mxu0 0.0
    %100 = vmatprep.subr.mxu0 0.0
    %101 = vmatpush1.msra.mxu0 0.0
    %102 = vmatprep.subr.mxu0 0.0
    %103 = vmatpush1.msra.mxu0 0.0
    %104 = vmatprep.subr.mxu0 0.0
    %105 = vmatpush1.msra.mxu0 0.0
    %106 = vmatprep.subr.mxu0 0.0
    %107 = vmatpush1.msra.mxu0 0.0
    %108 = vmatprep.subr.mxu0 0.0
    %109 = vmatpush1.msra.mxu0 0.0
    %110 = vmatprep.subr.mxu0 0.0
    %111 = vmatpush1.msra.mxu0 0.0
    %112 = vmatprep.subr.mxu0 0.0
    %113 = vmatpush1.msra.mxu0 0.0
    %114 = vmatprep.subr.mxu0 0.0
    %115 = vmatpush1.msra.mxu0 0.0
    %116 = vmatprep.subr.mxu0 0.0
    %117 = vmatpush1.msra.mxu0 0.0
    %118 = vmatprep.subr.mxu0 0.0
    %119 = vmatpush1.msra.mxu0 0.0
    %120 = vmatprep.subr.mxu0 0.0
    %121 = vmatpush1.msra.mxu0 0.0
    %122 = vmatprep.subr.mxu0 0.0
    %123 = vmatpush1.msra.mxu0 0.0
    %124 = vmatprep.mubr.f32.mxu0 0.0
    %v125 = vand.u32 %v53, 4294901760
    %v126 = vsub.f32 %v53, %v125
    %v127 = vand.u32 %v126, 4294901760
    %v128 = vsub.f32 %v126, %v127
    %v129 = vand.u32 %v128, 4294901760
    %130 = vmatmul.mubr.f32.gmra.mrb[0].mxu0 %v129
    %v131 = vpop.f32.mrb[0].mxu0
    %v132 = vadd.f32 %v49, %v131
    %v133 = vpop.f32.mrb[0].mxu0
    %134 = vmatprep.mubr.f32.mxu0 0.0
    %v135 = vand.u32 %v56, 4294901760
    %v136 = vsub.f32 %v56, %v135
    %v137 = vand.u32 %v136, 4294901760
    %v138 = vsub.f32 %v136, %v137
    %v139 = vand.u32 %v138, 4294901760
    %140 = vmatmul.mubr.f32.gmra.mrb[0].mxu0 %v139
    %v141 = vpop.f32.mrb[0].mxu0
    %v142 = vadd.f32 %v49, %v141
    %v143 = vpop.f32.mrb[0].mxu0
    %144 = vdwg.mxu0
    %145 = vmatprep.subr.mxu0 0.0
    %v146 = vand.u32 %v42, 4294901760
    %v147 = vsub.f32 %v42, %v146
    %v148 = vand.u32 %v147, 4294901760
    %v149 = vsub.f32 %v147, %v148
    %v150 = vand.u32 %v149, 4294901760
    %151 = vmatpush1.msra.mxu0 %v150
    %152 = vmatprep.subr.mxu0 0.0
    %v153 = vand.u32 %v43, 4294901760
    %v154 = vsub.f32 %v43, %v153
    %v155 = vand.u32 %v154, 4294901760
    %v156 = vsub.f32 %v154, %v155
    %v157 = vand.u32 %v156, 4294901760
    %158 = vmatpush1.msra.mxu0 %v157
    %159 = vmatprep.subr.mxu0 0.0
    %160 = vmatpush1.msra.mxu0 0.0
    %161 = vmatprep.subr.mxu0 0.0
    %162 = vmatpush1.msra.mxu0 0.0
    %163 = vmatprep.subr.mxu0 0.0
    %164 = vmatpush1.msra.mxu0 0.0
    %165 = vmatprep.subr.mxu0 0.0
    %166 = vmatpush1.msra.mxu0 0.0
    %167 = vmatprep.subr.mxu0 0.0
    %168 = vmatpush1.msra.mxu0 0.0
    %169 = vmatprep.subr.mxu0 0.0
    %170 = vmatpush1.msra.mxu0 0.0
    %171 = vmatprep.subr.mxu0 0.0
    %172 = vmatpush1.msra.mxu0 0.0
    %173 = vmatprep.subr.mxu0 0.0
    %174 = vmatpush1.msra.mxu0 0.0
    %175 = vmatprep.subr.mxu0 0.0
    %176 = vmatpush1.msra.mxu0 0.0
    %177 = vmatprep.subr.mxu0 0.0
    %178 = vmatpush1.msra.mxu0 0.0
    %179 = vmatprep.subr.mxu0 0.0
    %180 = vmatpush1.msra.mxu0 0.0
    %181 = vmatprep.subr.mxu0 0.0
    %182 = vmatpush1.msra.mxu0 0.0
    %183 = vmatprep.subr.mxu0 0.0
    %184 = vmatpush1.msra.mxu0 0.0
    %185 = vmatprep.subr.mxu0 0.0
    %186 = vmatpush1.msra.mxu0 0.0
    %187 = vmatprep.subr.mxu0 0.0
    %188 = vmatpush1.msra.mxu0 0.0
    %189 = vmatprep.subr.mxu0 0.0
    %190 = vmatpush1.msra.mxu0 0.0
    %191 = vmatprep.subr.mxu0 0.0
    %192 = vmatpush1.msra.mxu0 0.0
    %193 = vmatprep.subr.mxu0 0.0
    %194 = vmatpush1.msra.mxu0 0.0
    %195 = vmatprep.subr.mxu0 0.0
    %196 = vmatpush1.msra.mxu0 0.0
    %197 = vmatprep.subr.mxu0 0.0
    %198 = vmatpush1.msra.mxu0 0.0
    %199 = vmatprep.subr.mxu0 0.0
    %200 = vmatpush1.msra.mxu0 0.0
    %201 = vmatprep.subr.mxu0 0.0
    %202 = vmatpush1.msra.mxu0 0.0
    %203 = vmatprep.subr.mxu0 0.0
    %204 = vmatpush1.msra.mxu0 0.0
    %205 = vmatprep.subr.mxu0 0.0
    %206 = vmatpush1.msra.mxu0 0.0
    %207 = vmatprep.subr.mxu0 0.0
    %208 = vmatpush1.msra.mxu0 0.0
    %209 = vmatprep.subr.mxu0 0.0
    %210 = vmatpush1.msra.mxu0 0.0
    %211 = vmatprep.subr.mxu0 0.0
    %212 = vmatpush1.msra.mxu0 0.0
    %213 = vmatprep.subr.mxu0 0.0
    %214 = vmatpush1.msra.mxu0 0.0
    %215 = vmatprep.subr.mxu0 0.0
    %216 = vmatpush1.msra.mxu0 0.0
    %217 = vmatprep.subr.mxu0 0.0
    %218 = vmatpush1.msra.mxu0 0.0
    %219 = vmatprep.mubr.f32.mxu0 0.0
    %v220 = vand.u32 %v53, 4294901760
    %221 = vmatmul.mubr.f32.gmra.mrb[0].mxu0 %v220
    %v222 = vpop.f32.mrb[0].mxu0
    %v223 = vadd.f32 %v132, %v222
    %v224 = vpop.f32.mrb[0].mxu0
    %225 = vmatprep.mubr.f32.mxu0 0.0
    %v226 = vand.u32 %v56, 4294901760
    %227 = vmatmul.mubr.f32.gmra.mrb[0].mxu0 %v226
    %v228 = vpop.f32.mrb[0].mxu0
    %v229 = vadd.f32 %v142, %v228
    %v230 = vpop.f32.mrb[0].mxu0
    %231 = vdwg.mxu0
    %232 = vmatprep.subr.mxu0 0.0
    %v233 = vand.u32 %v42, 4294901760
    %v234 = vsub.f32 %v42, %v233
    %235 = vmatpush1.msra.mxu0 %v234
    %236 = vmatprep.subr.mxu0 0.0
    %v237 = vand.u32 %v43, 4294901760
    %v238 = vsub.f32 %v43, %v237
    %239 = vmatpush1.msra.mxu0 %v238
    %240 = vmatprep.subr.mxu0 0.0
    %241 = vmatpush1.msra.mxu0 0.0
    %242 = vmatprep.subr.mxu0 0.0
    %243 = vmatpush1.msra.mxu0 0.0
    %244 = vmatprep.subr.mxu0 0.0
    %245 = vmatpush1.msra.mxu0 0.0
    %246 = vmatprep.subr.mxu0 0.0
    %247 = vmatpush1.msra.mxu0 0.0
    %248 = vmatprep.subr.mxu0 0.0
    %249 = vmatpush1.msra.mxu0 0.0
    %250 = vmatprep.subr.mxu0 0.0
    %251 = vmatpush1.msra.mxu0 0.0
    %252 = vmatprep.subr.mxu0 0.0
    %253 = vmatpush1.msra.mxu0 0.0
    %254 = vmatprep.subr.mxu0 0.0
    %255 = vmatpush1.msra.mxu0 0.0
    %256 = vmatprep.subr.mxu0 0.0
    %257 = vmatpush1.msra.mxu0 0.0
    %258 = vmatprep.subr.mxu0 0.0
    %259 = vmatpush1.msra.mxu0 0.0
    %260 = vmatprep.subr.mxu0 0.0
    %261 = vmatpush1.msra.mxu0 0.0
    %262 = vmatprep.subr.mxu0 0.0
    %263 = vmatpush1.msra.mxu0 0.0
    %264 = vmatprep.subr.mxu0 0.0
    %265 = vmatpush1.msra.mxu0 0.0
    %266 = vmatprep.subr.mxu0 0.0
    %267 = vmatpush1.msra.mxu0 0.0
    %268 = vmatprep.subr.mxu0 0.0
    %269 = vmatpush1.msra.mxu0 0.0
    %270 = vmatprep.subr.mxu0 0.0
    %271 = vmatpush1.msra.mxu0 0.0
    %272 = vmatprep.subr.mxu0 0.0
    %273 = vmatpush1.msra.mxu0 0.0
    %274 = vmatprep.subr.mxu0 0.0
    %275 = vmatpush1.msra.mxu0 0.0
    %276 = vmatprep.subr.mxu0 0.0
    %277 = vmatpush1.msra.mxu0 0.0
    %278 = vmatprep.subr.mxu0 0.0
    %279 = vmatpush1.msra.mxu0 0.0
    %280 = vmatprep.subr.mxu0 0.0
    %281 = vmatpush1.msra.mxu0 0.0
    %282 = vmatprep.subr.mxu0 0.0
    %283 = vmatpush1.msra.mxu0 0.0
    %284 = vmatprep.subr.mxu0 0.0
    %285 = vmatpush1.msra.mxu0 0.0
    %286 = vmatprep.subr.mxu0 0.0
    %287 = vmatpush1.msra.mxu0 0.0
    %288 = vmatprep.subr.mxu0 0.0
    %289 = vmatpush1.msra.mxu0 0.0
    %290 = vmatprep.subr.mxu0 0.0
    %291 = vmatpush1.msra.mxu0 0.0
    %292 = vmatprep.subr.mxu0 0.0
    %293 = vmatpush1.msra.mxu0 0.0
    %294 = vmatprep.subr.mxu0 0.0
    %295 = vmatpush1.msra.mxu0 0.0
    %296 = vmatprep.subr.mxu0 0.0
    %297 = vmatpush1.msra.mxu0 0.0
    %298 = vmatprep.subr.mxu0 0.0
    %299 = vmatpush1.msra.mxu0 0.0
    %300 = vmatprep.mubr.f32.mxu0 0.0
    %v301 = vand.u32 %v53, 4294901760
    %v302 = vsub.f32 %v53, %v301
    %303 = vmatmul.mubr.f32.gmra.mrb[0].mxu0 %v302
    %v304 = vpop.f32.mrb[0].mxu0
    %v305 = vadd.f32 %v223, %v304
    %v306 = vpop.f32.mrb[0].mxu0
    %307 = vmatprep.mubr.f32.mxu0 0.0
    %v308 = vand.u32 %v56, 4294901760
    %v309 = vsub.f32 %v56, %v308
    %310 = vmatmul.mubr.f32.gmra.mrb[0].mxu0 %v309
    %v311 = vpop.f32.mrb[0].mxu0
    %v312 = vadd.f32 %v229, %v311
    %v313 = vpop.f32.mrb[0].mxu0
    %314 = vdwg.mxu0
    %315 = vmatprep.subr.mxu0 0.0
    %v316 = vand.u32 %v42, 4294901760
    %317 = vmatpush1.msra.mxu0 %v316
    %318 = vmatprep.subr.mxu0 0.0
    %v319 = vand.u32 %v43, 4294901760
    %320 = vmatpush1.msra.mxu0 %v319
    %321 = vmatprep.subr.mxu0 0.0
    %322 = vmatpush1.msra.mxu0 0.0
    %323 = vmatprep.subr.mxu0 0.0
    %324 = vmatpush1.msra.mxu0 0.0
    %325 = vmatprep.subr.mxu0 0.0
    %326 = vmatpush1.msra.mxu0 0.0
    %327 = vmatprep.subr.mxu0 0.0
    %328 = vmatpush1.msra.mxu0 0.0
    %329 = vmatprep.subr.mxu0 0.0
    %330 = vmatpush1.msra.mxu0 0.0
    %331 = vmatprep.subr.mxu0 0.0
    %332 = vmatpush1.msra.mxu0 0.0
    %333 = vmatprep.subr.mxu0 0.0
    %334 = vmatpush1.msra.mxu0 0.0
    %335 = vmatprep.subr.mxu0 0.0
    %336 = vmatpush1.msra.mxu0 0.0
    %337 = vmatprep.subr.mxu0 0.0
    %338 = vmatpush1.msra.mxu0 0.0
    %339 = vmatprep.subr.mxu0 0.0
    %340 = vmatpush1.msra.mxu0 0.0
    %341 = vmatprep.subr.mxu0 0.0
    %342 = vmatpush1.msra.mxu0 0.0
    %343 = vmatprep.subr.mxu0 0.0
    %344 = vmatpush1.msra.mxu0 0.0
    %345 = vmatprep.subr.mxu0 0.0
    %346 = vmatpush1.msra.mxu0 0.0
    %347 = vmatprep.subr.mxu0 0.0
    %348 = vmatpush1.msra.mxu0 0.0
    %349 = vmatprep.subr.mxu0 0.0
    %350 = vmatpush1.msra.mxu0 0.0
    %351 = vmatprep.subr.mxu0 0.0
    %352 = vmatpush1.msra.mxu0 0.0
    %353 = vmatprep.subr.mxu0 0.0
    %354 = vmatpush1.msra.mxu0 0.0
    %355 = vmatprep.subr.mxu0 0.0
    %356 = vmatpush1.msra.mxu0 0.0
    %357 = vmatprep.subr.mxu0 0.0
    %358 = vmatpush1.msra.mxu0 0.0
    %359 = vmatprep.subr.mxu0 0.0
    %360 = vmatpush1.msra.mxu0 0.0
    %361 = vmatprep.subr.mxu0 0.0
    %362 = vmatpush1.msra.mxu0 0.0
    %363 = vmatprep.subr.mxu0 0.0
    %364 = vmatpush1.msra.mxu0 0.0
    %365 = vmatprep.subr.mxu0 0.0
    %366 = vmatpush1.msra.mxu0 0.0
    %367 = vmatprep.subr.mxu0 0.0
    %368 = vmatpush1.msra.mxu0 0.0
    %369 = vmatprep.subr.mxu0 0.0
    %370 = vmatpush1.msra.mxu0 0.0
    %371 = vmatprep.subr.mxu0 0.0
    %372 = vmatpush1.msra.mxu0 0.0
    %373 = vmatprep.subr.mxu0 0.0
    %374 = vmatpush1.msra.mxu0 0.0
    %375 = vmatprep.subr.mxu0 0.0
    %376 = vmatpush1.msra.mxu0 0.0
    %377 = vmatprep.subr.mxu0 0.0
    %378 = vmatpush1.msra.mxu0 0.0
    %379 = vmatprep.subr.mxu0 0.0
    %380 = vmatpush1.msra.mxu0 0.0
    %381 = vmatprep.mubr.f32.mxu0 0.0
    %v382 = vand.u32 %v53, 4294901760
    %v383 = vsub.f32 %v53, %v382
    %v384 = vand.u32 %v383, 4294901760
    %385 = vmatmul.mubr.f32.gmra.mrb[0].mxu0 %v384
    %v386 = vpop.f32.mrb[0].mxu0
    %v387 = vadd.f32 %v305, %v386
    %v388 = vpop.f32.mrb[0].mxu0
    %389 = vmatprep.mubr.f32.mxu0 0.0
    %v390 = vand.u32 %v56, 4294901760
    %v391 = vsub.f32 %v56, %v390
    %v392 = vand.u32 %v391, 4294901760
    %393 = vmatmul.mubr.f32.gmra.mrb[0].mxu0 %v392
    %v394 = vpop.f32.mrb[0].mxu0
    %v395 = vadd.f32 %v312, %v394
    %v396 = vpop.f32.mrb[0].mxu0
    %397 = vdwg.mxu0
    %398 = vmatprep.subr.mxu0 0.0
    %v399 = vand.u32 %v42, 4294901760
    %v400 = vsub.f32 %v42, %v399
    %v401 = vand.u32 %v400, 4294901760
    %402 = vmatpush1.msra.mxu0 %v401
    %403 = vmatprep.subr.mxu0 0.0
    %v404 = vand.u32 %v43, 4294901760
    %v405 = vsub.f32 %v43, %v404
    %v406 = vand.u32 %v405, 4294901760
    %407 = vmatpush1.msra.mxu0 %v406
    %408 = vmatprep.subr.mxu0 0.0
    %409 = vmatpush1.msra.mxu0 0.0
    %410 = vmatprep.subr.mxu0 0.0
    %411 = vmatpush1.msra.mxu0 0.0
    %412 = vmatprep.subr.mxu0 0.0
    %413 = vmatpush1.msra.mxu0 0.0
    %414 = vmatprep.subr.mxu0 0.0
    %415 = vmatpush1.msra.mxu0 0.0
    %416 = vmatprep.subr.mxu0 0.0
    %417 = vmatpush1.msra.mxu0 0.0
    %418 = vmatprep.subr.mxu0 0.0
    %419 = vmatpush1.msra.mxu0 0.0
    %420 = vmatprep.subr.mxu0 0.0
    %421 = vmatpush1.msra.mxu0 0.0
    %422 = vmatprep.subr.mxu0 0.0
    %423 = vmatpush1.msra.mxu0 0.0
    %424 = vmatprep.subr.mxu0 0.0
    %425 = vmatpush1.msra.mxu0 0.0
    %426 = vmatprep.subr.mxu0 0.0
    %427 = vmatpush1.msra.mxu0 0.0
    %428 = vmatprep.subr.mxu0 0.0
    %429 = vmatpush1.msra.mxu0 0.0
    %430 = vmatprep.subr.mxu0 0.0
    %431 = vmatpush1.msra.mxu0 0.0
    %432 = vmatprep.subr.mxu0 0.0
    %433 = vmatpush1.msra.mxu0 0.0
    %434 = vmatprep.subr.mxu0 0.0
    %435 = vmatpush1.msra.mxu0 0.0
    %436 = vmatprep.subr.mxu0 0.0
    %437 = vmatpush1.msra.mxu0 0.0
    %438 = vmatprep.subr.mxu0 0.0
    %439 = vmatpush1.msra.mxu0 0.0
    %440 = vmatprep.subr.mxu0 0.0
    %441 = vmatpush1.msra.mxu0 0.0
    %442 = vmatprep.subr.mxu0 0.0
    %443 = vmatpush1.msra.mxu0 0.0
    %444 = vmatprep.subr.mxu0 0.0
    %445 = vmatpush1.msra.mxu0 0.0
    %446 = vmatprep.subr.mxu0 0.0
    %447 = vmatpush1.msra.mxu0 0.0
    %448 = vmatprep.subr.mxu0 0.0
    %449 = vmatpush1.msra.mxu0 0.0
    %450 = vmatprep.subr.mxu0 0.0
    %451 = vmatpush1.msra.mxu0 0.0
    %452 = vmatprep.subr.mxu0 0.0
    %453 = vmatpush1.msra.mxu0 0.0
    %454 = vmatprep.subr.mxu0 0.0
    %455 = vmatpush1.msra.mxu0 0.0
    %456 = vmatprep.subr.mxu0 0.0
    %457 = vmatpush1.msra.mxu0 0.0
    %458 = vmatprep.subr.mxu0 0.0
    %459 = vmatpush1.msra.mxu0 0.0
    %460 = vmatprep.subr.mxu0 0.0
    %461 = vmatpush1.msra.mxu0 0.0
    %462 = vmatprep.subr.mxu0 0.0
    %463 = vmatpush1.msra.mxu0 0.0
    %464 = vmatprep.subr.mxu0 0.0
    %465 = vmatpush1.msra.mxu0 0.0
    %466 = vmatprep.subr.mxu0 0.0
    %467 = vmatpush1.msra.mxu0 0.0
    %468 = vmatprep.mubr.f32.mxu0 0.0
    %v469 = vand.u32 %v53, 4294901760
    %470 = vmatmul.mubr.f32.gmra.mrb[0].mxu0 %v469
    %v471 = vpop.f32.mrb[0].mxu0
    %v472 = vadd.f32 %v387, %v471
    %v473 = vpop.f32.mrb[0].mxu0
    %474 = vmatprep.mubr.f32.mxu0 0.0
    %v475 = vand.u32 %v56, 4294901760
    %476 = vmatmul.mubr.f32.gmra.mrb[0].mxu0 %v475
    %v477 = vpop.f32.mrb[0].mxu0
    %v478 = vadd.f32 %v395, %v477
    %v479 = vpop.f32.mrb[0].mxu0
    %480 = vdwg.mxu0
    %481 = vmatprep.subr.mxu0 0.0
    %v482 = vand.u32 %v42, 4294901760
    %483 = vmatpush1.msra.mxu0 %v482
    %484 = vmatprep.subr.mxu0 0.0
    %v485 = vand.u32 %v43, 4294901760
    %486 = vmatpush1.msra.mxu0 %v485
    %487 = vmatprep.subr.mxu0 0.0
    %488 = vmatpush1.msra.mxu0 0.0
    %489 = vmatprep.subr.mxu0 0.0
    %490 = vmatpush1.msra.mxu0 0.0
    %491 = vmatprep.subr.mxu0 0.0
    %492 = vmatpush1.msra.mxu0 0.0
    %493 = vmatprep.subr.mxu0 0.0
    %494 = vmatpush1.msra.mxu0 0.0
    %495 = vmatprep.subr.mxu0 0.0
    %496 = vmatpush1.msra.mxu0 0.0
    %497 = vmatprep.subr.mxu0 0.0
    %498 = vmatpush1.msra.mxu0 0.0
    %499 = vmatprep.subr.mxu0 0.0
    %500 = vmatpush1.msra.mxu0 0.0
    %501 = vmatprep.subr.mxu0 0.0
    %502 = vmatpush1.msra.mxu0 0.0
    %503 = vmatprep.subr.mxu0 0.0
    %504 = vmatpush1.msra.mxu0 0.0
    %505 = vmatprep.subr.mxu0 0.0
    %506 = vmatpush1.msra.mxu0 0.0
    %507 = vmatprep.subr.mxu0 0.0
    %508 = vmatpush1.msra.mxu0 0.0
    %509 = vmatprep.subr.mxu0 0.0
    %510 = vmatpush1.msra.mxu0 0.0
    %511 = vmatprep.subr.mxu0 0.0
    %512 = vmatpush1.msra.mxu0 0.0
    %513 = vmatprep.subr.mxu0 0.0
    %514 = vmatpush1.msra.mxu0 0.0
    %515 = vmatprep.subr.mxu0 0.0
    %516 = vmatpush1.msra.mxu0 0.0
    %517 = vmatprep.subr.mxu0 0.0
    %518 = vmatpush1.msra.mxu0 0.0
    %519 = vmatprep.subr.mxu0 0.0
    %520 = vmatpush1.msra.mxu0 0.0
    %521 = vmatprep.subr.mxu0 0.0
    %522 = vmatpush1.msra.mxu0 0.0
    %523 = vmatprep.subr.mxu0 0.0
    %524 = vmatpush1.msra.mxu0 0.0
    %525 = vmatprep.subr.mxu0 0.0
    %526 = vmatpush1.msra.mxu0 0.0
    %527 = vmatprep.subr.mxu0 0.0
    %528 = vmatpush1.msra.mxu0 0.0
    %529 = vmatprep.subr.mxu0 0.0
    %530 = vmatpush1.msra.mxu0 0.0
    %531 = vmatprep.subr.mxu0 0.0
    %532 = vmatpush1.msra.mxu0 0.0
    %533 = vmatprep.subr.mxu0 0.0
    %534 = vmatpush1.msra.mxu0 0.0
    %535 = vmatprep.subr.mxu0 0.0
    %536 = vmatpush1.msra.mxu0 0.0
    %537 = vmatprep.subr.mxu0 0.0
    %538 = vmatpush1.msra.mxu0 0.0
    %539 = vmatprep.subr.mxu0 0.0
    %540 = vmatpush1.msra.mxu0 0.0
    %541 = vmatprep.subr.mxu0 0.0
    %542 = vmatpush1.msra.mxu0 0.0
    %543 = vmatprep.subr.mxu0 0.0
    %544 = vmatpush1.msra.mxu0 0.0
    %545 = vmatprep.subr.mxu0 0.0
    %546 = vmatpush1.msra.mxu0 0.0
    %547 = vmatprep.mubr.f32.mxu0 0.0
    %v548 = vand.u32 %v53, 4294901760
    %549 = vmatmul.mubr.f32.gmra.mrb[0].mxu0 %v548
    %v550 = vpop.f32.mrb[0].mxu0
    %v551 = vadd.f32 %v472, %v550
    %v552 = vpop.f32.mrb[0].mxu0
    %553 = vmatprep.mubr.f32.mxu0 0.0
    %v554 = vand.u32 %v56, 4294901760
    %555 = vmatmul.mubr.f32.gmra.mrb[0].mxu0 %v554
    %v556 = vpop.f32.mrb[0].mxu0
    %v557 = vadd.f32 %v478, %v556
    %v558 = vpop.f32.mrb[0].mxu0
    %559 = vdwg.mxu0
    %v560 = vmax.f32 %v551, 0.0
    %v561 = vmax.f32 %v557, 0.0
    %v562 = vld [vmem:[%s3] sm:$0xff]
    %v563 = vld [vmem:[%s3 + $0x8] sm:$0xff]
    %v564 = vld [vmem:[%s3 + $0x10] sm:$0xff]
    %v565 = vld [vmem:[%s3 + $0x18] sm:$0xff]
    %v566 = vld [vmem:[%s3 + $0x20] sm:$0xff]
    %v567 = vld [vmem:[%s3 + $0x28] sm:$0xff]
    %v568 = vld [vmem:[%s3 + $0x30] sm:$0xff]
    %v569 = vld [vmem:[%s3 + $0x38] sm:$0xff]
    %v570 = vld [vmem:[%s3 + $0x40] sm:$0xff]
    %v571 = vld [vmem:[%s3 + $0x48] sm:$0xff]
    %v572 = vld [vmem:[%s3 + $0x50] sm:$0xff]
    %v573 = vld [vmem:[%s3 + $0x58] sm:$0xff]
    %v574 = vld [vmem:[%s3 + $0x60] sm:$0xff]
    %v575 = vld [vmem:[%s3 + $0x68] sm:$0xff]
    %v576 = vld [vmem:[%s3 + $0x70] sm:$0xff]
    %v577 = vld [vmem:[%s3 + $0x78] sm:$0xff]
    %v578 = vld [vmem:[%s4] sm:$0x1]
    %v580 = vlaneseq
    %v581 = vshrl.u32 %v580, 7
    %v582 = vsub.s32 0, %v581
    %v583 = vrot.slane %v578, %v582
    %585 = vmatprep.subr.mxu0 0.0
    %v586 = vand.u32 %v562, 4294901760
    %587 = vmatpush1.msra.mxu0 %v586
    %588 = vmatprep.subr.mxu0 0.0
    %v589 = vand.u32 %v563, 4294901760
    %590 = vmatpush1.msra.mxu0 %v589
    %591 = vmatprep.subr.mxu0 0.0
    %v592 = vand.u32 %v564, 4294901760
    %593 = vmatpush1.msra.mxu0 %v592
    %594 = vmatprep.subr.mxu0 0.0
    %v595 = vand.u32 %v565, 4294901760
    %596 = vmatpush1.msra.mxu0 %v595
    %597 = vmatprep.subr.mxu0 0.0
    %v598 = vand.u32 %v566, 4294901760
    %599 = vmatpush1.msra.mxu0 %v598
    %600 = vmatprep.subr.mxu0 0.0
    %v601 = vand.u32 %v567, 4294901760
    %602 = vmatpush1.msra.mxu0 %v601
    %603 = vmatprep.subr.mxu0 0.0
    %v604 = vand.u32 %v568, 4294901760
    %605 = vmatpush1.msra.mxu0 %v604
    %606 = vmatprep.subr.mxu0 0.0
    %v607 = vand.u32 %v569, 4294901760
    %608 = vmatpush1.msra.mxu0 %v607
    %609 = vmatprep.subr.mxu0 0.0
    %v610 = vand.u32 %v570, 4294901760
    %611 = vmatpush1.msra.mxu0 %v610
    %612 = vmatprep.subr.mxu0 0.0
    %v613 = vand.u32 %v571, 4294901760
    %614 = vmatpush1.msra.mxu0 %v613
    %615 = vmatprep.subr.mxu0 0.0
    %v616 = vand.u32 %v572, 4294901760
    %617 = vmatpush1.msra.mxu0 %v616
    %618 = vmatprep.subr.mxu0 0.0
    %v619 = vand.u32 %v573, 4294901760
    %620 = vmatpush1.msra.mxu0 %v619
    %621 = vmatprep.subr.mxu0 0.0
    %v622 = vand.u32 %v574, 4294901760
    %623 = vmatpush1.msra.mxu0 %v622
    %624 = vmatprep.subr.mxu0 0.0
    %v625 = vand.u32 %v575, 4294901760
    %626 = vmatpush1.msra.mxu0 %v625
    %627 = vmatprep.subr.mxu0 0.0
    %v628 = vand.u32 %v576, 4294901760
    %629 = vmatpush1.msra.mxu0 %v628
    %630 = vmatprep.subr.mxu0 0.0
    %v631 = vand.u32 %v577, 4294901760
    %632 = vmatpush1.msra.mxu0 %v631
    %633 = vmatprep.subr.mxu0 0.0
    %634 = vmatpush1.msra.mxu0 0.0
    %635 = vmatprep.subr.mxu0 0.0
    %636 = vmatpush1.msra.mxu0 0.0
    %637 = vmatprep.subr.mxu0 0.0
    %638 = vmatpush1.msra.mxu0 0.0
    %639 = vmatprep.subr.mxu0 0.0
    %640 = vmatpush1.msra.mxu0 0.0
    %641 = vmatprep.subr.mxu0 0.0
    %642 = vmatpush1.msra.mxu0 0.0
    %643 = vmatprep.subr.mxu0 0.0
    %644 = vmatpush1.msra.mxu0 0.0
    %645 = vmatprep.subr.mxu0 0.0
    %646 = vmatpush1.msra.mxu0 0.0
    %647 = vmatprep.subr.mxu0 0.0
    %648 = vmatpush1.msra.mxu0 0.0
    %649 = vmatprep.subr.mxu0 0.0
    %650 = vmatpush1.msra.mxu0 0.0
    %651 = vmatprep.subr.mxu0 0.0
    %652 = vmatpush1.msra.mxu0 0.0
    %653 = vmatprep.subr.mxu0 0.0
    %654 = vmatpush1.msra.mxu0 0.0
    %655 = vmatprep.subr.mxu0 0.0
    %656 = vmatpush1.msra.mxu0 0.0
    %657 = vmatprep.subr.mxu0 0.0
    %658 = vmatpush1.msra.mxu0 0.0
    %659 = vmatprep.subr.mxu0 0.0
    %660 = vmatpush1.msra.mxu0 0.0
    %661 = vmatprep.subr.mxu0 0.0
    %662 = vmatpush1.msra.mxu0 0.0
    %663 = vmatprep.subr.mxu0 0.0
    %664 = vmatpush1.msra.mxu0 0.0
    %665 = vmatprep.mubr.f32.mxu0 0.0
    %v666 = vand.u32 %v560, 4294901760
    %v667 = vsub.f32 %v560, %v666
    %v668 = vand.u32 %v667, 4294901760
    %v669 = vsub.f32 %v667, %v668
    %v670 = vand.u32 %v669, 4294901760
    %671 = vmatmul.mubr.f32.gmra.mrb[0].mxu0 %v670
    %v672 = vpop.f32.mrb[0].mxu0
    %v673 = vadd.f32 %v583, %v672
    %v674 = vpop.f32.mrb[0].mxu0
    %675 = vmatprep.mubr.f32.mxu0 0.0
    %v676 = vand.u32 %v561, 4294901760
    %v677 = vsub.f32 %v561, %v676
    %v678 = vand.u32 %v677, 4294901760
    %v679 = vsub.f32 %v677, %v678
    %v680 = vand.u32 %v679, 4294901760
    %681 = vmatmul.mubr.f32.gmra.mrb[0].mxu0 %v680
    %v682 = vpop.f32.mrb[0].mxu0
    %v683 = vadd.f32 %v583, %v682
    %v684 = vpop.f32.mrb[0].mxu0
    %685 = vdwg.mxu0
    %686 = vmatprep.subr.mxu0 0.0
    %v687 = vand.u32 %v562, 4294901760
    %v688 = vsub.f32 %v562, %v687
    %v689 = vand.u32 %v688, 4294901760
    %v690 = vsub.f32 %v688, %v689
    %v691 = vand.u32 %v690, 4294901760
    %692 = vmatpush1.msra.mxu0 %v691
    %693 = vmatprep.subr.mxu0 0.0
    %v694 = vand.u32 %v563, 4294901760
    %v695 = vsub.f32 %v563, %v694
    %v696 = vand.u32 %v695, 4294901760
    %v697 = vsub.f32 %v695, %v696
    %v698 = vand.u32 %v697, 4294901760
    %699 = vmatpush1.msra.mxu0 %v698
    %700 = vmatprep.subr.mxu0 0.0
    %v701 = vand.u32 %v564, 4294901760
    %v702 = vsub.f32 %v564, %v701
    %v703 = vand.u32 %v702, 4294901760
    %v704 = vsub.f32 %v702, %v703
    %v705 = vand.u32 %v704, 4294901760
    %706 = vmatpush1.msra.mxu0 %v705
    %707 = vmatprep.subr.mxu0 0.0
    %v708 = vand.u32 %v565, 4294901760
    %v709 = vsub.f32 %v565, %v708
    %v710 = vand.u32 %v709, 4294901760
    %v711 = vsub.f32 %v709, %v710
    %v712 = vand.u32 %v711, 4294901760
    %713 = vmatpush1.msra.mxu0 %v712
    %714 = vmatprep.subr.mxu0 0.0
    %v715 = vand.u32 %v566, 4294901760
    %v716 = vsub.f32 %v566, %v715
    %v717 = vand.u32 %v716, 4294901760
    %v718 = vsub.f32 %v716, %v717
    %v719 = vand.u32 %v718, 4294901760
    %720 = vmatpush1.msra.mxu0 %v719
    %721 = vmatprep.subr.mxu0 0.0
    %v722 = vand.u32 %v567, 4294901760
    %v723 = vsub.f32 %v567, %v722
    %v724 = vand.u32 %v723, 4294901760
    %v725 = vsub.f32 %v723, %v724
    %v726 = vand.u32 %v725, 4294901760
    %727 = vmatpush1.msra.mxu0 %v726
    %728 = vmatprep.subr.mxu0 0.0
    %v729 = vand.u32 %v568, 4294901760
    %v730 = vsub.f32 %v568, %v729
    %v731 = vand.u32 %v730, 4294901760
    %v732 = vsub.f32 %v730, %v731
    %v733 = vand.u32 %v732, 4294901760
    %734 = vmatpush1.msra.mxu0 %v733
    %735 = vmatprep.subr.mxu0 0.0
    %v736 = vand.u32 %v569, 4294901760
    %v737 = vsub.f32 %v569, %v736
    %v738 = vand.u32 %v737, 4294901760
    %v739 = vsub.f32 %v737, %v738
    %v740 = vand.u32 %v739, 4294901760
    %741 = vmatpush1.msra.mxu0 %v740
    %742 = vmatprep.subr.mxu0 0.0
    %v743 = vand.u32 %v570, 4294901760
    %v744 = vsub.f32 %v570, %v743
    %v745 = vand.u32 %v744, 4294901760
    %v746 = vsub.f32 %v744, %v745
    %v747 = vand.u32 %v746, 4294901760
    %748 = vmatpush1.msra.mxu0 %v747
    %749 = vmatprep.subr.mxu0 0.0
    %v750 = vand.u32 %v571, 4294901760
    %v751 = vsub.f32 %v571, %v750
    %v752 = vand.u32 %v751, 4294901760
    %v753 = vsub.f32 %v751, %v752
    %v754 = vand.u32 %v753, 4294901760
    %755 = vmatpush1.msra.mxu0 %v754
    %756 = vmatprep.subr.mxu0 0.0
    %v757 = vand.u32 %v572, 4294901760
    %v758 = vsub.f32 %v572, %v757
    %v759 = vand.u32 %v758, 4294901760
    %v760 = vsub.f32 %v758, %v759
    %v761 = vand.u32 %v760, 4294901760
    %762 = vmatpush1.msra.mxu0 %v761
    %763 = vmatprep.subr.mxu0 0.0
    %v764 = vand.u32 %v573, 4294901760
    %v765 = vsub.f32 %v573, %v764
    %v766 = vand.u32 %v765, 4294901760
    %v767 = vsub.f32 %v765, %v766
    %v768 = vand.u32 %v767, 4294901760
    %769 = vmatpush1.msra.mxu0 %v768
    %770 = vmatprep.subr.mxu0 0.0
    %v771 = vand.u32 %v574, 4294901760
    %v772 = vsub.f32 %v574, %v771
    %v773 = vand.u32 %v772, 4294901760
    %v774 = vsub.f32 %v772, %v773
    %v775 = vand.u32 %v774, 4294901760
    %776 = vmatpush1.msra.mxu0 %v775
    %777 = vmatprep.subr.mxu0 0.0
    %v778 = vand.u32 %v575, 4294901760
    %v779 = vsub.f32 %v575, %v778
    %v780 = vand.u32 %v779, 4294901760
    %v781 = vsub.f32 %v779, %v780
    %v782 = vand.u32 %v781, 4294901760
    %783 = vmatpush1.msra.mxu0 %v782
    %784 = vmatprep.subr.mxu0 0.0
    %v785 = vand.u32 %v576, 4294901760
    %v786 = vsub.f32 %v576, %v785
    %v787 = vand.u32 %v786, 4294901760
    %v788 = vsub.f32 %v786, %v787
    %v789 = vand.u32 %v788, 4294901760
    %790 = vmatpush1.msra.mxu0 %v789
    %791 = vmatprep.subr.mxu0 0.0
    %v792 = vand.u32 %v577, 4294901760
    %v793 = vsub.f32 %v577, %v792
    %v794 = vand.u32 %v793, 4294901760
    %v795 = vsub.f32 %v793, %v794
    %v796 = vand.u32 %v795, 4294901760
    %797 = vmatpush1.msra.mxu0 %v796
    %798 = vmatprep.subr.mxu0 0.0
    %799 = vmatpush1.msra.mxu0 0.0
    %800 = vmatprep.subr.mxu0 0.0
    %801 = vmatpush1.msra.mxu0 0.0
    %802 = vmatprep.subr.mxu0 0.0
    %803 = vmatpush1.msra.mxu0 0.0
    %804 = vmatprep.subr.mxu0 0.0
    %805 = vmatpush1.msra.mxu0 0.0
    %806 = vmatprep.subr.mxu0 0.0
    %807 = vmatpush1.msra.mxu0 0.0
    %808 = vmatprep.subr.mxu0 0.0
    %809 = vmatpush1.msra.mxu0 0.0
    %810 = vmatprep.subr.mxu0 0.0
    %811 = vmatpush1.msra.mxu0 0.0
    %812 = vmatprep.subr.mxu0 0.0
    %813 = vmatpush1.msra.mxu0 0.0
    %814 = vmatprep.subr.mxu0 0.0
    %815 = vmatpush1.msra.mxu0 0.0
    %816 = vmatprep.subr.mxu0 0.0
    %817 = vmatpush1.msra.mxu0 0.0
    %818 = vmatprep.subr.mxu0 0.0
    %819 = vmatpush1.msra.mxu0 0.0
    %820 = vmatprep.subr.mxu0 0.0
    %821 = vmatpush1.msra.mxu0 0.0
    %822 = vmatprep.subr.mxu0 0.0
    %823 = vmatpush1.msra.mxu0 0.0
    %824 = vmatprep.subr.mxu0 0.0
    %825 = vmatpush1.msra.mxu0 0.0
    %826 = vmatprep.subr.mxu0 0.0
    %827 = vmatpush1.msra.mxu0 0.0
    %828 = vmatprep.subr.mxu0 0.0
    %829 = vmatpush1.msra.mxu0 0.0
    %830 = vmatprep.mubr.f32.mxu0 0.0
    %v831 = vand.u32 %v560, 4294901760
    %832 = vmatmul.mubr.f32.gmra.mrb[0].mxu0 %v831
    %v833 = vpop.f32.mrb[0].mxu0
    %v834 = vadd.f32 %v673, %v833
    %v835 = vpop.f32.mrb[0].mxu0
    %836 = vmatprep.mubr.f32.mxu0 0.0
    %v837 = vand.u32 %v561, 4294901760
    %838 = vmatmul.mubr.f32.gmra.mrb[0].mxu0 %v837
    %v839 = vpop.f32.mrb[0].mxu0
    %v840 = vadd.f32 %v683, %v839
    %v841 = vpop.f32.mrb[0].mxu0
    %842 = vdwg.mxu0
    %843 = vmatprep.subr.mxu0 0.0
    %v844 = vand.u32 %v562, 4294901760
    %v845 = vsub.f32 %v562, %v844
    %846 = vmatpush1.msra.mxu0 %v845
    %847 = vmatprep.subr.mxu0 0.0
    %v848 = vand.u32 %v563, 4294901760
    %v849 = vsub.f32 %v563, %v848
    %850 = vmatpush1.msra.mxu0 %v849
    %851 = vmatprep.subr.mxu0 0.0
    %v852 = vand.u32 %v564, 4294901760
    %v853 = vsub.f32 %v564, %v852
    %854 = vmatpush1.msra.mxu0 %v853
    %855 = vmatprep.subr.mxu0 0.0
    %v856 = vand.u32 %v565, 4294901760
    %v857 = vsub.f32 %v565, %v856
    %858 = vmatpush1.msra.mxu0 %v857
    %859 = vmatprep.subr.mxu0 0.0
    %v860 = vand.u32 %v566, 4294901760
    %v861 = vsub.f32 %v566, %v860
    %862 = vmatpush1.msra.mxu0 %v861
    %863 = vmatprep.subr.mxu0 0.0
    %v864 = vand.u32 %v567, 4294901760
    %v865 = vsub.f32 %v567, %v864
    %866 = vmatpush1.msra.mxu0 %v865
    %867 = vmatprep.subr.mxu0 0.0
    %v868 = vand.u32 %v568, 4294901760
    %v869 = vsub.f32 %v568, %v868
    %870 = vmatpush1.msra.mxu0 %v869
    %871 = vmatprep.subr.mxu0 0.0
    %v872 = vand.u32 %v569, 4294901760
    %v873 = vsub.f32 %v569, %v872
    %874 = vmatpush1.msra.mxu0 %v873
    %875 = vmatprep.subr.mxu0 0.0
    %v876 = vand.u32 %v570, 4294901760
    %v877 = vsub.f32 %v570, %v876
    %878 = vmatpush1.msra.mxu0 %v877
    %879 = vmatprep.subr.mxu0 0.0
    %v880 = vand.u32 %v571, 4294901760
    %v881 = vsub.f32 %v571, %v880
    %882 = vmatpush1.msra.mxu0 %v881
    %883 = vmatprep.subr.mxu0 0.0
    %v884 = vand.u32 %v572, 4294901760
    %v885 = vsub.f32 %v572, %v884
    %886 = vmatpush1.msra.mxu0 %v885
    %887 = vmatprep.subr.mxu0 0.0
    %v888 = vand.u32 %v573, 4294901760
    %v889 = vsub.f32 %v573, %v888
    %890 = vmatpush1.msra.mxu0 %v889
    %891 = vmatprep.subr.mxu0 0.0
    %v892 = vand.u32 %v574, 4294901760
    %v893 = vsub.f32 %v574, %v892
    %894 = vmatpush1.msra.mxu0 %v893
    %895 = vmatprep.subr.mxu0 0.0
    %v896 = vand.u32 %v575, 4294901760
    %v897 = vsub.f32 %v575, %v896
    %898 = vmatpush1.msra.mxu0 %v897
    %899 = vmatprep.subr.mxu0 0.0
    %v900 = vand.u32 %v576, 4294901760
    %v901 = vsub.f32 %v576, %v900
    %902 = vmatpush1.msra.mxu0 %v901
    %903 = vmatprep.subr.mxu0 0.0
    %v904 = vand.u32 %v577, 4294901760
    %v905 = vsub.f32 %v577, %v904
    %906 = vmatpush1.msra.mxu0 %v905
    %907 = vmatprep.subr.mxu0 0.0
    %908 = vmatpush1.msra.mxu0 0.0
    %909 = vmatprep.subr.mxu0 0.0
    %910 = vmatpush1.msra.mxu0 0.0
    %911 = vmatprep.subr.mxu0 0.0
    %912 = vmatpush1.msra.mxu0 0.0
    %913 = vmatprep.subr.mxu0 0.0
    %914 = vmatpush1.msra.mxu0 0.0
    %915 = vmatprep.subr.mxu0 0.0
    %916 = vmatpush1.msra.mxu0 0.0
    %917 = vmatprep.subr.mxu0 0.0
    %918 = vmatpush1.msra.mxu0 0.0
    %919 = vmatprep.subr.mxu0 0.0
    %920 = vmatpush1.msra.mxu0 0.0
    %921 = vmatprep.subr.mxu0 0.0
    %922 = vmatpush1.msra.mxu0 0.0
    %923 = vmatprep.subr.mxu0 0.0
    %924 = vmatpush1.msra.mxu0 0.0
    %925 = vmatprep.subr.mxu0 0.0
    %926 = vmatpush1.msra.mxu0 0.0
    %927 = vmatprep.subr.mxu0 0.0
    %928 = vmatpush1.msra.mxu0 0.0
    %929 = vmatprep.subr.mxu0 0.0
    %930 = vmatpush1.msra.mxu0 0.0
    %931 = vmatprep.subr.mxu0 0.0
    %932 = vmatpush1.msra.mxu0 0.0
    %933 = vmatprep.subr.mxu0 0.0
    %934 = vmatpush1.msra.mxu0 0.0
    %935 = vmatprep.subr.mxu0 0.0
    %936 = vmatpush1.msra.mxu0 0.0
    %937 = vmatprep.subr.mxu0 0.0
    %938 = vmatpush1.msra.mxu0 0.0
    %939 = vmatprep.mubr.f32.mxu0 0.0
    %v940 = vand.u32 %v560, 4294901760
    %v941 = vsub.f32 %v560, %v940
    %942 = vmatmul.mubr.f32.gmra.mrb[0].mxu0 %v941
    %v943 = vpop.f32.mrb[0].mxu0
    %v944 = vadd.f32 %v834, %v943
    %v945 = vpop.f32.mrb[0].mxu0
    %946 = vmatprep.mubr.f32.mxu0 0.0
    %v947 = vand.u32 %v561, 4294901760
    %v948 = vsub.f32 %v561, %v947
    %949 = vmatmul.mubr.f32.gmra.mrb[0].mxu0 %v948
    %v950 = vpop.f32.mrb[0].mxu0
    %v951 = vadd.f32 %v840, %v950
    %v952 = vpop.f32.mrb[0].mxu0
    %953 = vdwg.mxu0
    %954 = vmatprep.subr.mxu0 0.0
    %v955 = vand.u32 %v562, 4294901760
    %956 = vmatpush1.msra.mxu0 %v955
    %957 = vmatprep.subr.mxu0 0.0
    %v958 = vand.u32 %v563, 4294901760
    %959 = vmatpush1.msra.mxu0 %v958
    %960 = vmatprep.subr.mxu0 0.0
    %v961 = vand.u32 %v564, 4294901760
    %962 = vmatpush1.msra.mxu0 %v961
    %963 = vmatprep.subr.mxu0 0.0
    %v964 = vand.u32 %v565, 4294901760
    %965 = vmatpush1.msra.mxu0 %v964
    %966 = vmatprep.subr.mxu0 0.0
    %v967 = vand.u32 %v566, 4294901760
    %968 = vmatpush1.msra.mxu0 %v967
    %969 = vmatprep.subr.mxu0 0.0
    %v970 = vand.u32 %v567, 4294901760
    %971 = vmatpush1.msra.mxu0 %v970
    %972 = vmatprep.subr.mxu0 0.0
    %v973 = vand.u32 %v568, 4294901760
    %974 = vmatpush1.msra.mxu0 %v973
    %975 = vmatprep.subr.mxu0 0.0
    %v976 = vand.u32 %v569, 4294901760
    %977 = vmatpush1.msra.mxu0 %v976
    %978 = vmatprep.subr.mxu0 0.0
    %v979 = vand.u32 %v570, 4294901760
    %980 = vmatpush1.msra.mxu0 %v979
    %981 = vmatprep.subr.mxu0 0.0
    %v982 = vand.u32 %v571, 4294901760
    %983 = vmatpush1.msra.mxu0 %v982
    %984 = vmatprep.subr.mxu0 0.0
    %v985 = vand.u32 %v572, 4294901760
    %986 = vmatpush1.msra.mxu0 %v985
    %987 = vmatprep.subr.mxu0 0.0
    %v988 = vand.u32 %v573, 4294901760
    %989 = vmatpush1.msra.mxu0 %v988
    %990 = vmatprep.subr.mxu0 0.0
    %v991 = vand.u32 %v574, 4294901760
    %992 = vmatpush1.msra.mxu0 %v991
    %993 = vmatprep.subr.mxu0 0.0
    %v994 = vand.u32 %v575, 4294901760
    %995 = vmatpush1.msra.mxu0 %v994
    %996 = vmatprep.subr.mxu0 0.0
    %v997 = vand.u32 %v576, 4294901760
    %998 = vmatpush1.msra.mxu0 %v997
    %999 = vmatprep.subr.mxu0 0.0
    %v1000 = vand.u32 %v577, 4294901760
    %1001 = vmatpush1.msra.mxu0 %v1000
    %1002 = vmatprep.subr.mxu0 0.0
    %1003 = vmatpush1.msra.mxu0 0.0
    %1004 = vmatprep.subr.mxu0 0.0
    %1005 = vmatpush1.msra.mxu0 0.0
    %1006 = vmatprep.subr.mxu0 0.0
    %1007 = vmatpush1.msra.mxu0 0.0
    %1008 = vmatprep.subr.mxu0 0.0
    %1009 = vmatpush1.msra.mxu0 0.0
    %1010 = vmatprep.subr.mxu0 0.0
    %1011 = vmatpush1.msra.mxu0 0.0
    %1012 = vmatprep.subr.mxu0 0.0
    %1013 = vmatpush1.msra.mxu0 0.0
    %1014 = vmatprep.subr.mxu0 0.0
    %1015 = vmatpush1.msra.mxu0 0.0
    %1016 = vmatprep.subr.mxu0 0.0
    %1017 = vmatpush1.msra.mxu0 0.0
    %1018 = vmatprep.subr.mxu0 0.0
    %1019 = vmatpush1.msra.mxu0 0.0
    %1020 = vmatprep.subr.mxu0 0.0
    %1021 = vmatpush1.msra.mxu0 0.0
    %1022 = vmatprep.subr.mxu0 0.0
    %1023 = vmatpush1.msra.mxu0 0.0
    %1024 = vmatprep.subr.mxu0 0.0
    %1025 = vmatpush1.msra.mxu0 0.0
    %1026 = vmatprep.subr.mxu0 0.0
    %1027 = vmatpush1.msra.mxu0 0.0
    %1028 = vmatprep.subr.mxu0 0.0
    %1029 = vmatpush1.msra.mxu0 0.0
    %1030 = vmatprep.subr.mxu0 0.0
    %1031 = vmatpush1.msra.mxu0 0.0
    %1032 = vmatprep.subr.mxu0 0.0
    %1033 = vmatpush1.msra.mxu0 0.0
    %1034 = vmatprep.mubr.f32.mxu0 0.0
    %v1035 = vand.u32 %v560, 4294901760
    %v1036 = vsub.f32 %v560, %v1035
    %v1037 = vand.u32 %v1036, 4294901760
    %1038 = vmatmul.mubr.f32.gmra.mrb[0].mxu0 %v1037
    %v1039 = vpop.f32.mrb[0].mxu0
    %v1040 = vadd.f32 %v944, %v1039
    %v1041 = vpop.f32.mrb[0].mxu0
    %1042 = vmatprep.mubr.f32.mxu0 0.0
    %v1043 = vand.u32 %v561, 4294901760
    %v1044 = vsub.f32 %v561, %v1043
    %v1045 = vand.u32 %v1044, 4294901760
    %1046 = vmatmul.mubr.f32.gmra.mrb[0].mxu0 %v1045
    %v1047 = vpop.f32.mrb[0].mxu0
    %v1048 = vadd.f32 %v951, %v1047
    %v1049 = vpop.f32.mrb[0].mxu0
    %1050 = vdwg.mxu0
    %1051 = vmatprep.subr.mxu0 0.0
    %v1052 = vand.u32 %v562, 4294901760
    %v1053 = vsub.f32 %v562, %v1052
    %v1054 = vand.u32 %v1053, 4294901760
    %1055 = vmatpush1.msra.mxu0 %v1054
    %1056 = vmatprep.subr.mxu0 0.0
    %v1057 = vand.u32 %v563, 4294901760
    %v1058 = vsub.f32 %v563, %v1057
    %v1059 = vand.u32 %v1058, 4294901760
    %1060 = vmatpush1.msra.mxu0 %v1059
    %1061 = vmatprep.subr.mxu0 0.0
    %v1062 = vand.u32 %v564, 4294901760
    %v1063 = vsub.f32 %v564, %v1062
    %v1064 = vand.u32 %v1063, 4294901760
    %1065 = vmatpush1.msra.mxu0 %v1064
    %1066 = vmatprep.subr.mxu0 0.0
    %v1067 = vand.u32 %v565, 4294901760
    %v1068 = vsub.f32 %v565, %v1067
    %v1069 = vand.u32 %v1068, 4294901760
    %1070 = vmatpush1.msra.mxu0 %v1069
    %1071 = vmatprep.subr.mxu0 0.0
    %v1072 = vand.u32 %v566, 4294901760
    %v1073 = vsub.f32 %v566, %v1072
    %v1074 = vand.u32 %v1073, 4294901760
    %1075 = vmatpush1.msra.mxu0 %v1074
    %1076 = vmatprep.subr.mxu0 0.0
    %v1077 = vand.u32 %v567, 4294901760
    %v1078 = vsub.f32 %v567, %v1077
    %v1079 = vand.u32 %v1078, 4294901760
    %1080 = vmatpush1.msra.mxu0 %v1079
    %1081 = vmatprep.subr.mxu0 0.0
    %v1082 = vand.u32 %v568, 4294901760
    %v1083 = vsub.f32 %v568, %v1082
    %v1084 = vand.u32 %v1083, 4294901760
    %1085 = vmatpush1.msra.mxu0 %v1084
    %1086 = vmatprep.subr.mxu0 0.0
    %v1087 = vand.u32 %v569, 4294901760
    %v1088 = vsub.f32 %v569, %v1087
    %v1089 = vand.u32 %v1088, 4294901760
    %1090 = vmatpush1.msra.mxu0 %v1089
    %1091 = vmatprep.subr.mxu0 0.0
    %v1092 = vand.u32 %v570, 4294901760
    %v1093 = vsub.f32 %v570, %v1092
    %v1094 = vand.u32 %v1093, 4294901760
    %1095 = vmatpush1.msra.mxu0 %v1094
    %1096 = vmatprep.subr.mxu0 0.0
    %v1097 = vand.u32 %v571, 4294901760
    %v1098 = vsub.f32 %v571, %v1097
    %v1099 = vand.u32 %v1098, 4294901760
    %1100 = vmatpush1.msra.mxu0 %v1099
    %1101 = vmatprep.subr.mxu0 0.0
    %v1102 = vand.u32 %v572, 4294901760
    %v1103 = vsub.f32 %v572, %v1102
    %v1104 = vand.u32 %v1103, 4294901760
    %1105 = vmatpush1.msra.mxu0 %v1104
    %1106 = vmatprep.subr.mxu0 0.0
    %v1107 = vand.u32 %v573, 4294901760
    %v1108 = vsub.f32 %v573, %v1107
    %v1109 = vand.u32 %v1108, 4294901760
    %1110 = vmatpush1.msra.mxu0 %v1109
    %1111 = vmatprep.subr.mxu0 0.0
    %v1112 = vand.u32 %v574, 4294901760
    %v1113 = vsub.f32 %v574, %v1112
    %v1114 = vand.u32 %v1113, 4294901760
    %1115 = vmatpush1.msra.mxu0 %v1114
    %1116 = vmatprep.subr.mxu0 0.0
    %v1117 = vand.u32 %v575, 4294901760
    %v1118 = vsub.f32 %v575, %v1117
    %v1119 = vand.u32 %v1118, 4294901760
    %1120 = vmatpush1.msra.mxu0 %v1119
    %1121 = vmatprep.subr.mxu0 0.0
    %v1122 = vand.u32 %v576, 4294901760
    %v1123 = vsub.f32 %v576, %v1122
    %v1124 = vand.u32 %v1123, 4294901760
    %1125 = vmatpush1.msra.mxu0 %v1124
    %1126 = vmatprep.subr.mxu0 0.0
    %v1127 = vand.u32 %v577, 4294901760
    %v1128 = vsub.f32 %v577, %v1127
    %v1129 = vand.u32 %v1128, 4294901760
    %1130 = vmatpush1.msra.mxu0 %v1129
    %1131 = vmatprep.subr.mxu0 0.0
    %1132 = vmatpush1.msra.mxu0 0.0
    %1133 = vmatprep.subr.mxu0 0.0
    %1134 = vmatpush1.msra.mxu0 0.0
    %1135 = vmatprep.subr.mxu0 0.0
    %1136 = vmatpush1.msra.mxu0 0.0
    %1137 = vmatprep.subr.mxu0 0.0
    %1138 = vmatpush1.msra.mxu0 0.0
    %1139 = vmatprep.subr.mxu0 0.0
    %1140 = vmatpush1.msra.mxu0 0.0
    %1141 = vmatprep.subr.mxu0 0.0
    %1142 = vmatpush1.msra.mxu0 0.0
    %1143 = vmatprep.subr.mxu0 0.0
    %1144 = vmatpush1.msra.mxu0 0.0
    %1145 = vmatprep.subr.mxu0 0.0
    %1146 = vmatpush1.msra.mxu0 0.0
    %1147 = vmatprep.subr.mxu0 0.0
    %1148 = vmatpush1.msra.mxu0 0.0
    %1149 = vmatprep.subr.mxu0 0.0
    %1150 = vmatpush1.msra.mxu0 0.0
    %1151 = vmatprep.subr.mxu0 0.0
    %1152 = vmatpush1.msra.mxu0 0.0
    %1153 = vmatprep.subr.mxu0 0.0
    %1154 = vmatpush1.msra.mxu0 0.0
    %1155 = vmatprep.subr.mxu0 0.0
    %1156 = vmatpush1.msra.mxu0 0.0
    %1157 = vmatprep.subr.mxu0 0.0
    %1158 = vmatpush1.msra.mxu0 0.0
    %1159 = vmatprep.subr.mxu0 0.0
    %1160 = vmatpush1.msra.mxu0 0.0
    %1161 = vmatprep.subr.mxu0 0.0
    %1162 = vmatpush1.msra.mxu0 0.0
    %1163 = vmatprep.mubr.f32.mxu0 0.0
    %v1164 = vand.u32 %v560, 4294901760
    %1165 = vmatmul.mubr.f32.gmra.mrb[0].mxu0 %v1164
    %v1166 = vpop.f32.mrb[0].mxu0
    %v1167 = vadd.f32 %v1040, %v1166
    %v1168 = vpop.f32.mrb[0].mxu0
    %1169 = vmatprep.mubr.f32.mxu0 0.0
    %v1170 = vand.u32 %v561, 4294901760
    %1171 = vmatmul.mubr.f32.gmra.mrb[0].mxu0 %v1170
    %v1172 = vpop.f32.mrb[0].mxu0
    %v1173 = vadd.f32 %v1048, %v1172
    %v1174 = vpop.f32.mrb[0].mxu0
    %1175 = vdwg.mxu0
    %1176 = vmatprep.subr.mxu0 0.0
    %v1177 = vand.u32 %v562, 4294901760
    %1178 = vmatpush1.msra.mxu0 %v1177
    %1179 = vmatprep.subr.mxu0 0.0
    %v1180 = vand.u32 %v563, 4294901760
    %1181 = vmatpush1.msra.mxu0 %v1180
    %1182 = vmatprep.subr.mxu0 0.0
    %v1183 = vand.u32 %v564, 4294901760
    %1184 = vmatpush1.msra.mxu0 %v1183
    %1185 = vmatprep.subr.mxu0 0.0
    %v1186 = vand.u32 %v565, 4294901760
    %1187 = vmatpush1.msra.mxu0 %v1186
    %1188 = vmatprep.subr.mxu0 0.0
    %v1189 = vand.u32 %v566, 4294901760
    %1190 = vmatpush1.msra.mxu0 %v1189
    %1191 = vmatprep.subr.mxu0 0.0
    %v1192 = vand.u32 %v567, 4294901760
    %1193 = vmatpush1.msra.mxu0 %v1192
    %1194 = vmatprep.subr.mxu0 0.0
    %v1195 = vand.u32 %v568, 4294901760
    %1196 = vmatpush1.msra.mxu0 %v1195
    %1197 = vmatprep.subr.mxu0 0.0
    %v1198 = vand.u32 %v569, 4294901760
    %1199 = vmatpush1.msra.mxu0 %v1198
    %1200 = vmatprep.subr.mxu0 0.0
    %v1201 = vand.u32 %v570, 4294901760
    %1202 = vmatpush1.msra.mxu0 %v1201
    %1203 = vmatprep.subr.mxu0 0.0
    %v1204 = vand.u32 %v571, 4294901760
    %1205 = vmatpush1.msra.mxu0 %v1204
    %1206 = vmatprep.subr.mxu0 0.0
    %v1207 = vand.u32 %v572, 4294901760
    %1208 = vmatpush1.msra.mxu0 %v1207
    %1209 = vmatprep.subr.mxu0 0.0
    %v1210 = vand.u32 %v573, 4294901760
    %1211 = vmatpush1.msra.mxu0 %v1210
    %1212 = vmatprep.subr.mxu0 0.0
    %v1213 = vand.u32 %v574, 4294901760
    %1214 = vmatpush1.msra.mxu0 %v1213
    %1215 = vmatprep.subr.mxu0 0.0
    %v1216 = vand.u32 %v575, 4294901760
    %1217 = vmatpush1.msra.mxu0 %v1216
    %1218 = vmatprep.subr.mxu0 0.0
    %v1219 = vand.u32 %v576, 4294901760
    %1220 = vmatpush1.msra.mxu0 %v1219
    %1221 = vmatprep.subr.mxu0 0.0
    %v1222 = vand.u32 %v577, 4294901760
    %1223 = vmatpush1.msra.mxu0 %v1222
    %1224 = vmatprep.subr.mxu0 0.0
    %1225 = vmatpush1.msra.mxu0 0.0
    %1226 = vmatprep.subr.mxu0 0.0
    %1227 = vmatpush1.msra.mxu0 0.0
    %1228 = vmatprep.subr.mxu0 0.0
    %1229 = vmatpush1.msra.mxu0 0.0
    %1230 = vmatprep.subr.mxu0 0.0
    %1231 = vmatpush1.msra.mxu0 0.0
    %1232 = vmatprep.subr.mxu0 0.0
    %1233 = vmatpush1.msra.mxu0 0.0
    %1234 = vmatprep.subr.mxu0 0.0
    %1235 = vmatpush1.msra.mxu0 0.0
    %1236 = vmatprep.subr.mxu0 0.0
    %1237 = vmatpush1.msra.mxu0 0.0
    %1238 = vmatprep.subr.mxu0 0.0
    %1239 = vmatpush1.msra.mxu0 0.0
    %1240 = vmatprep.subr.mxu0 0.0
    %1241 = vmatpush1.msra.mxu0 0.0
    %1242 = vmatprep.subr.mxu0 0.0
    %1243 = vmatpush1.msra.mxu0 0.0
    %1244 = vmatprep.subr.mxu0 0.0
    %1245 = vmatpush1.msra.mxu0 0.0
    %1246 = vmatprep.subr.mxu0 0.0
    %1247 = vmatpush1.msra.mxu0 0.0
    %1248 = vmatprep.subr.mxu0 0.0
    %1249 = vmatpush1.msra.mxu0 0.0
    %1250 = vmatprep.subr.mxu0 0.0
    %1251 = vmatpush1.msra.mxu0 0.0
    %1252 = vmatprep.subr.mxu0 0.0
    %1253 = vmatpush1.msra.mxu0 0.0
    %1254 = vmatprep.subr.mxu0 0.0
    %1255 = vmatpush1.msra.mxu0 0.0
    %1256 = vmatprep.mubr.f32.mxu0 0.0
    %v1257 = vand.u32 %v560, 4294901760
    %1258 = vmatmul.mubr.f32.gmra.mrb[0].mxu0 %v1257
    %v1259 = vpop.f32.mrb[0].mxu0
    %v1260 = vadd.f32 %v1167, %v1259
    %v1261 = vpop.f32.mrb[0].mxu0
    %1262 = vmatprep.mubr.f32.mxu0 0.0
    %v1263 = vand.u32 %v561, 4294901760
    %1264 = vmatmul.mubr.f32.gmra.mrb[0].mxu0 %v1263
    %v1265 = vpop.f32.mrb[0].mxu0
    %v1266 = vadd.f32 %v1173, %v1265
    %v1267 = vpop.f32.mrb[0].mxu0
    %1268 = vdwg.mxu0
    %v1269 = vmax.f32 %v1260, 0.0
    %v1270 = vmax.f32 %v1266, 0.0
    %v1271 = vld [vmem:[%s5] sm:$0xff]
    %v1272 = vld [vmem:[%s5 + $0x8] sm:$0xff]
    %v1273 = vld [vmem:[%s5 + $0x10] sm:$0xff]
    %v1274 = vld [vmem:[%s5 + $0x18] sm:$0xff]
    %v1275 = vld [vmem:[%s5 + $0x20] sm:$0xff]
    %v1276 = vld [vmem:[%s5 + $0x28] sm:$0xff]
    %v1277 = vld [vmem:[%s5 + $0x30] sm:$0xff]
    %v1278 = vld [vmem:[%s5 + $0x38] sm:$0xff]
    %v1279 = vld [vmem:[%s5 + $0x40] sm:$0xff]
    %v1280 = vld [vmem:[%s5 + $0x48] sm:$0xff]
    %v1281 = vld [vmem:[%s5 + $0x50] sm:$0xff]
    %v1282 = vld [vmem:[%s5 + $0x58] sm:$0xff]
    %v1283 = vld [vmem:[%s5 + $0x60] sm:$0xff]
    %v1284 = vld [vmem:[%s5 + $0x68] sm:$0xff]
    %v1285 = vld [vmem:[%s5 + $0x70] sm:$0xff]
    %v1286 = vld [vmem:[%s5 + $0x78] sm:$0xff]
    %v1287 = vld [vmem:[%s6] sm:$0x1]
    %v1289 = vlaneseq
    %v1290 = vshrl.u32 %v1289, 7
    %v1291 = vsub.s32 0, %v1290
    %v1292 = vrot.slane %v1287, %v1291
    %1294 = vmatprep.subr.mxu0 0.0
    %v1295 = vand.u32 %v1271, 4294901760
    %1296 = vmatpush1.msra.mxu0 %v1295
    %1297 = vmatprep.subr.mxu0 0.0
    %v1298 = vand.u32 %v1272, 4294901760
    %1299 = vmatpush1.msra.mxu0 %v1298
    %1300 = vmatprep.subr.mxu0 0.0
    %v1301 = vand.u32 %v1273, 4294901760
    %1302 = vmatpush1.msra.mxu0 %v1301
    %1303 = vmatprep.subr.mxu0 0.0
    %v1304 = vand.u32 %v1274, 4294901760
    %1305 = vmatpush1.msra.mxu0 %v1304
    %1306 = vmatprep.subr.mxu0 0.0
    %v1307 = vand.u32 %v1275, 4294901760
    %1308 = vmatpush1.msra.mxu0 %v1307
    %1309 = vmatprep.subr.mxu0 0.0
    %v1310 = vand.u32 %v1276, 4294901760
    %1311 = vmatpush1.msra.mxu0 %v1310
    %1312 = vmatprep.subr.mxu0 0.0
    %v1313 = vand.u32 %v1277, 4294901760
    %1314 = vmatpush1.msra.mxu0 %v1313
    %1315 = vmatprep.subr.mxu0 0.0
    %v1316 = vand.u32 %v1278, 4294901760
    %1317 = vmatpush1.msra.mxu0 %v1316
    %1318 = vmatprep.subr.mxu0 0.0
    %v1319 = vand.u32 %v1279, 4294901760
    %1320 = vmatpush1.msra.mxu0 %v1319
    %1321 = vmatprep.subr.mxu0 0.0
    %v1322 = vand.u32 %v1280, 4294901760
    %1323 = vmatpush1.msra.mxu0 %v1322
    %1324 = vmatprep.subr.mxu0 0.0
    %v1325 = vand.u32 %v1281, 4294901760
    %1326 = vmatpush1.msra.mxu0 %v1325
    %1327 = vmatprep.subr.mxu0 0.0
    %v1328 = vand.u32 %v1282, 4294901760
    %1329 = vmatpush1.msra.mxu0 %v1328
    %1330 = vmatprep.subr.mxu0 0.0
    %v1331 = vand.u32 %v1283, 4294901760
    %1332 = vmatpush1.msra.mxu0 %v1331
    %1333 = vmatprep.subr.mxu0 0.0
    %v1334 = vand.u32 %v1284, 4294901760
    %1335 = vmatpush1.msra.mxu0 %v1334
    %1336 = vmatprep.subr.mxu0 0.0
    %v1337 = vand.u32 %v1285, 4294901760
    %1338 = vmatpush1.msra.mxu0 %v1337
    %1339 = vmatprep.subr.mxu0 0.0
    %v1340 = vand.u32 %v1286, 4294901760
    %1341 = vmatpush1.msra.mxu0 %v1340
    %1342 = vmatprep.subr.mxu0 0.0
    %1343 = vmatpush1.msra.mxu0 0.0
    %1344 = vmatprep.subr.mxu0 0.0
    %1345 = vmatpush1.msra.mxu0 0.0
    %1346 = vmatprep.subr.mxu0 0.0
    %1347 = vmatpush1.msra.mxu0 0.0
    %1348 = vmatprep.subr.mxu0 0.0
    %1349 = vmatpush1.msra.mxu0 0.0
    %1350 = vmatprep.subr.mxu0 0.0
    %1351 = vmatpush1.msra.mxu0 0.0
    %1352 = vmatprep.subr.mxu0 0.0
    %1353 = vmatpush1.msra.mxu0 0.0
    %1354 = vmatprep.subr.mxu0 0.0
    %1355 = vmatpush1.msra.mxu0 0.0
    %1356 = vmatprep.subr.mxu0 0.0
    %1357 = vmatpush1.msra.mxu0 0.0
    %1358 = vmatprep.subr.mxu0 0.0
    %1359 = vmatpush1.msra.mxu0 0.0
    %1360 = vmatprep.subr.mxu0 0.0
    %1361 = vmatpush1.msra.mxu0 0.0
    %1362 = vmatprep.subr.mxu0 0.0
    %1363 = vmatpush1.msra.mxu0 0.0
    %1364 = vmatprep.subr.mxu0 0.0
    %1365 = vmatpush1.msra.mxu0 0.0
    %1366 = vmatprep.subr.mxu0 0.0
    %1367 = vmatpush1.msra.mxu0 0.0
    %1368 = vmatprep.subr.mxu0 0.0
    %1369 = vmatpush1.msra.mxu0 0.0
    %1370 = vmatprep.subr.mxu0 0.0
    %1371 = vmatpush1.msra.mxu0 0.0
    %1372 = vmatprep.subr.mxu0 0.0
    %1373 = vmatpush1.msra.mxu0 0.0
    %1374 = vmatprep.mubr.f32.mxu0 0.0
    %v1375 = vand.u32 %v1269, 4294901760
    %v1376 = vsub.f32 %v1269, %v1375
    %v1377 = vand.u32 %v1376, 4294901760
    %v1378 = vsub.f32 %v1376, %v1377
    %v1379 = vand.u32 %v1378, 4294901760
    %1380 = vmatmul.mubr.f32.gmra.mrb[0].mxu0 %v1379
    %v1381 = vpop.f32.mrb[0].mxu0
    %v1382 = vadd.f32 %v1292, %v1381
    %v1383 = vpop.f32.mrb[0].mxu0
    %1384 = vmatprep.mubr.f32.mxu0 0.0
    %v1385 = vand.u32 %v1270, 4294901760
    %v1386 = vsub.f32 %v1270, %v1385
    %v1387 = vand.u32 %v1386, 4294901760
    %v1388 = vsub.f32 %v1386, %v1387
    %v1389 = vand.u32 %v1388, 4294901760
    %1390 = vmatmul.mubr.f32.gmra.mrb[0].mxu0 %v1389
    %v1391 = vpop.f32.mrb[0].mxu0
    %v1392 = vadd.f32 %v1292, %v1391
    %v1393 = vpop.f32.mrb[0].mxu0
    %1394 = vdwg.mxu0
    %1395 = vmatprep.subr.mxu0 0.0
    %v1396 = vand.u32 %v1271, 4294901760
    %v1397 = vsub.f32 %v1271, %v1396
    %v1398 = vand.u32 %v1397, 4294901760
    %v1399 = vsub.f32 %v1397, %v1398
    %v1400 = vand.u32 %v1399, 4294901760
    %1401 = vmatpush1.msra.mxu0 %v1400
    %1402 = vmatprep.subr.mxu0 0.0
    %v1403 = vand.u32 %v1272, 4294901760
    %v1404 = vsub.f32 %v1272, %v1403
    %v1405 = vand.u32 %v1404, 4294901760
    %v1406 = vsub.f32 %v1404, %v1405
    %v1407 = vand.u32 %v1406, 4294901760
    %1408 = vmatpush1.msra.mxu0 %v1407
    %1409 = vmatprep.subr.mxu0 0.0
    %v1410 = vand.u32 %v1273, 4294901760
    %v1411 = vsub.f32 %v1273, %v1410
    %v1412 = vand.u32 %v1411, 4294901760
    %v1413 = vsub.f32 %v1411, %v1412
    %v1414 = vand.u32 %v1413, 4294901760
    %1415 = vmatpush1.msra.mxu0 %v1414
    %1416 = vmatprep.subr.mxu0 0.0
    %v1417 = vand.u32 %v1274, 4294901760
    %v1418 = vsub.f32 %v1274, %v1417
    %v1419 = vand.u32 %v1418, 4294901760
    %v1420 = vsub.f32 %v1418, %v1419
    %v1421 = vand.u32 %v1420, 4294901760
    %1422 = vmatpush1.msra.mxu0 %v1421
    %1423 = vmatprep.subr.mxu0 0.0
    %v1424 = vand.u32 %v1275, 4294901760
    %v1425 = vsub.f32 %v1275, %v1424
    %v1426 = vand.u32 %v1425, 4294901760
    %v1427 = vsub.f32 %v1425, %v1426
    %v1428 = vand.u32 %v1427, 4294901760
    %1429 = vmatpush1.msra.mxu0 %v1428
    %1430 = vmatprep.subr.mxu0 0.0
    %v1431 = vand.u32 %v1276, 4294901760
    %v1432 = vsub.f32 %v1276, %v1431
    %v1433 = vand.u32 %v1432, 4294901760
    %v1434 = vsub.f32 %v1432, %v1433
    %v1435 = vand.u32 %v1434, 4294901760
    %1436 = vmatpush1.msra.mxu0 %v1435
    %1437 = vmatprep.subr.mxu0 0.0
    %v1438 = vand.u32 %v1277, 4294901760
    %v1439 = vsub.f32 %v1277, %v1438
    %v1440 = vand.u32 %v1439, 4294901760
    %v1441 = vsub.f32 %v1439, %v1440
    %v1442 = vand.u32 %v1441, 4294901760
    %1443 = vmatpush1.msra.mxu0 %v1442
    %1444 = vmatprep.subr.mxu0 0.0
    %v1445 = vand.u32 %v1278, 4294901760
    %v1446 = vsub.f32 %v1278, %v1445
    %v1447 = vand.u32 %v1446, 4294901760
    %v1448 = vsub.f32 %v1446, %v1447
    %v1449 = vand.u32 %v1448, 4294901760
    %1450 = vmatpush1.msra.mxu0 %v1449
    %1451 = vmatprep.subr.mxu0 0.0
    %v1452 = vand.u32 %v1279, 4294901760
    %v1453 = vsub.f32 %v1279, %v1452
    %v1454 = vand.u32 %v1453, 4294901760
    %v1455 = vsub.f32 %v1453, %v1454
    %v1456 = vand.u32 %v1455, 4294901760
    %1457 = vmatpush1.msra.mxu0 %v1456
    %1458 = vmatprep.subr.mxu0 0.0
    %v1459 = vand.u32 %v1280, 4294901760
    %v1460 = vsub.f32 %v1280, %v1459
    %v1461 = vand.u32 %v1460, 4294901760
    %v1462 = vsub.f32 %v1460, %v1461
    %v1463 = vand.u32 %v1462, 4294901760
    %1464 = vmatpush1.msra.mxu0 %v1463
    %1465 = vmatprep.subr.mxu0 0.0
    %v1466 = vand.u32 %v1281, 4294901760
    %v1467 = vsub.f32 %v1281, %v1466
    %v1468 = vand.u32 %v1467, 4294901760
    %v1469 = vsub.f32 %v1467, %v1468
    %v1470 = vand.u32 %v1469, 4294901760
    %1471 = vmatpush1.msra.mxu0 %v1470
    %1472 = vmatprep.subr.mxu0 0.0
    %v1473 = vand.u32 %v1282, 4294901760
    %v1474 = vsub.f32 %v1282, %v1473
    %v1475 = vand.u32 %v1474, 4294901760
    %v1476 = vsub.f32 %v1474, %v1475
    %v1477 = vand.u32 %v1476, 4294901760
    %1478 = vmatpush1.msra.mxu0 %v1477
    %1479 = vmatprep.subr.mxu0 0.0
    %v1480 = vand.u32 %v1283, 4294901760
    %v1481 = vsub.f32 %v1283, %v1480
    %v1482 = vand.u32 %v1481, 4294901760
    %v1483 = vsub.f32 %v1481, %v1482
    %v1484 = vand.u32 %v1483, 4294901760
    %1485 = vmatpush1.msra.mxu0 %v1484
    %1486 = vmatprep.subr.mxu0 0.0
    %v1487 = vand.u32 %v1284, 4294901760
    %v1488 = vsub.f32 %v1284, %v1487
    %v1489 = vand.u32 %v1488, 4294901760
    %v1490 = vsub.f32 %v1488, %v1489
    %v1491 = vand.u32 %v1490, 4294901760
    %1492 = vmatpush1.msra.mxu0 %v1491
    %1493 = vmatprep.subr.mxu0 0.0
    %v1494 = vand.u32 %v1285, 4294901760
    %v1495 = vsub.f32 %v1285, %v1494
    %v1496 = vand.u32 %v1495, 4294901760
    %v1497 = vsub.f32 %v1495, %v1496
    %v1498 = vand.u32 %v1497, 4294901760
    %1499 = vmatpush1.msra.mxu0 %v1498
    %1500 = vmatprep.subr.mxu0 0.0
    %v1501 = vand.u32 %v1286, 4294901760
    %v1502 = vsub.f32 %v1286, %v1501
    %v1503 = vand.u32 %v1502, 4294901760
    %v1504 = vsub.f32 %v1502, %v1503
    %v1505 = vand.u32 %v1504, 4294901760
    %1506 = vmatpush1.msra.mxu0 %v1505
    %1507 = vmatprep.subr.mxu0 0.0
    %1508 = vmatpush1.msra.mxu0 0.0
    %1509 = vmatprep.subr.mxu0 0.0
    %1510 = vmatpush1.msra.mxu0 0.0
    %1511 = vmatprep.subr.mxu0 0.0
    %1512 = vmatpush1.msra.mxu0 0.0
    %1513 = vmatprep.subr.mxu0 0.0
    %1514 = vmatpush1.msra.mxu0 0.0
    %1515 = vmatprep.subr.mxu0 0.0
    %1516 = vmatpush1.msra.mxu0 0.0
    %1517 = vmatprep.subr.mxu0 0.0
    %1518 = vmatpush1.msra.mxu0 0.0
    %1519 = vmatprep.subr.mxu0 0.0
    %1520 = vmatpush1.msra.mxu0 0.0
    %1521 = vmatprep.subr.mxu0 0.0
    %1522 = vmatpush1.msra.mxu0 0.0
    %1523 = vmatprep.subr.mxu0 0.0
    %1524 = vmatpush1.msra.mxu0 0.0
    %1525 = vmatprep.subr.mxu0 0.0
    %1526 = vmatpush1.msra.mxu0 0.0
    %1527 = vmatprep.subr.mxu0 0.0
    %1528 = vmatpush1.msra.mxu0 0.0
    %1529 = vmatprep.subr.mxu0 0.0
    %1530 = vmatpush1.msra.mxu0 0.0
    %1531 = vmatprep.subr.mxu0 0.0
    %1532 = vmatpush1.msra.mxu0 0.0
    %1533 = vmatprep.subr.mxu0 0.0
    %1534 = vmatpush1.msra.mxu0 0.0
    %1535 = vmatprep.subr.mxu0 0.0
    %1536 = vmatpush1.msra.mxu0 0.0
    %1537 = vmatprep.subr.mxu0 0.0
    %1538 = vmatpush1.msra.mxu0 0.0
    %1539 = vmatprep.mubr.f32.mxu0 0.0
    %v1540 = vand.u32 %v1269, 4294901760
    %1541 = vmatmul.mubr.f32.gmra.mrb[0].mxu0 %v1540
    %v1542 = vpop.f32.mrb[0].mxu0
    %v1543 = vadd.f32 %v1382, %v1542
    %v1544 = vpop.f32.mrb[0].mxu0
    %1545 = vmatprep.mubr.f32.mxu0 0.0
    %v1546 = vand.u32 %v1270, 4294901760
    %1547 = vmatmul.mubr.f32.gmra.mrb[0].mxu0 %v1546
    %v1548 = vpop.f32.mrb[0].mxu0
    %v1549 = vadd.f32 %v1392, %v1548
    %v1550 = vpop.f32.mrb[0].mxu0
    %1551 = vdwg.mxu0
    %1552 = vmatprep.subr.mxu0 0.0
    %v1553 = vand.u32 %v1271, 4294901760
    %v1554 = vsub.f32 %v1271, %v1553
    %1555 = vmatpush1.msra.mxu0 %v1554
    %1556 = vmatprep.subr.mxu0 0.0
    %v1557 = vand.u32 %v1272, 4294901760
    %v1558 = vsub.f32 %v1272, %v1557
    %1559 = vmatpush1.msra.mxu0 %v1558
    %1560 = vmatprep.subr.mxu0 0.0
    %v1561 = vand.u32 %v1273, 4294901760
    %v1562 = vsub.f32 %v1273, %v1561
    %1563 = vmatpush1.msra.mxu0 %v1562
    %1564 = vmatprep.subr.mxu0 0.0
    %v1565 = vand.u32 %v1274, 4294901760
    %v1566 = vsub.f32 %v1274, %v1565
    %1567 = vmatpush1.msra.mxu0 %v1566
    %1568 = vmatprep.subr.mxu0 0.0
    %v1569 = vand.u32 %v1275, 4294901760
    %v1570 = vsub.f32 %v1275, %v1569
    %1571 = vmatpush1.msra.mxu0 %v1570
    %1572 = vmatprep.subr.mxu0 0.0
    %v1573 = vand.u32 %v1276, 4294901760
    %v1574 = vsub.f32 %v1276, %v1573
    %1575 = vmatpush1.msra.mxu0 %v1574
    %1576 = vmatprep.subr.mxu0 0.0
    %v1577 = vand.u32 %v1277, 4294901760
    %v1578 = vsub.f32 %v1277, %v1577
    %1579 = vmatpush1.msra.mxu0 %v1578
    %1580 = vmatprep.subr.mxu0 0.0
    %v1581 = vand.u32 %v1278, 4294901760
    %v1582 = vsub.f32 %v1278, %v1581
    %1583 = vmatpush1.msra.mxu0 %v1582
    %1584 = vmatprep.subr.mxu0 0.0
    %v1585 = vand.u32 %v1279, 4294901760
    %v1586 = vsub.f32 %v1279, %v1585
    %1587 = vmatpush1.msra.mxu0 %v1586
    %1588 = vmatprep.subr.mxu0 0.0
    %v1589 = vand.u32 %v1280, 4294901760
    %v1590 = vsub.f32 %v1280, %v1589
    %1591 = vmatpush1.msra.mxu0 %v1590
    %1592 = vmatprep.subr.mxu0 0.0
    %v1593 = vand.u32 %v1281, 4294901760
    %v1594 = vsub.f32 %v1281, %v1593
    %1595 = vmatpush1.msra.mxu0 %v1594
    %1596 = vmatprep.subr.mxu0 0.0
    %v1597 = vand.u32 %v1282, 4294901760
    %v1598 = vsub.f32 %v1282, %v1597
    %1599 = vmatpush1.msra.mxu0 %v1598
    %1600 = vmatprep.subr.mxu0 0.0
    %v1601 = vand.u32 %v1283, 4294901760
    %v1602 = vsub.f32 %v1283, %v1601
    %1603 = vmatpush1.msra.mxu0 %v1602
    %1604 = vmatprep.subr.mxu0 0.0
    %v1605 = vand.u32 %v1284, 4294901760
    %v1606 = vsub.f32 %v1284, %v1605
    %1607 = vmatpush1.msra.mxu0 %v1606
    %1608 = vmatprep.subr.mxu0 0.0
    %v1609 = vand.u32 %v1285, 4294901760
    %v1610 = vsub.f32 %v1285, %v1609
    %1611 = vmatpush1.msra.mxu0 %v1610
    %1612 = vmatprep.subr.mxu0 0.0
    %v1613 = vand.u32 %v1286, 4294901760
    %v1614 = vsub.f32 %v1286, %v1613
    %1615 = vmatpush1.msra.mxu0 %v1614
    %1616 = vmatprep.subr.mxu0 0.0
    %1617 = vmatpush1.msra.mxu0 0.0
    %1618 = vmatprep.subr.mxu0 0.0
    %1619 = vmatpush1.msra.mxu0 0.0
    %1620 = vmatprep.subr.mxu0 0.0
    %1621 = vmatpush1.msra.mxu0 0.0
    %1622 = vmatprep.subr.mxu0 0.0
    %1623 = vmatpush1.msra.mxu0 0.0
    %1624 = vmatprep.subr.mxu0 0.0
    %1625 = vmatpush1.msra.mxu0 0.0
    %1626 = vmatprep.subr.mxu0 0.0
    %1627 = vmatpush1.msra.mxu0 0.0
    %1628 = vmatprep.subr.mxu0 0.0
    %1629 = vmatpush1.msra.mxu0 0.0
    %1630 = vmatprep.subr.mxu0 0.0
    %1631 = vmatpush1.msra.mxu0 0.0
    %1632 = vmatprep.subr.mxu0 0.0
    %1633 = vmatpush1.msra.mxu0 0.0
    %1634 = vmatprep.subr.mxu0 0.0
    %1635 = vmatpush1.msra.mxu0 0.0
    %1636 = vmatprep.subr.mxu0 0.0
    %1637 = vmatpush1.msra.mxu0 0.0
    %1638 = vmatprep.subr.mxu0 0.0
    %1639 = vmatpush1.msra.mxu0 0.0
    %1640 = vmatprep.subr.mxu0 0.0
    %1641 = vmatpush1.msra.mxu0 0.0
    %1642 = vmatprep.subr.mxu0 0.0
    %1643 = vmatpush1.msra.mxu0 0.0
    %1644 = vmatprep.subr.mxu0 0.0
    %1645 = vmatpush1.msra.mxu0 0.0
    %1646 = vmatprep.subr.mxu0 0.0
    %1647 = vmatpush1.msra.mxu0 0.0
    %1648 = vmatprep.mubr.f32.mxu0 0.0
    %v1649 = vand.u32 %v1269, 4294901760
    %v1650 = vsub.f32 %v1269, %v1649
    %1651 = vmatmul.mubr.f32.gmra.mrb[0].mxu0 %v1650
    %v1652 = vpop.f32.mrb[0].mxu0
    %v1653 = vadd.f32 %v1543, %v1652
    %v1654 = vpop.f32.mrb[0].mxu0
    %1655 = vmatprep.mubr.f32.mxu0 0.0
    %v1656 = vand.u32 %v1270, 4294901760
    %v1657 = vsub.f32 %v1270, %v1656
    %1658 = vmatmul.mubr.f32.gmra.mrb[0].mxu0 %v1657
    %v1659 = vpop.f32.mrb[0].mxu0
    %v1660 = vadd.f32 %v1549, %v1659
    %v1661 = vpop.f32.mrb[0].mxu0
    %1662 = vdwg.mxu0
    %1663 = vmatprep.subr.mxu0 0.0
    %v1664 = vand.u32 %v1271, 4294901760
    %1665 = vmatpush1.msra.mxu0 %v1664
    %1666 = vmatprep.subr.mxu0 0.0
    %v1667 = vand.u32 %v1272, 4294901760
    %1668 = vmatpush1.msra.mxu0 %v1667
    %1669 = vmatprep.subr.mxu0 0.0
    %v1670 = vand.u32 %v1273, 4294901760
    %1671 = vmatpush1.msra.mxu0 %v1670
    %1672 = vmatprep.subr.mxu0 0.0
    %v1673 = vand.u32 %v1274, 4294901760
    %1674 = vmatpush1.msra.mxu0 %v1673
    %1675 = vmatprep.subr.mxu0 0.0
    %v1676 = vand.u32 %v1275, 4294901760
    %1677 = vmatpush1.msra.mxu0 %v1676
    %1678 = vmatprep.subr.mxu0 0.0
    %v1679 = vand.u32 %v1276, 4294901760
    %1680 = vmatpush1.msra.mxu0 %v1679
    %1681 = vmatprep.subr.mxu0 0.0
    %v1682 = vand.u32 %v1277, 4294901760
    %1683 = vmatpush1.msra.mxu0 %v1682
    %1684 = vmatprep.subr.mxu0 0.0
    %v1685 = vand.u32 %v1278, 4294901760
    %1686 = vmatpush1.msra.mxu0 %v1685
    %1687 = vmatprep.subr.mxu0 0.0
    %v1688 = vand.u32 %v1279, 4294901760
    %1689 = vmatpush1.msra.mxu0 %v1688
    %1690 = vmatprep.subr.mxu0 0.0
    %v1691 = vand.u32 %v1280, 4294901760
    %1692 = vmatpush1.msra.mxu0 %v1691
    %1693 = vmatprep.subr.mxu0 0.0
    %v1694 = vand.u32 %v1281, 4294901760
    %1695 = vmatpush1.msra.mxu0 %v1694
    %1696 = vmatprep.subr.mxu0 0.0
    %v1697 = vand.u32 %v1282, 4294901760
    %1698 = vmatpush1.msra.mxu0 %v1697
    %1699 = vmatprep.subr.mxu0 0.0
    %v1700 = vand.u32 %v1283, 4294901760
    %1701 = vmatpush1.msra.mxu0 %v1700
    %1702 = vmatprep.subr.mxu0 0.0
    %v1703 = vand.u32 %v1284, 4294901760
    %1704 = vmatpush1.msra.mxu0 %v1703
    %1705 = vmatprep.subr.mxu0 0.0
    %v1706 = vand.u32 %v1285, 4294901760
    %1707 = vmatpush1.msra.mxu0 %v1706
    %1708 = vmatprep.subr.mxu0 0.0
    %v1709 = vand.u32 %v1286, 4294901760
    %1710 = vmatpush1.msra.mxu0 %v1709
    %1711 = vmatprep.subr.mxu0 0.0
    %1712 = vmatpush1.msra.mxu0 0.0
    %1713 = vmatprep.subr.mxu0 0.0
    %1714 = vmatpush1.msra.mxu0 0.0
    %1715 = vmatprep.subr.mxu0 0.0
    %1716 = vmatpush1.msra.mxu0 0.0
    %1717 = vmatprep.subr.mxu0 0.0
    %1718 = vmatpush1.msra.mxu0 0.0
    %1719 = vmatprep.subr.mxu0 0.0
    %1720 = vmatpush1.msra.mxu0 0.0
    %1721 = vmatprep.subr.mxu0 0.0
    %1722 = vmatpush1.msra.mxu0 0.0
    %1723 = vmatprep.subr.mxu0 0.0
    %1724 = vmatpush1.msra.mxu0 0.0
    %1725 = vmatprep.subr.mxu0 0.0
    %1726 = vmatpush1.msra.mxu0 0.0
    %1727 = vmatprep.subr.mxu0 0.0
    %1728 = vmatpush1.msra.mxu0 0.0
    %1729 = vmatprep.subr.mxu0 0.0
    %1730 = vmatpush1.msra.mxu0 0.0
    %1731 = vmatprep.subr.mxu0 0.0
    %1732 = vmatpush1.msra.mxu0 0.0
    %1733 = vmatprep.subr.mxu0 0.0
    %1734 = vmatpush1.msra.mxu0 0.0
    %1735 = vmatprep.subr.mxu0 0.0
    %1736 = vmatpush1.msra.mxu0 0.0
    %1737 = vmatprep.subr.mxu0 0.0
    %1738 = vmatpush1.msra.mxu0 0.0
    %1739 = vmatprep.subr.mxu0 0.0
    %1740 = vmatpush1.msra.mxu0 0.0
    %1741 = vmatprep.subr.mxu0 0.0
    %1742 = vmatpush1.msra.mxu0 0.0
    %1743 = vmatprep.mubr.f32.mxu0 0.0
    %v1744 = vand.u32 %v1269, 4294901760
    %v1745 = vsub.f32 %v1269, %v1744
    %v1746 = vand.u32 %v1745, 4294901760
    %1747 = vmatmul.mubr.f32.gmra.mrb[0].mxu0 %v1746
    %v1748 = vpop.f32.mrb[0].mxu0
    %v1749 = vadd.f32 %v1653, %v1748
    %v1750 = vpop.f32.mrb[0].mxu0
    %1751 = vmatprep.mubr.f32.mxu0 0.0
    %v1752 = vand.u32 %v1270, 4294901760
    %v1753 = vsub.f32 %v1270, %v1752
    %v1754 = vand.u32 %v1753, 4294901760
    %1755 = vmatmul.mubr.f32.gmra.mrb[0].mxu0 %v1754
    %v1756 = vpop.f32.mrb[0].mxu0
    %v1757 = vadd.f32 %v1660, %v1756
    %v1758 = vpop.f32.mrb[0].mxu0
    %1759 = vdwg.mxu0
    %1760 = vmatprep.subr.mxu0 0.0
    %v1761 = vand.u32 %v1271, 4294901760
    %v1762 = vsub.f32 %v1271, %v1761
    %v1763 = vand.u32 %v1762, 4294901760
    %1764 = vmatpush1.msra.mxu0 %v1763
    %1765 = vmatprep.subr.mxu0 0.0
    %v1766 = vand.u32 %v1272, 4294901760
    %v1767 = vsub.f32 %v1272, %v1766
    %v1768 = vand.u32 %v1767, 4294901760
    %1769 = vmatpush1.msra.mxu0 %v1768
    %1770 = vmatprep.subr.mxu0 0.0
    %v1771 = vand.u32 %v1273, 4294901760
    %v1772 = vsub.f32 %v1273, %v1771
    %v1773 = vand.u32 %v1772, 4294901760
    %1774 = vmatpush1.msra.mxu0 %v1773
    %1775 = vmatprep.subr.mxu0 0.0
    %v1776 = vand.u32 %v1274, 4294901760
    %v1777 = vsub.f32 %v1274, %v1776
    %v1778 = vand.u32 %v1777, 4294901760
    %1779 = vmatpush1.msra.mxu0 %v1778
    %1780 = vmatprep.subr.mxu0 0.0
    %v1781 = vand.u32 %v1275, 4294901760
    %v1782 = vsub.f32 %v1275, %v1781
    %v1783 = vand.u32 %v1782, 4294901760
    %1784 = vmatpush1.msra.mxu0 %v1783
    %1785 = vmatprep.subr.mxu0 0.0
    %v1786 = vand.u32 %v1276, 4294901760
    %v1787 = vsub.f32 %v1276, %v1786
    %v1788 = vand.u32 %v1787, 4294901760
    %1789 = vmatpush1.msra.mxu0 %v1788
    %1790 = vmatprep.subr.mxu0 0.0
    %v1791 = vand.u32 %v1277, 4294901760
    %v1792 = vsub.f32 %v1277, %v1791
    %v1793 = vand.u32 %v1792, 4294901760
    %1794 = vmatpush1.msra.mxu0 %v1793
    %1795 = vmatprep.subr.mxu0 0.0
    %v1796 = vand.u32 %v1278, 4294901760
    %v1797 = vsub.f32 %v1278, %v1796
    %v1798 = vand.u32 %v1797, 4294901760
    %1799 = vmatpush1.msra.mxu0 %v1798
    %1800 = vmatprep.subr.mxu0 0.0
    %v1801 = vand.u32 %v1279, 4294901760
    %v1802 = vsub.f32 %v1279, %v1801
    %v1803 = vand.u32 %v1802, 4294901760
    %1804 = vmatpush1.msra.mxu0 %v1803
    %1805 = vmatprep.subr.mxu0 0.0
    %v1806 = vand.u32 %v1280, 4294901760
    %v1807 = vsub.f32 %v1280, %v1806
    %v1808 = vand.u32 %v1807, 4294901760
    %1809 = vmatpush1.msra.mxu0 %v1808
    %1810 = vmatprep.subr.mxu0 0.0
    %v1811 = vand.u32 %v1281, 4294901760
    %v1812 = vsub.f32 %v1281, %v1811
    %v1813 = vand.u32 %v1812, 4294901760
    %1814 = vmatpush1.msra.mxu0 %v1813
    %1815 = vmatprep.subr.mxu0 0.0
    %v1816 = vand.u32 %v1282, 4294901760
    %v1817 = vsub.f32 %v1282, %v1816
    %v1818 = vand.u32 %v1817, 4294901760
    %1819 = vmatpush1.msra.mxu0 %v1818
    %1820 = vmatprep.subr.mxu0 0.0
    %v1821 = vand.u32 %v1283, 4294901760
    %v1822 = vsub.f32 %v1283, %v1821
    %v1823 = vand.u32 %v1822, 4294901760
    %1824 = vmatpush1.msra.mxu0 %v1823
    %1825 = vmatprep.subr.mxu0 0.0
    %v1826 = vand.u32 %v1284, 4294901760
    %v1827 = vsub.f32 %v1284, %v1826
    %v1828 = vand.u32 %v1827, 4294901760
    %1829 = vmatpush1.msra.mxu0 %v1828
    %1830 = vmatprep.subr.mxu0 0.0
    %v1831 = vand.u32 %v1285, 4294901760
    %v1832 = vsub.f32 %v1285, %v1831
    %v1833 = vand.u32 %v1832, 4294901760
    %1834 = vmatpush1.msra.mxu0 %v1833
    %1835 = vmatprep.subr.mxu0 0.0
    %v1836 = vand.u32 %v1286, 4294901760
    %v1837 = vsub.f32 %v1286, %v1836
    %v1838 = vand.u32 %v1837, 4294901760
    %1839 = vmatpush1.msra.mxu0 %v1838
    %1840 = vmatprep.subr.mxu0 0.0
    %1841 = vmatpush1.msra.mxu0 0.0
    %1842 = vmatprep.subr.mxu0 0.0
    %1843 = vmatpush1.msra.mxu0 0.0
    %1844 = vmatprep.subr.mxu0 0.0
    %1845 = vmatpush1.msra.mxu0 0.0
    %1846 = vmatprep.subr.mxu0 0.0
    %1847 = vmatpush1.msra.mxu0 0.0
    %1848 = vmatprep.subr.mxu0 0.0
    %1849 = vmatpush1.msra.mxu0 0.0
    %1850 = vmatprep.subr.mxu0 0.0
    %1851 = vmatpush1.msra.mxu0 0.0
    %1852 = vmatprep.subr.mxu0 0.0
    %1853 = vmatpush1.msra.mxu0 0.0
    %1854 = vmatprep.subr.mxu0 0.0
    %1855 = vmatpush1.msra.mxu0 0.0
    %1856 = vmatprep.subr.mxu0 0.0
    %1857 = vmatpush1.msra.mxu0 0.0
    %1858 = vmatprep.subr.mxu0 0.0
    %1859 = vmatpush1.msra.mxu0 0.0
    %1860 = vmatprep.subr.mxu0 0.0
    %1861 = vmatpush1.msra.mxu0 0.0
    %1862 = vmatprep.subr.mxu0 0.0
    %1863 = vmatpush1.msra.mxu0 0.0
    %1864 = vmatprep.subr.mxu0 0.0
    %1865 = vmatpush1.msra.mxu0 0.0
    %1866 = vmatprep.subr.mxu0 0.0
    %1867 = vmatpush1.msra.mxu0 0.0
    %1868 = vmatprep.subr.mxu0 0.0
    %1869 = vmatpush1.msra.mxu0 0.0
    %1870 = vmatprep.subr.mxu0 0.0
    %1871 = vmatpush1.msra.mxu0 0.0
    %1872 = vmatprep.mubr.f32.mxu0 0.0
    %v1873 = vand.u32 %v1269, 4294901760
    %1874 = vmatmul.mubr.f32.gmra.mrb[0].mxu0 %v1873
    %v1875 = vpop.f32.mrb[0].mxu0
    %v1876 = vadd.f32 %v1749, %v1875
    %v1877 = vpop.f32.mrb[0].mxu0
    %1878 = vmatprep.mubr.f32.mxu0 0.0
    %v1879 = vand.u32 %v1270, 4294901760
    %1880 = vmatmul.mubr.f32.gmra.mrb[0].mxu0 %v1879
    %v1881 = vpop.f32.mrb[0].mxu0
    %v1882 = vadd.f32 %v1757, %v1881
    %v1883 = vpop.f32.mrb[0].mxu0
    %1884 = vdwg.mxu0
    %1885 = vmatprep.subr.mxu0 0.0
    %v1886 = vand.u32 %v1271, 4294901760
    %1887 = vmatpush1.msra.mxu0 %v1886
    %1888 = vmatprep.subr.mxu0 0.0
    %v1889 = vand.u32 %v1272, 4294901760
    %1890 = vmatpush1.msra.mxu0 %v1889
    %1891 = vmatprep.subr.mxu0 0.0
    %v1892 = vand.u32 %v1273, 4294901760
    %1893 = vmatpush1.msra.mxu0 %v1892
    %1894 = vmatprep.subr.mxu0 0.0
    %v1895 = vand.u32 %v1274, 4294901760
    %1896 = vmatpush1.msra.mxu0 %v1895
    %1897 = vmatprep.subr.mxu0 0.0
    %v1898 = vand.u32 %v1275, 4294901760
    %1899 = vmatpush1.msra.mxu0 %v1898
    %1900 = vmatprep.subr.mxu0 0.0
    %v1901 = vand.u32 %v1276, 4294901760
    %1902 = vmatpush1.msra.mxu0 %v1901
    %1903 = vmatprep.subr.mxu0 0.0
    %v1904 = vand.u32 %v1277, 4294901760
    %1905 = vmatpush1.msra.mxu0 %v1904
    %1906 = vmatprep.subr.mxu0 0.0
    %v1907 = vand.u32 %v1278, 4294901760
    %1908 = vmatpush1.msra.mxu0 %v1907
    %1909 = vmatprep.subr.mxu0 0.0
    %v1910 = vand.u32 %v1279, 4294901760
    %1911 = vmatpush1.msra.mxu0 %v1910
    %1912 = vmatprep.subr.mxu0 0.0
    %v1913 = vand.u32 %v1280, 4294901760
    %1914 = vmatpush1.msra.mxu0 %v1913
    %1915 = vmatprep.subr.mxu0 0.0
    %v1916 = vand.u32 %v1281, 4294901760
    %1917 = vmatpush1.msra.mxu0 %v1916
    %1918 = vmatprep.subr.mxu0 0.0
    %v1919 = vand.u32 %v1282, 4294901760
    %1920 = vmatpush1.msra.mxu0 %v1919
    %1921 = vmatprep.subr.mxu0 0.0
    %v1922 = vand.u32 %v1283, 4294901760
    %1923 = vmatpush1.msra.mxu0 %v1922
    %1924 = vmatprep.subr.mxu0 0.0
    %v1925 = vand.u32 %v1284, 4294901760
    %1926 = vmatpush1.msra.mxu0 %v1925
    %1927 = vmatprep.subr.mxu0 0.0
    %v1928 = vand.u32 %v1285, 4294901760
    %1929 = vmatpush1.msra.mxu0 %v1928
    %1930 = vmatprep.subr.mxu0 0.0
    %v1931 = vand.u32 %v1286, 4294901760
    %1932 = vmatpush1.msra.mxu0 %v1931
    %1933 = vmatprep.subr.mxu0 0.0
    %1934 = vmatpush1.msra.mxu0 0.0
    %1935 = vmatprep.subr.mxu0 0.0
    %1936 = vmatpush1.msra.mxu0 0.0
    %1937 = vmatprep.subr.mxu0 0.0
    %1938 = vmatpush1.msra.mxu0 0.0
    %1939 = vmatprep.subr.mxu0 0.0
    %1940 = vmatpush1.msra.mxu0 0.0
    %1941 = vmatprep.subr.mxu0 0.0
    %1942 = vmatpush1.msra.mxu0 0.0
    %1943 = vmatprep.subr.mxu0 0.0
    %1944 = vmatpush1.msra.mxu0 0.0
    %1945 = vmatprep.subr.mxu0 0.0
    %1946 = vmatpush1.msra.mxu0 0.0
    %1947 = vmatprep.subr.mxu0 0.0
    %1948 = vmatpush1.msra.mxu0 0.0
    %1949 = vmatprep.subr.mxu0 0.0
    %1950 = vmatpush1.msra.mxu0 0.0
    %1951 = vmatprep.subr.mxu0 0.0
    %1952 = vmatpush1.msra.mxu0 0.0
    %1953 = vmatprep.subr.mxu0 0.0
    %1954 = vmatpush1.msra.mxu0 0.0
    %1955 = vmatprep.subr.mxu0 0.0
    %1956 = vmatpush1.msra.mxu0 0.0
    %1957 = vmatprep.subr.mxu0 0.0
    %1958 = vmatpush1.msra.mxu0 0.0
    %1959 = vmatprep.subr.mxu0 0.0
    %1960 = vmatpush1.msra.mxu0 0.0
    %1961 = vmatprep.subr.mxu0 0.0
    %1962 = vmatpush1.msra.mxu0 0.0
    %1963 = vmatprep.subr.mxu0 0.0
    %1964 = vmatpush1.msra.mxu0 0.0
    %1965 = vmatprep.mubr.f32.mxu0 0.0
    %v1966 = vand.u32 %v1269, 4294901760
    %1967 = vmatmul.mubr.f32.gmra.mrb[0].mxu0 %v1966
    %v1968 = vpop.f32.mrb[0].mxu0
    %v1969 = vadd.f32 %v1876, %v1968
    %v1970 = vpop.f32.mrb[0].mxu0
    %1971 = vmatprep.mubr.f32.mxu0 0.0
    %v1972 = vand.u32 %v1270, 4294901760
    %1973 = vmatmul.mubr.f32.gmra.mrb[0].mxu0 %v1972
    %v1974 = vpop.f32.mrb[0].mxu0
    %v1975 = vadd.f32 %v1882, %v1974
    %v1976 = vpop.f32.mrb[0].mxu0
    %1977 = vdwg.mxu0
    %vm1978 = vcmask 64512
    %1979 = vst.msk [vmem:[%s7] sm:$0xff] %vm1978, %v1969
    %1980 = vst.msk [vmem:[%s7 + $0x8] sm:$0xff] %vm1978, %v1975
    // Predicated region
    $region34: #{tpu_custom_call.1} parent=1 // pred_check
      _
    $region35: #{tpu_custom_call.1} parent=1 // pred_check_branch
      %1982 = sbr.rel (0) target = $region37
    $region36: #{tpu_custom_call.1} parent=1 // pred_region
      _
    $region37: #{tpu_custom_call.1} parent=1 // pred_fallthru
      _
    // Predicated region
    $region38: #{tpu_custom_call.1} parent=1 // pred_check
      _
    $region39: #{tpu_custom_call.1} parent=1 // pred_check_branch
      %1984 = sbr.rel (0) target = $region41
    $region40: #{tpu_custom_call.1} parent=1 // pred_region
      _
    $region41: #{tpu_custom_call.1} parent=1 // pred_fallthru
      _
    %1985 = vsyncpa [#allocation3], 1

// kernel: tpu_custom_call.1
$region0: #{tpu_custom_call.1}
  #allocation0 [shape = 'u32[]', space=smem, size = 0x4, offset = 0x4, fixed_abs, tag = 'smem constant byte address 0x4 - core index']
  #allocation1 [shape = 'u32[144,128]{1,0:T(1,128)}', space=vmem, size = 0x12000, scoped, tag = 'internal scratch']
  %s0 = inlined_call_operand.vmem [shape: f32[16,16], index: 0, kind: input, shape index: {}]
  %s1 = inlined_call_operand.hbm [shape: f32[16,128], index: 1, kind: input, shape index: {}]
  %s2 = inlined_call_operand.vmem [shape: f32[1,128], index: 2, kind: input, shape index: {}]
  %s3 = inlined_call_operand.vmem [shape: f32[128,128], index: 3, kind: input, shape index: {}]
  %s4 = inlined_call_operand.vmem [shape: f32[1,128], index: 4, kind: input, shape index: {}]
  %s5 = inlined_call_operand.vmem [shape: f32[128,8], index: 5, kind: input, shape index: {}]
  %s6 = inlined_call_operand.vmem [shape: f32[1,8], index: 6, kind: input, shape index: {}]
  %s7 = inlined_call_operand.vmem [shape: f32[16,8], index: 7, kind: output, shape index: {}]
  %s8 = sld [smem:[#allocation0]]
  $region42: #{tpu_custom_call.1} parent=0
    _
  %s10 = ssub.s32 1, %s8
  %s11 = scalar_select 0, %s10, %s8
  $region1: #{tpu_custom_call.1} parent=0
    #allocation2 [shape = 'u8[8192]{0}', space=vmem, size = 0x2000, scoped, tag = 'input window, operand 1, single buffered']
    #allocation3 [shape = 's32[1]{0}', space=sflag, size = 0x4, scoped, tag = 'scoped memory for tpu_custom_call.1']
    %12 = vsyncpa [#allocation3], 0
    // Predicated region
    $region2: #{tpu_custom_call.1} parent=1 // pred_check
      _
    $region3: #{tpu_custom_call.1} parent=1 // pred_check_branch
      %14 = sbr.rel (0) target = $region5
    $region4: #{tpu_custom_call.1} parent=1 // pred_region
      _
    $region5: #{tpu_custom_call.1} parent=1 // pred_fallthru
      _
    // Predicated region
    $region6: #{tpu_custom_call.1} parent=1 // pred_check
      _
    $region7: #{tpu_custom_call.1} parent=1 // pred_check_branch
      %16 = sbr.rel (0) target = $region9
    $region8: #{tpu_custom_call.1} parent=1 // pred_region
      %s18 = ssub.s32 256, 256
      %19 = vsyncadd [#allocation3], %s18
      %s20 = sshll.u32 [#allocation2], 4
      %s21 = int_to_ptr.vmem [resolvable:$true] %s20
      %26 = dma.hbm_to_vmem [thread:$0]  %s1, 256, %s21, [#allocation3], 128, 128, 8
    $region9: #{tpu_custom_call.1} parent=1 // pred_fallthru
      _
    // Predicated region
    $region10: #{tpu_custom_call.1} parent=1 // pred_check
      _
    $region11: #{tpu_custom_call.1} parent=1 // pred_check_branch
      %28 = sbr.rel (0) target = $region13
    $region12: #{tpu_custom_call.1} parent=1 // pred_region
      _
    $region13: #{tpu_custom_call.1} parent=1 // pred_fallthru
      _
    // Predicated region
    $region14: #{tpu_custom_call.1} parent=1 // pred_check
      _
    $region15: #{tpu_custom_call.1} parent=1 // pred_check_branch
      %30 = sbr.rel (0) target = $region17
    $region16: #{tpu_custom_call.1} parent=1 // pred_region
      _
    $region17: #{tpu_custom_call.1} parent=1 // pred_fallthru
      _
    // Predicated region
    $region18: #{tpu_custom_call.1} parent=1 // pred_check
      _
    $region19: #{tpu_custom_call.1} parent=1 // pred_check_branch
      %32 = sbr.rel (0) target = $region21
    $region20: #{tpu_custom_call.1} parent=1 // pred_region
      _
    $region21: #{tpu_custom_call.1} parent=1 // pred_fallthru
      _
    // Predicated region
    $region22: #{tpu_custom_call.1} parent=1 // pred_check
      _
    $region23: #{tpu_custom_call.1} parent=1 // pred_check_branch
      %34 = sbr.rel (0) target = $region25
    $region24: #{tpu_custom_call.1} parent=1 // pred_region
      _
    $region25: #{tpu_custom_call.1} parent=1 // pred_fallthru
      _
    // Predicated region
    $region26: #{tpu_custom_call.1} parent=1 // pred_check
      _
    $region27: #{tpu_custom_call.1} parent=1 // pred_check_branch
      %36 = sbr.rel (0) target = $region29
    $region28: #{tpu_custom_call.1} parent=1 // pred_region
      _
    $region29: #{tpu_custom_call.1} parent=1 // pred_fallthru
      _
    // Predicated region
    $region30: #{tpu_custom_call.1} parent=1 // pred_check
      _
    $region31: #{tpu_custom_call.1} parent=1 // pred_check_branch
      %38 = sbr.rel (0) target = $region33
    $region32: #{tpu_custom_call.1} parent=1 // pred_region
      %39 = dma.done [#allocation3], 256
    $region33: #{tpu_custom_call.1} parent=1 // pred_fallthru
      _
    %v40 = vld [vmem:[%s0] sm:$0xff]
    %v41 = vld [vmem:[%s0 + $0x8] sm:$0xff]
    %v42 = vld [vmem:[#allocation2] sm:$0xff]
    %v43 = vld [vmem:[#allocation2 + $0x8] sm:$0xff]
    %v44 = vld [vmem:[%s2] sm:$0x1]
    %v46 = vlaneseq
    %v47 = vshrl.u32 %v46, 7
    %v48 = vsub.s32 0, %v47
    %v49 = vrot.slane %v44, %v48
    %vm51 = vcmask 130048
    %v53 = vsel %vm51, %v40, 0
    %v56 = vsel %vm51, %v41, 0
    %58 = vmatprep.subr.mxu0 0.0
    %v59 = vand.u32 %v42, 4294901760
    %60 = vmatpush1.msra.mxu0 %v59
    %61 = vmatprep.subr.mxu0 0.0
    %v62 = vand.u32 %v43, 4294901760
    %63 = vmatpush1.msra.mxu0 %v62
    %64 = vmatprep.subr.mxu0 0.0
    %65 = vmatpush1.msra.mxu0 0.0
    %66 = vmatprep.subr.mxu0 0.0
    %67 = vmatpush1.msra.mxu0 0.0
    %68 = vmatprep.subr.mxu0 0.0
    %69 = vmatpush1.msra.mxu0 0.0
    %70 = vmatprep.subr.mxu0 0.0
    %71 = vmatpush1.msra.mxu0 0.0
    %72 = vmatprep.subr.mxu0 0.0
    %73 = vmatpush1.msra.mxu0 0.0
    %74 = vmatprep.subr.mxu0 0.0
    %75 = vmatpush1.msra.mxu0 0.0
    %76 = vmatprep.subr.mxu0 0.0
    %77 = vmatpush1.msra.mxu0 0.0
    %78 = vmatprep.subr.mxu0 0.0
    %79 = vmatpush1.msra.mxu0 0.0
    %80 = vmatprep.subr.mxu0 0.0
    %81 = vmatpush1.msra.mxu0 0.0
    %82 = vmatprep.subr.mxu0 0.0
    %83 = vmatpush1.msra.mxu0 0.0
    %84 = vmatprep.subr.mxu0 0.0
    %85 = vmatpush1.msra.mxu0 0.0
    %86 = vmatprep.subr.mxu0 0.0
    %87 = vmatpush1.msra.mxu0 0.0
    %88 = vmatprep.subr.mxu0 0.0
    %89 = vmatpush1.msra.mxu0 0.0
    %90 = vmatprep.subr.mxu0 0.0
    %91 = vmatpush1.msra.mxu0 0.0
    %92 = vmatprep.subr.mxu0 0.0
    %93 = vmatpush1.msra.mxu0 0.0
    %94 = vmatprep.subr.mxu0 0.0
    %95 = vmatpush1.msra.mxu0 0.0
    %96 = vmatprep.subr.mxu0 0.0
    %97 = vmatpush1.msra.mxu0 0.0
    %98 = vmatprep.subr.mxu0 0.0
    %99 = vmatpush1.msra.mxu0 0.0
    %100 = vmatprep.subr.mxu0 0.0
    %101 = vmatpush1.msra.mxu0 0.0
    %102 = vmatprep.subr.mxu0 0.0
    %103 = vmatpush1.msra.mxu0 0.0
    %104 = vmatprep.subr.mxu0 0.0
    %105 = vmatpush1.msra.mxu0 0.0
    %106 = vmatprep.subr.mxu0 0.0
    %107 = vmatpush1.msra.mxu0 0.0
    %108 = vmatprep.subr.mxu0 0.0
    %109 = vmatpush1.msra.mxu0 0.0
    %110 = vmatprep.subr.mxu0 0.0
    %111 = vmatpush1.msra.mxu0 0.0
    %112 = vmatprep.subr.mxu0 0.0
    %113 = vmatpush1.msra.mxu0 0.0
    %114 = vmatprep.subr.mxu0 0.0
    %115 = vmatpush1.msra.mxu0 0.0
    %116 = vmatprep.subr.mxu0 0.0
    %117 = vmatpush1.msra.mxu0 0.0
    %118 = vmatprep.subr.mxu0 0.0
    %119 = vmatpush1.msra.mxu0 0.0
    %120 = vmatprep.subr.mxu0 0.0
    %121 = vmatpush1.msra.mxu0 0.0
    %122 = vmatprep.subr.mxu0 0.0
    %123 = vmatpush1.msra.mxu0 0.0
    %124 = vmatprep.mubr.f32.mxu0 0.0
    %v125 = vand.u32 %v53, 4294901760
    %v126 = vsub.f32 %v53, %v125
    %v127 = vand.u32 %v126, 4294901760
    %v128 = vsub.f32 %v126, %v127
    %v129 = vand.u32 %v128, 4294901760
    %130 = vmatmul.mubr.f32.gmra.mrb[0].mxu0 %v129
    %v131 = vpop.f32.mrb[0].mxu0
    %v132 = vadd.f32 %v49, %v131
    %v133 = vpop.f32.mrb[0].mxu0
    %134 = vmatprep.mubr.f32.mxu0 0.0
    %v135 = vand.u32 %v56, 4294901760
    %v136 = vsub.f32 %v56, %v135
    %v137 = vand.u32 %v136, 4294901760
    %v138 = vsub.f32 %v136, %v137
    %v139 = vand.u32 %v138, 4294901760
    %140 = vmatmul.mubr.f32.gmra.mrb[0].mxu0 %v139
    %v141 = vpop.f32.mrb[0].mxu0
    %v142 = vadd.f32 %v49, %v141
    %v143 = vpop.f32.mrb[0].mxu0
    %144 = vdwg.mxu0
    %145 = vmatprep.subr.mxu0 0.0
    %v146 = vand.u32 %v42, 4294901760
    %v147 = vsub.f32 %v42, %v146
    %v148 = vand.u32 %v147, 4294901760
    %v149 = vsub.f32 %v147, %v148
    %v150 = vand.u32 %v149, 4294901760
    %151 = vmatpush1.msra.mxu0 %v150
    %152 = vmatprep.subr.mxu0 0.0
    %v153 = vand.u32 %v43, 4294901760
    %v154 = vsub.f32 %v43, %v153
    %v155 = vand.u32 %v154, 4294901760
    %v156 = vsub.f32 %v154, %v155
    %v157 = vand.u32 %v156, 4294901760
    %158 = vmatpush1.msra.mxu0 %v157
    %159 = vmatprep.subr.mxu0 0.0
    %160 = vmatpush1.msra.mxu0 0.0
    %161 = vmatprep.subr.mxu0 0.0
    %162 = vmatpush1.msra.mxu0 0.0
    %163 = vmatprep.subr.mxu0 0.0
    %164 = vmatpush1.msra.mxu0 0.0
    %165 = vmatprep.subr.mxu0 0.0
    %166 = vmatpush1.msra.mxu0 0.0
    %167 = vmatprep.subr.mxu0 0.0
    %168 = vmatpush1.msra.mxu0 0.0
    %169 = vmatprep.subr.mxu0 0.0
    %170 = vmatpush1.msra.mxu0 0.0
    %171 = vmatprep.subr.mxu0 0.0
    %172 = vmatpush1.msra.mxu0 0.0
    %173 = vmatprep.subr.mxu0 0.0
    %174 = vmatpush1.msra.mxu0 0.0
    %175 = vmatprep.subr.mxu0 0.0
    %176 = vmatpush1.msra.mxu0 0.0
    %177 = vmatprep.subr.mxu0 0.0
    %178 = vmatpush1.msra.mxu0 0.0
    %179 = vmatprep.subr.mxu0 0.0
    %180 = vmatpush1.msra.mxu0 0.0
    %181 = vmatprep.subr.mxu0 0.0
    %182 = vmatpush1.msra.mxu0 0.0
    %183 = vmatprep.subr.mxu0 0.0
    %184 = vmatpush1.msra.mxu0 0.0
    %185 = vmatprep.subr.mxu0 0.0
    %186 = vmatpush1.msra.mxu0 0.0
    %187 = vmatprep.subr.mxu0 0.0
    %188 = vmatpush1.msra.mxu0 0.0
    %189 = vmatprep.subr.mxu0 0.0
    %190 = vmatpush1.msra.mxu0 0.0
    %191 = vmatprep.subr.mxu0 0.0
    %192 = vmatpush1.msra.mxu0 0.0
    %193 = vmatprep.subr.mxu0 0.0
    %194 = vmatpush1.msra.mxu0 0.0
    %195 = vmatprep.subr.mxu0 0.0
    %196 = vmatpush1.msra.mxu0 0.0
    %197 = vmatprep.subr.mxu0 0.0
    %198 = vmatpush1.msra.mxu0 0.0
    %199 = vmatprep.subr.mxu0 0.0
    %200 = vmatpush1.msra.mxu0 0.0
    %201 = vmatprep.subr.mxu0 0.0
    %202 = vmatpush1.msra.mxu0 0.0
    %203 = vmatprep.subr.mxu0 0.0
    %204 = vmatpush1.msra.mxu0 0.0
    %205 = vmatprep.subr.mxu0 0.0
    %206 = vmatpush1.msra.mxu0 0.0
    %207 = vmatprep.subr.mxu0 0.0
    %208 = vmatpush1.msra.mxu0 0.0
    %209 = vmatprep.subr.mxu0 0.0
    %210 = vmatpush1.msra.mxu0 0.0
    %211 = vmatprep.subr.mxu0 0.0
    %212 = vmatpush1.msra.mxu0 0.0
    %213 = vmatprep.subr.mxu0 0.0
    %214 = vmatpush1.msra.mxu0 0.0
    %215 = vmatprep.subr.mxu0 0.0
    %216 = vmatpush1.msra.mxu0 0.0
    %217 = vmatprep.subr.mxu0 0.0
    %218 = vmatpush1.msra.mxu0 0.0
    %219 = vmatprep.mubr.f32.mxu0 0.0
    %v220 = vand.u32 %v53, 4294901760
    %221 = vmatmul.mubr.f32.gmra.mrb[0].mxu0 %v220
    %v222 = vpop.f32.mrb[0].mxu0
    %v223 = vadd.f32 %v132, %v222
    %v224 = vpop.f32.mrb[0].mxu0
    %225 = vmatprep.mubr.f32.mxu0 0.0
    %v226 = vand.u32 %v56, 4294901760
    %227 = vmatmul.mubr.f32.gmra.mrb[0].mxu0 %v226
    %v228 = vpop.f32.mrb[0].mxu0
    %v229 = vadd.f32 %v142, %v228
    %v230 = vpop.f32.mrb[0].mxu0
    %231 = vdwg.mxu0
    %232 = vmatprep.subr.mxu0 0.0
    %v233 = vand.u32 %v42, 4294901760
    %v234 = vsub.f32 %v42, %v233
    %235 = vmatpush1.msra.mxu0 %v234
    %236 = vmatprep.subr.mxu0 0.0
    %v237 = vand.u32 %v43, 4294901760
    %v238 = vsub.f32 %v43, %v237
    %239 = vmatpush1.msra.mxu0 %v238
    %240 = vmatprep.subr.mxu0 0.0
    %241 = vmatpush1.msra.mxu0 0.0
    %242 = vmatprep.subr.mxu0 0.0
    %243 = vmatpush1.msra.mxu0 0.0
    %244 = vmatprep.subr.mxu0 0.0
    %245 = vmatpush1.msra.mxu0 0.0
    %246 = vmatprep.subr.mxu0 0.0
    %247 = vmatpush1.msra.mxu0 0.0
    %248 = vmatprep.subr.mxu0 0.0
    %249 = vmatpush1.msra.mxu0 0.0
    %250 = vmatprep.subr.mxu0 0.0
    %251 = vmatpush1.msra.mxu0 0.0
    %252 = vmatprep.subr.mxu0 0.0
    %253 = vmatpush1.msra.mxu0 0.0
    %254 = vmatprep.subr.mxu0 0.0
    %255 = vmatpush1.msra.mxu0 0.0
    %256 = vmatprep.subr.mxu0 0.0
    %257 = vmatpush1.msra.mxu0 0.0
    %258 = vmatprep.subr.mxu0 0.0
    %259 = vmatpush1.msra.mxu0 0.0
    %260 = vmatprep.subr.mxu0 0.0
    %261 = vmatpush1.msra.mxu0 0.0
    %262 = vmatprep.subr.mxu0 0.0
    %263 = vmatpush1.msra.mxu0 0.0
    %264 = vmatprep.subr.mxu0 0.0
    %265 = vmatpush1.msra.mxu0 0.0
    %266 = vmatprep.subr.mxu0 0.0
    %267 = vmatpush1.msra.mxu0 0.0
    %268 = vmatprep.subr.mxu0 0.0
    %269 = vmatpush1.msra.mxu0 0.0
    %270 = vmatprep.subr.mxu0 0.0
    %271 = vmatpush1.msra.mxu0 0.0
    %272 = vmatprep.subr.mxu0 0.0
    %273 = vmatpush1.msra.mxu0 0.0
    %274 = vmatprep.subr.mxu0 0.0
    %275 = vmatpush1.msra.mxu0 0.0
    %276 = vmatprep.subr.mxu0 0.0
    %277 = vmatpush1.msra.mxu0 0.0
    %278 = vmatprep.subr.mxu0 0.0
    %279 = vmatpush1.msra.mxu0 0.0
    %280 = vmatprep.subr.mxu0 0.0
    %281 = vmatpush1.msra.mxu0 0.0
    %282 = vmatprep.subr.mxu0 0.0
    %283 = vmatpush1.msra.mxu0 0.0
    %284 = vmatprep.subr.mxu0 0.0
    %285 = vmatpush1.msra.mxu0 0.0
    %286 = vmatprep.subr.mxu0 0.0
    %287 = vmatpush1.msra.mxu0 0.0
    %288 = vmatprep.subr.mxu0 0.0
    %289 = vmatpush1.msra.mxu0 0.0
    %290 = vmatprep.subr.mxu0 0.0
    %291 = vmatpush1.msra.mxu0 0.0
    %292 = vmatprep.subr.mxu0 0.0
    %293 = vmatpush1.msra.mxu0 0.0
    %294 = vmatprep.subr.mxu0 0.0
    %295 = vmatpush1.msra.mxu0 0.0
    %296 = vmatprep.subr.mxu0 0.0
    %297 = vmatpush1.msra.mxu0 0.0
    %298 = vmatprep.subr.mxu0 0.0
    %299 = vmatpush1.msra.mxu0 0.0
    %300 = vmatprep.mubr.f32.mxu0 0.0
    %v301 = vand.u32 %v53, 4294901760
    %v302 = vsub.f32 %v53, %v301
    %303 = vmatmul.mubr.f32.gmra.mrb[0].mxu0 %v302
    %v304 = vpop.f32.mrb[0].mxu0
    %v305 = vadd.f32 %v223, %v304
    %v306 = vpop.f32.mrb[0].mxu0
    %307 = vmatprep.mubr.f32.mxu0 0.0
    %v308 = vand.u32 %v56, 4294901760
    %v309 = vsub.f32 %v56, %v308
    %310 = vmatmul.mubr.f32.gmra.mrb[0].mxu0 %v309
    %v311 = vpop.f32.mrb[0].mxu0
    %v312 = vadd.f32 %v229, %v311
    %v313 = vpop.f32.mrb[0].mxu0
    %314 = vdwg.mxu0
    %315 = vmatprep.subr.mxu0 0.0
    %v316 = vand.u32 %v42, 4294901760
    %317 = vmatpush1.msra.mxu0 %v316
    %318 = vmatprep.subr.mxu0 0.0
    %v319 = vand.u32 %v43, 4294901760
    %320 = vmatpush1.msra.mxu0 %v319
    %321 = vmatprep.subr.mxu0 0.0
    %322 = vmatpush1.msra.mxu0 0.0
    %323 = vmatprep.subr.mxu0 0.0
    %324 = vmatpush1.msra.mxu0 0.0
    %325 = vmatprep.subr.mxu0 0.0
    %326 = vmatpush1.msra.mxu0 0.0
    %327 = vmatprep.subr.mxu0 0.0
    %328 = vmatpush1.msra.mxu0 0.0
    %329 = vmatprep.subr.mxu0 0.0
    %330 = vmatpush1.msra.mxu0 0.0
    %331 = vmatprep.subr.mxu0 0.0
    %332 = vmatpush1.msra.mxu0 0.0
    %333 = vmatprep.subr.mxu0 0.0
    %334 = vmatpush1.msra.mxu0 0.0
    %335 = vmatprep.subr.mxu0 0.0
    %336 = vmatpush1.msra.mxu0 0.0
    %337 = vmatprep.subr.mxu0 0.0
    %338 = vmatpush1.msra.mxu0 0.0
    %339 = vmatprep.subr.mxu0 0.0
    %340 = vmatpush1.msra.mxu0 0.0
    %341 = vmatprep.subr.mxu0 0.0
    %342 = vmatpush1.msra.mxu0 0.0
    %343 = vmatprep.subr.mxu0 0.0
    %344 = vmatpush1.msra.mxu0 0.0
    %345 = vmatprep.subr.mxu0 0.0
    %346 = vmatpush1.msra.mxu0 0.0
    %347 = vmatprep.subr.mxu0 0.0
    %348 = vmatpush1.msra.mxu0 0.0
    %349 = vmatprep.subr.mxu0 0.0
    %350 = vmatpush1.msra.mxu0 0.0
    %351 = vmatprep.subr.mxu0 0.0
    %352 = vmatpush1.msra.mxu0 0.0
    %353 = vmatprep.subr.mxu0 0.0
    %354 = vmatpush1.msra.mxu0 0.0
    %355 = vmatprep.subr.mxu0 0.0
    %356 = vmatpush1.msra.mxu0 0.0
    %357 = vmatprep.subr.mxu0 0.0
    %358 = vmatpush1.msra.mxu0 0.0
    %359 = vmatprep.subr.mxu0 0.0
    %360 = vmatpush1.msra.mxu0 0.0
    %361 = vmatprep.subr.mxu0 0.0
    %362 = vmatpush1.msra.mxu0 0.0
    %363 = vmatprep.subr.mxu0 0.0
    %364 = vmatpush1.msra.mxu0 0.0
    %365 = vmatprep.subr.mxu0 0.0
    %366 = vmatpush1.msra.mxu0 0.0
    %367 = vmatprep.subr.mxu0 0.0
    %368 = vmatpush1.msra.mxu0 0.0
    %369 = vmatprep.subr.mxu0 0.0
    %370 = vmatpush1.msra.mxu0 0.0
    %371 = vmatprep.subr.mxu0 0.0
    %372 = vmatpush1.msra.mxu0 0.0
    %373 = vmatprep.subr.mxu0 0.0
    %374 = vmatpush1.msra.mxu0 0.0
    %375 = vmatprep.subr.mxu0 0.0
    %376 = vmatpush1.msra.mxu0 0.0
    %377 = vmatprep.subr.mxu0 0.0
    %378 = vmatpush1.msra.mxu0 0.0
    %379 = vmatprep.subr.mxu0 0.0
    %380 = vmatpush1.msra.mxu0 0.0
    %381 = vmatprep.mubr.f32.mxu0 0.0
    %v382 = vand.u32 %v53, 4294901760
    %v383 = vsub.f32 %v53, %v382
    %v384 = vand.u32 %v383, 4294901760
    %385 = vmatmul.mubr.f32.gmra.mrb[0].mxu0 %v384
    %v386 = vpop.f32.mrb[0].mxu0
    %v387 = vadd.f32 %v305, %v386
    %v388 = vpop.f32.mrb[0].mxu0
    %389 = vmatprep.mubr.f32.mxu0 0.0
    %v390 = vand.u32 %v56, 4294901760
    %v391 = vsub.f32 %v56, %v390
    %v392 = vand.u32 %v391, 4294901760
    %393 = vmatmul.mubr.f32.gmra.mrb[0].mxu0 %v392
    %v394 = vpop.f32.mrb[0].mxu0
    %v395 = vadd.f32 %v312, %v394
    %v396 = vpop.f32.mrb[0].mxu0
    %397 = vdwg.mxu0
    %398 = vmatprep.subr.mxu0 0.0
    %v399 = vand.u32 %v42, 4294901760
    %v400 = vsub.f32 %v42, %v399
    %v401 = vand.u32 %v400, 4294901760
    %402 = vmatpush1.msra.mxu0 %v401
    %403 = vmatprep.subr.mxu0 0.0
    %v404 = vand.u32 %v43, 4294901760
    %v405 = vsub.f32 %v43, %v404
    %v406 = vand.u32 %v405, 4294901760
    %407 = vmatpush1.msra.mxu0 %v406
    %408 = vmatprep.subr.mxu0 0.0
    %409 = vmatpush1.msra.mxu0 0.0
    %410 = vmatprep.subr.mxu0 0.0
    %411 = vmatpush1.msra.mxu0 0.0
    %412 = vmatprep.subr.mxu0 0.0
    %413 = vmatpush1.msra.mxu0 0.0
    %414 = vmatprep.subr.mxu0 0.0
    %415 = vmatpush1.msra.mxu0 0.0
    %416 = vmatprep.subr.mxu0 0.0
    %417 = vmatpush1.msra.mxu0 0.0
    %418 = vmatprep.subr.mxu0 0.0
    %419 = vmatpush1.msra.mxu0 0.0
    %420 = vmatprep.subr.mxu0 0.0
    %421 = vmatpush1.msra.mxu0 0.0
    %422 = vmatprep.subr.mxu0 0.0
    %423 = vmatpush1.msra.mxu0 0.0
    %424 = vmatprep.subr.mxu0 0.0
    %425 = vmatpush1.msra.mxu0 0.0
    %426 = vmatprep.subr.mxu0 0.0
    %427 = vmatpush1.msra.mxu0 0.0
    %428 = vmatprep.subr.mxu0 0.0
    %429 = vmatpush1.msra.mxu0 0.0
    %430 = vmatprep.subr.mxu0 0.0
    %431 = vmatpush1.msra.mxu0 0.0
    %432 = vmatprep.subr.mxu0 0.0
    %433 = vmatpush1.msra.mxu0 0.0
    %434 = vmatprep.subr.mxu0 0.0
    %435 = vmatpush1.msra.mxu0 0.0
    %436 = vmatprep.subr.mxu0 0.0
    %437 = vmatpush1.msra.mxu0 0.0
    %438 = vmatprep.subr.mxu0 0.0
    %439 = vmatpush1.msra.mxu0 0.0
    %440 = vmatprep.subr.mxu0 0.0
    %441 = vmatpush1.msra.mxu0 0.0
    %442 = vmatprep.subr.mxu0 0.0
    %443 = vmatpush1.msra.mxu0 0.0
    %444 = vmatprep.subr.mxu0 0.0
    %445 = vmatpush1.msra.mxu0 0.0
    %446 = vmatprep.subr.mxu0 0.0
    %447 = vmatpush1.msra.mxu0 0.0
    %448 = vmatprep.subr.mxu0 0.0
    %449 = vmatpush1.msra.mxu0 0.0
    %450 = vmatprep.subr.mxu0 0.0
    %451 = vmatpush1.msra.mxu0 0.0
    %452 = vmatprep.subr.mxu0 0.0
    %453 = vmatpush1.msra.mxu0 0.0
    %454 = vmatprep.subr.mxu0 0.0
    %455 = vmatpush1.msra.mxu0 0.0
    %456 = vmatprep.subr.mxu0 0.0
    %457 = vmatpush1.msra.mxu0 0.0
    %458 = vmatprep.subr.mxu0 0.0
    %459 = vmatpush1.msra.mxu0 0.0
    %460 = vmatprep.subr.mxu0 0.0
    %461 = vmatpush1.msra.mxu0 0.0
    %462 = vmatprep.subr.mxu0 0.0
    %463 = vmatpush1.msra.mxu0 0.0
    %464 = vmatprep.subr.mxu0 0.0
    %465 = vmatpush1.msra.mxu0 0.0
    %466 = vmatprep.subr.mxu0 0.0
    %467 = vmatpush1.msra.mxu0 0.0
    %468 = vmatprep.mubr.f32.mxu0 0.0
    %v469 = vand.u32 %v53, 4294901760
    %470 = vmatmul.mubr.f32.gmra.mrb[0].mxu0 %v469
    %v471 = vpop.f32.mrb[0].mxu0
    %v472 = vadd.f32 %v387, %v471
    %v473 = vpop.f32.mrb[0].mxu0
    %474 = vmatprep.mubr.f32.mxu0 0.0
    %v475 = vand.u32 %v56, 4294901760
    %476 = vmatmul.mubr.f32.gmra.mrb[0].mxu0 %v475
    %v477 = vpop.f32.mrb[0].mxu0
    %v478 = vadd.f32 %v395, %v477
    %v479 = vpop.f32.mrb[0].mxu0
    %480 = vdwg.mxu0
    %481 = vmatprep.subr.mxu0 0.0
    %v482 = vand.u32 %v42, 4294901760
    %483 = vmatpush1.msra.mxu0 %v482
    %484 = vmatprep.subr.mxu0 0.0
    %v485 = vand.u32 %v43, 4294901760
    %486 = vmatpush1.msra.mxu0 %v485
    %487 = vmatprep.subr.mxu0 0.0
    %488 = vmatpush1.msra.mxu0 0.0
    %489 = vmatprep.subr.mxu0 0.0
    %490 = vmatpush1.msra.mxu0 0.0
    %491 = vmatprep.subr.mxu0 0.0
    %492 = vmatpush1.msra.mxu0 0.0
    %493 = vmatprep.subr.mxu0 0.0
    %494 = vmatpush1.msra.mxu0 0.0
    %495 = vmatprep.subr.mxu0 0.0
    %496 = vmatpush1.msra.mxu0 0.0
    %497 = vmatprep.subr.mxu0 0.0
    %498 = vmatpush1.msra.mxu0 0.0
    %499 = vmatprep.subr.mxu0 0.0
    %500 = vmatpush1.msra.mxu0 0.0
    %501 = vmatprep.subr.mxu0 0.0
    %502 = vmatpush1.msra.mxu0 0.0
    %503 = vmatprep.subr.mxu0 0.0
    %504 = vmatpush1.msra.mxu0 0.0
    %505 = vmatprep.subr.mxu0 0.0
    %506 = vmatpush1.msra.mxu0 0.0
    %507 = vmatprep.subr.mxu0 0.0
    %508 = vmatpush1.msra.mxu0 0.0
    %509 = vmatprep.subr.mxu0 0.0
    %510 = vmatpush1.msra.mxu0 0.0
    %511 = vmatprep.subr.mxu0 0.0
    %512 = vmatpush1.msra.mxu0 0.0
    %513 = vmatprep.subr.mxu0 0.0
    %514 = vmatpush1.msra.mxu0 0.0
    %515 = vmatprep.subr.mxu0 0.0
    %516 = vmatpush1.msra.mxu0 0.0
    %517 = vmatprep.subr.mxu0 0.0
    %518 = vmatpush1.msra.mxu0 0.0
    %519 = vmatprep.subr.mxu0 0.0
    %520 = vmatpush1.msra.mxu0 0.0
    %521 = vmatprep.subr.mxu0 0.0
    %522 = vmatpush1.msra.mxu0 0.0
    %523 = vmatprep.subr.mxu0 0.0
    %524 = vmatpush1.msra.mxu0 0.0
    %525 = vmatprep.subr.mxu0 0.0
    %526 = vmatpush1.msra.mxu0 0.0
    %527 = vmatprep.subr.mxu0 0.0
    %528 = vmatpush1.msra.mxu0 0.0
    %529 = vmatprep.subr.mxu0 0.0
    %530 = vmatpush1.msra.mxu0 0.0
    %531 = vmatprep.subr.mxu0 0.0
    %532 = vmatpush1.msra.mxu0 0.0
    %533 = vmatprep.subr.mxu0 0.0
    %534 = vmatpush1.msra.mxu0 0.0
    %535 = vmatprep.subr.mxu0 0.0
    %536 = vmatpush1.msra.mxu0 0.0
    %537 = vmatprep.subr.mxu0 0.0
    %538 = vmatpush1.msra.mxu0 0.0
    %539 = vmatprep.subr.mxu0 0.0
    %540 = vmatpush1.msra.mxu0 0.0
    %541 = vmatprep.subr.mxu0 0.0
    %542 = vmatpush1.msra.mxu0 0.0
    %543 = vmatprep.subr.mxu0 0.0
    %544 = vmatpush1.msra.mxu0 0.0
    %545 = vmatprep.subr.mxu0 0.0
    %546 = vmatpush1.msra.mxu0 0.0
    %547 = vmatprep.mubr.f32.mxu0 0.0
    %v548 = vand.u32 %v53, 4294901760
    %549 = vmatmul.mubr.f32.gmra.mrb[0].mxu0 %v548
    %v550 = vpop.f32.mrb[0].mxu0
    %v551 = vadd.f32 %v472, %v550
    %v552 = vpop.f32.mrb[0].mxu0
    %553 = vmatprep.mubr.f32.mxu0 0.0
    %v554 = vand.u32 %v56, 4294901760
    %555 = vmatmul.mubr.f32.gmra.mrb[0].mxu0 %v554
    %v556 = vpop.f32.mrb[0].mxu0
    %v557 = vadd.f32 %v478, %v556
    %v558 = vpop.f32.mrb[0].mxu0
    %559 = vdwg.mxu0
    %v560 = vmax.f32 %v551, 0.0
    %v561 = vmax.f32 %v557, 0.0
    %v562 = vld [vmem:[%s3] sm:$0xff]
    %v563 = vld [vmem:[%s3 + $0x8] sm:$0xff]
    %v564 = vld [vmem:[%s3 + $0x10] sm:$0xff]
    %v565 = vld [vmem:[%s3 + $0x18] sm:$0xff]
    %v566 = vld [vmem:[%s3 + $0x20] sm:$0xff]
    %v567 = vld [vmem:[%s3 + $0x28] sm:$0xff]
    %v568 = vld [vmem:[%s3 + $0x30] sm:$0xff]
    %v569 = vld [vmem:[%s3 + $0x38] sm:$0xff]
    %v570 = vld [vmem:[%s3 + $0x40] sm:$0xff]
    %v571 = vld [vmem:[%s3 + $0x48] sm:$0xff]
    %v572 = vld [vmem:[%s3 + $0x50] sm:$0xff]
    %v573 = vld [vmem:[%s3 + $0x58] sm:$0xff]
    %v574 = vld [vmem:[%s3 + $0x60] sm:$0xff]
    %v575 = vld [vmem:[%s3 + $0x68] sm:$0xff]
    %v576 = vld [vmem:[%s3 + $0x70] sm:$0xff]
    %v577 = vld [vmem:[%s3 + $0x78] sm:$0xff]
    %v578 = vld [vmem:[%s4] sm:$0x1]
    %v580 = vlaneseq
    %v581 = vshrl.u32 %v580, 7
    %v582 = vsub.s32 0, %v581
    %v583 = vrot.slane %v578, %v582
    %585 = vmatprep.subr.mxu0 0.0
    %v586 = vand.u32 %v562, 4294901760
    %587 = vmatpush1.msra.mxu0 %v586
    %588 = vmatprep.subr.mxu0 0.0
    %v589 = vand.u32 %v563, 4294901760
    %590 = vmatpush1.msra.mxu0 %v589
    %591 = vmatprep.subr.mxu0 0.0
    %v592 = vand.u32 %v564, 4294901760
    %593 = vmatpush1.msra.mxu0 %v592
    %594 = vmatprep.subr.mxu0 0.0
    %v595 = vand.u32 %v565, 4294901760
    %596 = vmatpush1.msra.mxu0 %v595
    %597 = vmatprep.subr.mxu0 0.0
    %v598 = vand.u32 %v566, 4294901760
    %599 = vmatpush1.msra.mxu0 %v598
    %600 = vmatprep.subr.mxu0 0.0
    %v601 = vand.u32 %v567, 4294901760
    %602 = vmatpush1.msra.mxu0 %v601
    %603 = vmatprep.subr.mxu0 0.0
    %v604 = vand.u32 %v568, 4294901760
    %605 = vmatpush1.msra.mxu0 %v604
    %606 = vmatprep.subr.mxu0 0.0
    %v607 = vand.u32 %v569, 4294901760
    %608 = vmatpush1.msra.mxu0 %v607
    %609 = vmatprep.subr.mxu0 0.0
    %v610 = vand.u32 %v570, 4294901760
    %611 = vmatpush1.msra.mxu0 %v610
    %612 = vmatprep.subr.mxu0 0.0
    %v613 = vand.u32 %v571, 4294901760
    %614 = vmatpush1.msra.mxu0 %v613
    %615 = vmatprep.subr.mxu0 0.0
    %v616 = vand.u32 %v572, 4294901760
    %617 = vmatpush1.msra.mxu0 %v616
    %618 = vmatprep.subr.mxu0 0.0
    %v619 = vand.u32 %v573, 4294901760
    %620 = vmatpush1.msra.mxu0 %v619
    %621 = vmatprep.subr.mxu0 0.0
    %v622 = vand.u32 %v574, 4294901760
    %623 = vmatpush1.msra.mxu0 %v622
    %624 = vmatprep.subr.mxu0 0.0
    %v625 = vand.u32 %v575, 4294901760
    %626 = vmatpush1.msra.mxu0 %v625
    %627 = vmatprep.subr.mxu0 0.0
    %v628 = vand.u32 %v576, 4294901760
    %629 = vmatpush1.msra.mxu0 %v628
    %630 = vmatprep.subr.mxu0 0.0
    %v631 = vand.u32 %v577, 4294901760
    %632 = vmatpush1.msra.mxu0 %v631
    %633 = vmatprep.subr.mxu0 0.0
    %634 = vmatpush1.msra.mxu0 0.0
    %635 = vmatprep.subr.mxu0 0.0
    %636 = vmatpush1.msra.mxu0 0.0
    %637 = vmatprep.subr.mxu0 0.0
    %638 = vmatpush1.msra.mxu0 0.0
    %639 = vmatprep.subr.mxu0 0.0
    %640 = vmatpush1.msra.mxu0 0.0
    %641 = vmatprep.subr.mxu0 0.0
    %642 = vmatpush1.msra.mxu0 0.0
    %643 = vmatprep.subr.mxu0 0.0
    %644 = vmatpush1.msra.mxu0 0.0
    %645 = vmatprep.subr.mxu0 0.0
    %646 = vmatpush1.msra.mxu0 0.0
    %647 = vmatprep.subr.mxu0 0.0
    %648 = vmatpush1.msra.mxu0 0.0
    %649 = vmatprep.subr.mxu0 0.0
    %650 = vmatpush1.msra.mxu0 0.0
    %651 = vmatprep.subr.mxu0 0.0
    %652 = vmatpush1.msra.mxu0 0.0
    %653 = vmatprep.subr.mxu0 0.0
    %654 = vmatpush1.msra.mxu0 0.0
    %655 = vmatprep.subr.mxu0 0.0
    %656 = vmatpush1.msra.mxu0 0.0
    %657 = vmatprep.subr.mxu0 0.0
    %658 = vmatpush1.msra.mxu0 0.0
    %659 = vmatprep.subr.mxu0 0.0
    %660 = vmatpush1.msra.mxu0 0.0
    %661 = vmatprep.subr.mxu0 0.0
    %662 = vmatpush1.msra.mxu0 0.0
    %663 = vmatprep.subr.mxu0 0.0
    %664 = vmatpush1.msra.mxu0 0.0
    %665 = vmatprep.mubr.f32.mxu0 0.0
    %v666 = vand.u32 %v560, 4294901760
    %v667 = vsub.f32 %v560, %v666
    %v668 = vand.u32 %v667, 4294901760
    %v669 = vsub.f32 %v667, %v668
    %v670 = vand.u32 %v669, 4294901760
    %671 = vmatmul.mubr.f32.gmra.mrb[0].mxu0 %v670
    %v672 = vpop.f32.mrb[0].mxu0
    %v673 = vadd.f32 %v583, %v672
    %v674 = vpop.f32.mrb[0].mxu0
    %675 = vmatprep.mubr.f32.mxu0 0.0
    %v676 = vand.u32 %v561, 4294901760
    %v677 = vsub.f32 %v561, %v676
    %v678 = vand.u32 %v677, 4294901760
    %v679 = vsub.f32 %v677, %v678
    %v680 = vand.u32 %v679, 4294901760
    %681 = vmatmul.mubr.f32.gmra.mrb[0].mxu0 %v680
    %v682 = vpop.f32.mrb[0].mxu0
    %v683 = vadd.f32 %v583, %v682
    %v684 = vpop.f32.mrb[0].mxu0
    %685 = vdwg.mxu0
    %686 = vmatprep.subr.mxu0 0.0
    %v687 = vand.u32 %v562, 4294901760
    %v688 = vsub.f32 %v562, %v687
    %v689 = vand.u32 %v688, 4294901760
    %v690 = vsub.f32 %v688, %v689
    %v691 = vand.u32 %v690, 4294901760
    %692 = vmatpush1.msra.mxu0 %v691
    %693 = vmatprep.subr.mxu0 0.0
    %v694 = vand.u32 %v563, 4294901760
    %v695 = vsub.f32 %v563, %v694
    %v696 = vand.u32 %v695, 4294901760
    %v697 = vsub.f32 %v695, %v696
    %v698 = vand.u32 %v697, 4294901760
    %699 = vmatpush1.msra.mxu0 %v698
    %700 = vmatprep.subr.mxu0 0.0
    %v701 = vand.u32 %v564, 4294901760
    %v702 = vsub.f32 %v564, %v701
    %v703 = vand.u32 %v702, 4294901760
    %v704 = vsub.f32 %v702, %v703
    %v705 = vand.u32 %v704, 4294901760
    %706 = vmatpush1.msra.mxu0 %v705
    %707 = vmatprep.subr.mxu0 0.0
    %v708 = vand.u32 %v565, 4294901760
    %v709 = vsub.f32 %v565, %v708
    %v710 = vand.u32 %v709, 4294901760
    %v711 = vsub.f32 %v709, %v710
    %v712 = vand.u32 %v711, 4294901760
    %713 = vmatpush1.msra.mxu0 %v712
    %714 = vmatprep.subr.mxu0 0.0
    %v715 = vand.u32 %v566, 4294901760
    %v716 = vsub.f32 %v566, %v715
    %v717 = vand.u32 %v716, 4294901760
    %v718 = vsub.f32 %v716, %v717
    %v719 = vand.u32 %v718, 4294901760
    %720 = vmatpush1.msra.mxu0 %v719
    %721 = vmatprep.subr.mxu0 0.0
    %v722 = vand.u32 %v567, 4294901760
    %v723 = vsub.f32 %v567, %v722
    %v724 = vand.u32 %v723, 4294901760
    %v725 = vsub.f32 %v723, %v724
    %v726 = vand.u32 %v725, 4294901760
    %727 = vmatpush1.msra.mxu0 %v726
    %728 = vmatprep.subr.mxu0 0.0
    %v729 = vand.u32 %v568, 4294901760
    %v730 = vsub.f32 %v568, %v729
    %v731 = vand.u32 %v730, 4294901760
    %v732 = vsub.f32 %v730, %v731
    %v733 = vand.u32 %v732, 4294901760
    %734 = vmatpush1.msra.mxu0 %v733
    %735 = vmatprep.subr.mxu0 0.0
    %v736 = vand.u32 %v569, 4294901760
    %v737 = vsub.f32 %v569, %v736
    %v738 = vand.u32 %v737, 4294901760
    %v739 = vsub.f32 %v737, %v738
    %v740 = vand.u32 %v739, 4294901760
    %741 = vmatpush1.msra.mxu0 %v740
    %742 = vmatprep.subr.mxu0 0.0
    %v743 = vand.u32 %v570, 4294901760
    %v744 = vsub.f32 %v570, %v743
    %v745 = vand.u32 %v744, 4294901760
    %v746 = vsub.f32 %v744, %v745
    %v747 = vand.u32 %v746, 4294901760
    %748 = vmatpush1.msra.mxu0 %v747
    %749 = vmatprep.subr.mxu0 0.0
    %v750 = vand.u32 %v571, 4294901760
    %v751 = vsub.f32 %v571, %v750
    %v752 = vand.u32 %v751, 4294901760
    %v753 = vsub.f32 %v751, %v752
    %v754 = vand.u32 %v753, 4294901760
    %755 = vmatpush1.msra.mxu0 %v754
    %756 = vmatprep.subr.mxu0 0.0
    %v757 = vand.u32 %v572, 4294901760
    %v758 = vsub.f32 %v572, %v757
    %v759 = vand.u32 %v758, 4294901760
    %v760 = vsub.f32 %v758, %v759
    %v761 = vand.u32 %v760, 4294901760
    %762 = vmatpush1.msra.mxu0 %v761
    %763 = vmatprep.subr.mxu0 0.0
    %v764 = vand.u32 %v573, 4294901760
    %v765 = vsub.f32 %v573, %v764
    %v766 = vand.u32 %v765, 4294901760
    %v767 = vsub.f32 %v765, %v766
    %v768 = vand.u32 %v767, 4294901760
    %769 = vmatpush1.msra.mxu0 %v768
    %770 = vmatprep.subr.mxu0 0.0
    %v771 = vand.u32 %v574, 4294901760
    %v772 = vsub.f32 %v574, %v771
    %v773 = vand.u32 %v772, 4294901760
    %v774 = vsub.f32 %v772, %v773
    %v775 = vand.u32 %v774, 4294901760
    %776 = vmatpush1.msra.mxu0 %v775
    %777 = vmatprep.subr.mxu0 0.0
    %v778 = vand.u32 %v575, 4294901760
    %v779 = vsub.f32 %v575, %v778
    %v780 = vand.u32 %v779, 4294901760
    %v781 = vsub.f32 %v779, %v780
    %v782 = vand.u32 %v781, 4294901760
    %783 = vmatpush1.msra.mxu0 %v782
    %784 = vmatprep.subr.mxu0 0.0
    %v785 = vand.u32 %v576, 4294901760
    %v786 = vsub.f32 %v576, %v785
    %v787 = vand.u32 %v786, 4294901760
    %v788 = vsub.f32 %v786, %v787
    %v789 = vand.u32 %v788, 4294901760
    %790 = vmatpush1.msra.mxu0 %v789
    %791 = vmatprep.subr.mxu0 0.0
    %v792 = vand.u32 %v577, 4294901760
    %v793 = vsub.f32 %v577, %v792
    %v794 = vand.u32 %v793, 4294901760
    %v795 = vsub.f32 %v793, %v794
    %v796 = vand.u32 %v795, 4294901760
    %797 = vmatpush1.msra.mxu0 %v796
    %798 = vmatprep.subr.mxu0 0.0
    %799 = vmatpush1.msra.mxu0 0.0
    %800 = vmatprep.subr.mxu0 0.0
    %801 = vmatpush1.msra.mxu0 0.0
    %802 = vmatprep.subr.mxu0 0.0
    %803 = vmatpush1.msra.mxu0 0.0
    %804 = vmatprep.subr.mxu0 0.0
    %805 = vmatpush1.msra.mxu0 0.0
    %806 = vmatprep.subr.mxu0 0.0
    %807 = vmatpush1.msra.mxu0 0.0
    %808 = vmatprep.subr.mxu0 0.0
    %809 = vmatpush1.msra.mxu0 0.0
    %810 = vmatprep.subr.mxu0 0.0
    %811 = vmatpush1.msra.mxu0 0.0
    %812 = vmatprep.subr.mxu0 0.0
    %813 = vmatpush1.msra.mxu0 0.0
    %814 = vmatprep.subr.mxu0 0.0
    %815 = vmatpush1.msra.mxu0 0.0
    %816 = vmatprep.subr.mxu0 0.0
    %817 = vmatpush1.msra.mxu0 0.0
    %818 = vmatprep.subr.mxu0 0.0
    %819 = vmatpush1.msra.mxu0 0.0
    %820 = vmatprep.subr.mxu0 0.0
    %821 = vmatpush1.msra.mxu0 0.0
    %822 = vmatprep.subr.mxu0 0.0
    %823 = vmatpush1.msra.mxu0 0.0
    %824 = vmatprep.subr.mxu0 0.0
    %825 = vmatpush1.msra.mxu0 0.0
    %826 = vmatprep.subr.mxu0 0.0
    %827 = vmatpush1.msra.mxu0 0.0
    %828 = vmatprep.subr.mxu0 0.0
    %829 = vmatpush1.msra.mxu0 0.0
    %830 = vmatprep.mubr.f32.mxu0 0.0
    %v831 = vand.u32 %v560, 4294901760
    %832 = vmatmul.mubr.f32.gmra.mrb[0].mxu0 %v831
    %v833 = vpop.f32.mrb[0].mxu0
    %v834 = vadd.f32 %v673, %v833
    %v835 = vpop.f32.mrb[0].mxu0
    %836 = vmatprep.mubr.f32.mxu0 0.0
    %v837 = vand.u32 %v561, 4294901760
    %838 = vmatmul.mubr.f32.gmra.mrb[0].mxu0 %v837
    %v839 = vpop.f32.mrb[0].mxu0
    %v840 = vadd.f32 %v683, %v839
    %v841 = vpop.f32.mrb[0].mxu0
    %842 = vdwg.mxu0
    %843 = vmatprep.subr.mxu0 0.0
    %v844 = vand.u32 %v562, 4294901760
    %v845 = vsub.f32 %v562, %v844
    %846 = vmatpush1.msra.mxu0 %v845
    %847 = vmatprep.subr.mxu0 0.0
    %v848 = vand.u32 %v563, 4294901760
    %v849 = vsub.f32 %v563, %v848
    %850 = vmatpush1.msra.mxu0 %v849
    %851 = vmatprep.subr.mxu0 0.0
    %v852 = vand.u32 %v564, 4294901760
    %v853 = vsub.f32 %v564, %v852
    %854 = vmatpush1.msra.mxu0 %v853
    %855 = vmatprep.subr.mxu0 0.0
    %v856 = vand.u32 %v565, 4294901760
    %v857 = vsub.f32 %v565, %v856
    %858 = vmatpush1.msra.mxu0 %v857
    %859 = vmatprep.subr.mxu0 0.0
    %v860 = vand.u32 %v566, 4294901760
    %v861 = vsub.f32 %v566, %v860
    %862 = vmatpush1.msra.mxu0 %v861
    %863 = vmatprep.subr.mxu0 0.0
    %v864 = vand.u32 %v567, 4294901760
    %v865 = vsub.f32 %v567, %v864
    %866 = vmatpush1.msra.mxu0 %v865
    %867 = vmatprep.subr.mxu0 0.0
    %v868 = vand.u32 %v568, 4294901760
    %v869 = vsub.f32 %v568, %v868
    %870 = vmatpush1.msra.mxu0 %v869
    %871 = vmatprep.subr.mxu0 0.0
    %v872 = vand.u32 %v569, 4294901760
    %v873 = vsub.f32 %v569, %v872
    %874 = vmatpush1.msra.mxu0 %v873
    %875 = vmatprep.subr.mxu0 0.0
    %v876 = vand.u32 %v570, 4294901760
    %v877 = vsub.f32 %v570, %v876
    %878 = vmatpush1.msra.mxu0 %v877
    %879 = vmatprep.subr.mxu0 0.0
    %v880 = vand.u32 %v571, 4294901760
    %v881 = vsub.f32 %v571, %v880
    %882 = vmatpush1.msra.mxu0 %v881
    %883 = vmatprep.subr.mxu0 0.0
    %v884 = vand.u32 %v572, 4294901760
    %v885 = vsub.f32 %v572, %v884
    %886 = vmatpush1.msra.mxu0 %v885
    %887 = vmatprep.subr.mxu0 0.0
    %v888 = vand.u32 %v573, 4294901760
    %v889 = vsub.f32 %v573, %v888
    %890 = vmatpush1.msra.mxu0 %v889
    %891 = vmatprep.subr.mxu0 0.0
    %v892 = vand.u32 %v574, 4294901760
    %v893 = vsub.f32 %v574, %v892
    %894 = vmatpush1.msra.mxu0 %v893
    %895 = vmatprep.subr.mxu0 0.0
    %v896 = vand.u32 %v575, 4294901760
    %v897 = vsub.f32 %v575, %v896
    %898 = vmatpush1.msra.mxu0 %v897
    %899 = vmatprep.subr.mxu0 0.0
    %v900 = vand.u32 %v576, 4294901760
    %v901 = vsub.f32 %v576, %v900
    %902 = vmatpush1.msra.mxu0 %v901
    %903 = vmatprep.subr.mxu0 0.0
    %v904 = vand.u32 %v577, 4294901760
    %v905 = vsub.f32 %v577, %v904
    %906 = vmatpush1.msra.mxu0 %v905
    %907 = vmatprep.subr.mxu0 0.0
    %908 = vmatpush1.msra.mxu0 0.0
    %909 = vmatprep.subr.mxu0 0.0
    %910 = vmatpush1.msra.mxu0 0.0
    %911 = vmatprep.subr.mxu0 0.0
    %912 = vmatpush1.msra.mxu0 0.0
    %913 = vmatprep.subr.mxu0 0.0
    %914 = vmatpush1.msra.mxu0 0.0
    %915 = vmatprep.subr.mxu0 0.0
    %916 = vmatpush1.msra.mxu0 0.0
    %917 = vmatprep.subr.mxu0 0.0
    %918 = vmatpush1.msra.mxu0 0.0
    %919 = vmatprep.subr.mxu0 0.0
    %920 = vmatpush1.msra.mxu0 0.0
    %921 = vmatprep.subr.mxu0 0.0
    %922 = vmatpush1.msra.mxu0 0.0
    %923 = vmatprep.subr.mxu0 0.0
    %924 = vmatpush1.msra.mxu0 0.0
    %925 = vmatprep.subr.mxu0 0.0
    %926 = vmatpush1.msra.mxu0 0.0
    %927 = vmatprep.subr.mxu0 0.0
    %928 = vmatpush1.msra.mxu0 0.0
    %929 = vmatprep.subr.mxu0 0.0
    %930 = vmatpush1.msra.mxu0 0.0
    %931 = vmatprep.subr.mxu0 0.0
    %932 = vmatpush1.msra.mxu0 0.0
    %933 = vmatprep.subr.mxu0 0.0
    %934 = vmatpush1.msra.mxu0 0.0
    %935 = vmatprep.subr.mxu0 0.0
    %936 = vmatpush1.msra.mxu0 0.0
    %937 = vmatprep.subr.mxu0 0.0
    %938 = vmatpush1.msra.mxu0 0.0
    %939 = vmatprep.mubr.f32.mxu0 0.0
    %v940 = vand.u32 %v560, 4294901760
    %v941 = vsub.f32 %v560, %v940
    %942 = vmatmul.mubr.f32.gmra.mrb[0].mxu0 %v941
    %v943 = vpop.f32.mrb[0].mxu0
    %v944 = vadd.f32 %v834, %v943
    %v945 = vpop.f32.mrb[0].mxu0
    %946 = vmatprep.mubr.f32.mxu0 0.0
    %v947 = vand.u32 %v561, 4294901760
    %v948 = vsub.f32 %v561, %v947
    %949 = vmatmul.mubr.f32.gmra.mrb[0].mxu0 %v948
    %v950 = vpop.f32.mrb[0].mxu0
    %v951 = vadd.f32 %v840, %v950
    %v952 = vpop.f32.mrb[0].mxu0
    %953 = vdwg.mxu0
    %954 = vmatprep.subr.mxu0 0.0
    %v955 = vand.u32 %v562, 4294901760
    %956 = vmatpush1.msra.mxu0 %v955
    %957 = vmatprep.subr.mxu0 0.0
    %v958 = vand.u32 %v563, 4294901760
    %959 = vmatpush1.msra.mxu0 %v958
    %960 = vmatprep.subr.mxu0 0.0
    %v961 = vand.u32 %v564, 4294901760
    %962 = vmatpush1.msra.mxu0 %v961
    %963 = vmatprep.subr.mxu0 0.0
    %v964 = vand.u32 %v565, 4294901760
    %965 = vmatpush1.msra.mxu0 %v964
    %966 = vmatprep.subr.mxu0 0.0
    %v967 = vand.u32 %v566, 4294901760
    %968 = vmatpush1.msra.mxu0 %v967
    %969 = vmatprep.subr.mxu0 0.0
    %v970 = vand.u32 %v567, 4294901760
    %971 = vmatpush1.msra.mxu0 %v970
    %972 = vmatprep.subr.mxu0 0.0
    %v973 = vand.u32 %v568, 4294901760
    %974 = vmatpush1.msra.mxu0 %v973
    %975 = vmatprep.subr.mxu0 0.0
    %v976 = vand.u32 %v569, 4294901760
    %977 = vmatpush1.msra.mxu0 %v976
    %978 = vmatprep.subr.mxu0 0.0
    %v979 = vand.u32 %v570, 4294901760
    %980 = vmatpush1.msra.mxu0 %v979
    %981 = vmatprep.subr.mxu0 0.0
    %v982 = vand.u32 %v571, 4294901760
    %983 = vmatpush1.msra.mxu0 %v982
    %984 = vmatprep.subr.mxu0 0.0
    %v985 = vand.u32 %v572, 4294901760
    %986 = vmatpush1.msra.mxu0 %v985
    %987 = vmatprep.subr.mxu0 0.0
    %v988 = vand.u32 %v573, 4294901760
    %989 = vmatpush1.msra.mxu0 %v988
    %990 = vmatprep.subr.mxu0 0.0
    %v991 = vand.u32 %v574, 4294901760
    %992 = vmatpush1.msra.mxu0 %v991
    %993 = vmatprep.subr.mxu0 0.0
    %v994 = vand.u32 %v575, 4294901760
    %995 = vmatpush1.msra.mxu0 %v994
    %996 = vmatprep.subr.mxu0 0.0
    %v997 = vand.u32 %v576, 4294901760
    %998 = vmatpush1.msra.mxu0 %v997
    %999 = vmatprep.subr.mxu0 0.0
    %v1000 = vand.u32 %v577, 4294901760
    %1001 = vmatpush1.msra.mxu0 %v1000
    %1002 = vmatprep.subr.mxu0 0.0
    %1003 = vmatpush1.msra.mxu0 0.0
    %1004 = vmatprep.subr.mxu0 0.0
    %1005 = vmatpush1.msra.mxu0 0.0
    %1006 = vmatprep.subr.mxu0 0.0
    %1007 = vmatpush1.msra.mxu0 0.0
    %1008 = vmatprep.subr.mxu0 0.0
    %1009 = vmatpush1.msra.mxu0 0.0
    %1010 = vmatprep.subr.mxu0 0.0
    %1011 = vmatpush1.msra.mxu0 0.0
    %1012 = vmatprep.subr.mxu0 0.0
    %1013 = vmatpush1.msra.mxu0 0.0
    %1014 = vmatprep.subr.mxu0 0.0
    %1015 = vmatpush1.msra.mxu0 0.0
    %1016 = vmatprep.subr.mxu0 0.0
    %1017 = vmatpush1.msra.mxu0 0.0
    %1018 = vmatprep.subr.mxu0 0.0
    %1019 = vmatpush1.msra.mxu0 0.0
    %1020 = vmatprep.subr.mxu0 0.0
    %1021 = vmatpush1.msra.mxu0 0.0
    %1022 = vmatprep.subr.mxu0 0.0
    %1023 = vmatpush1.msra.mxu0 0.0
    %1024 = vmatprep.subr.mxu0 0.0
    %1025 = vmatpush1.msra.mxu0 0.0
    %1026 = vmatprep.subr.mxu0 0.0
    %1027 = vmatpush1.msra.mxu0 0.0
    %1028 = vmatprep.subr.mxu0 0.0
    %1029 = vmatpush1.msra.mxu0 0.0
    %1030 = vmatprep.subr.mxu0 0.0
    %1031 = vmatpush1.msra.mxu0 0.0
    %1032 = vmatprep.subr.mxu0 0.0
    %1033 = vmatpush1.msra.mxu0 0.0
    %1034 = vmatprep.mubr.f32.mxu0 0.0
    %v1035 = vand.u32 %v560, 4294901760
    %v1036 = vsub.f32 %v560, %v1035
    %v1037 = vand.u32 %v1036, 4294901760
    %1038 = vmatmul.mubr.f32.gmra.mrb[0].mxu0 %v1037
    %v1039 = vpop.f32.mrb[0].mxu0
    %v1040 = vadd.f32 %v944, %v1039
    %v1041 = vpop.f32.mrb[0].mxu0
    %1042 = vmatprep.mubr.f32.mxu0 0.0
    %v1043 = vand.u32 %v561, 4294901760
    %v1044 = vsub.f32 %v561, %v1043
    %v1045 = vand.u32 %v1044, 4294901760
    %1046 = vmatmul.mubr.f32.gmra.mrb[0].mxu0 %v1045
    %v1047 = vpop.f32.mrb[0].mxu0
    %v1048 = vadd.f32 %v951, %v1047
    %v1049 = vpop.f32.mrb[0].mxu0
    %1050 = vdwg.mxu0
    %1051 = vmatprep.subr.mxu0 0.0
    %v1052 = vand.u32 %v562, 4294901760
    %v1053 = vsub.f32 %v562, %v1052
    %v1054 = vand.u32 %v1053, 4294901760
    %1055 = vmatpush1.msra.mxu0 %v1054
    %1056 = vmatprep.subr.mxu0 0.0
    %v1057 = vand.u32 %v563, 4294901760
    %v1058 = vsub.f32 %v563, %v1057
    %v1059 = vand.u32 %v1058, 4294901760
    %1060 = vmatpush1.msra.mxu0 %v1059
    %1061 = vmatprep.subr.mxu0 0.0
    %v1062 = vand.u32 %v564, 4294901760
    %v1063 = vsub.f32 %v564, %v1062
    %v1064 = vand.u32 %v1063, 4294901760
    %1065 = vmatpush1.msra.mxu0 %v1064
    %1066 = vmatprep.subr.mxu0 0.0
    %v1067 = vand.u32 %v565, 4294901760
    %v1068 = vsub.f32 %v565, %v1067
    %v1069 = vand.u32 %v1068, 4294901760
    %1070 = vmatpush1.msra.mxu0 %v1069
    %1071 = vmatprep.subr.mxu0 0.0
    %v1072 = vand.u32 %v566, 4294901760
    %v1073 = vsub.f32 %v566, %v1072
    %v1074 = vand.u32 %v1073, 4294901760
    %1075 = vmatpush1.msra.mxu0 %v1074
    %1076 = vmatprep.subr.mxu0 0.0
    %v1077 = vand.u32 %v567, 4294901760
    %v1078 = vsub.f32 %v567, %v1077
    %v1079 = vand.u32 %v1078, 4294901760
    %1080 = vmatpush1.msra.mxu0 %v1079
    %1081 = vmatprep.subr.mxu0 0.0
    %v1082 = vand.u32 %v568, 4294901760
    %v1083 = vsub.f32 %v568, %v1082
    %v1084 = vand.u32 %v1083, 4294901760
    %1085 = vmatpush1.msra.mxu0 %v1084
    %1086 = vmatprep.subr.mxu0 0.0
    %v1087 = vand.u32 %v569, 4294901760
    %v1088 = vsub.f32 %v569, %v1087
    %v1089 = vand.u32 %v1088, 4294901760
    %1090 = vmatpush1.msra.mxu0 %v1089
    %1091 = vmatprep.subr.mxu0 0.0
    %v1092 = vand.u32 %v570, 4294901760
    %v1093 = vsub.f32 %v570, %v1092
    %v1094 = vand.u32 %v1093, 4294901760
    %1095 = vmatpush1.msra.mxu0 %v1094
    %1096 = vmatprep.subr.mxu0 0.0
    %v1097 = vand.u32 %v571, 4294901760
    %v1098 = vsub.f32 %v571, %v1097
    %v1099 = vand.u32 %v1098, 4294901760
    %1100 = vmatpush1.msra.mxu0 %v1099
    %1101 = vmatprep.subr.mxu0 0.0
    %v1102 = vand.u32 %v572, 4294901760
    %v1103 = vsub.f32 %v572, %v1102
    %v1104 = vand.u32 %v1103, 4294901760
    %1105 = vmatpush1.msra.mxu0 %v1104
    %1106 = vmatprep.subr.mxu0 0.0
    %v1107 = vand.u32 %v573, 4294901760
    %v1108 = vsub.f32 %v573, %v1107
    %v1109 = vand.u32 %v1108, 4294901760
    %1110 = vmatpush1.msra.mxu0 %v1109
    %1111 = vmatprep.subr.mxu0 0.0
    %v1112 = vand.u32 %v574, 4294901760
    %v1113 = vsub.f32 %v574, %v1112
    %v1114 = vand.u32 %v1113, 4294901760
    %1115 = vmatpush1.msra.mxu0 %v1114
    %1116 = vmatprep.subr.mxu0 0.0
    %v1117 = vand.u32 %v575, 4294901760
    %v1118 = vsub.f32 %v575, %v1117
    %v1119 = vand.u32 %v1118, 4294901760
    %1120 = vmatpush1.msra.mxu0 %v1119
    %1121 = vmatprep.subr.mxu0 0.0
    %v1122 = vand.u32 %v576, 4294901760
    %v1123 = vsub.f32 %v576, %v1122
    %v1124 = vand.u32 %v1123, 4294901760
    %1125 = vmatpush1.msra.mxu0 %v1124
    %1126 = vmatprep.subr.mxu0 0.0
    %v1127 = vand.u32 %v577, 4294901760
    %v1128 = vsub.f32 %v577, %v1127
    %v1129 = vand.u32 %v1128, 4294901760
    %1130 = vmatpush1.msra.mxu0 %v1129
    %1131 = vmatprep.subr.mxu0 0.0
    %1132 = vmatpush1.msra.mxu0 0.0
    %1133 = vmatprep.subr.mxu0 0.0
    %1134 = vmatpush1.msra.mxu0 0.0
    %1135 = vmatprep.subr.mxu0 0.0
    %1136 = vmatpush1.msra.mxu0 0.0
    %1137 = vmatprep.subr.mxu0 0.0
    %1138 = vmatpush1.msra.mxu0 0.0
    %1139 = vmatprep.subr.mxu0 0.0
    %1140 = vmatpush1.msra.mxu0 0.0
    %1141 = vmatprep.subr.mxu0 0.0
    %1142 = vmatpush1.msra.mxu0 0.0
    %1143 = vmatprep.subr.mxu0 0.0
    %1144 = vmatpush1.msra.mxu0 0.0
    %1145 = vmatprep.subr.mxu0 0.0
    %1146 = vmatpush1.msra.mxu0 0.0
    %1147 = vmatprep.subr.mxu0 0.0
    %1148 = vmatpush1.msra.mxu0 0.0
    %1149 = vmatprep.subr.mxu0 0.0
    %1150 = vmatpush1.msra.mxu0 0.0
    %1151 = vmatprep.subr.mxu0 0.0
    %1152 = vmatpush1.msra.mxu0 0.0
    %1153 = vmatprep.subr.mxu0 0.0
    %1154 = vmatpush1.msra.mxu0 0.0
    %1155 = vmatprep.subr.mxu0 0.0
    %1156 = vmatpush1.msra.mxu0 0.0
    %1157 = vmatprep.subr.mxu0 0.0
    %1158 = vmatpush1.msra.mxu0 0.0
    %1159 = vmatprep.subr.mxu0 0.0
    %1160 = vmatpush1.msra.mxu0 0.0
    %1161 = vmatprep.subr.mxu0 0.0
    %1162 = vmatpush1.msra.mxu0 0.0
    %1163 = vmatprep.mubr.f32.mxu0 0.0
    %v1164 = vand.u32 %v560, 4294901760
    %1165 = vmatmul.mubr.f32.gmra.mrb[0].mxu0 %v1164
    %v1166 = vpop.f32.mrb[0].mxu0
    %v1167 = vadd.f32 %v1040, %v1166
    %v1168 = vpop.f32.mrb[0].mxu0
    %1169 = vmatprep.mubr.f32.mxu0 0.0
    %v1170 = vand.u32 %v561, 4294901760
    %1171 = vmatmul.mubr.f32.gmra.mrb[0].mxu0 %v1170
    %v1172 = vpop.f32.mrb[0].mxu0
    %v1173 = vadd.f32 %v1048, %v1172
    %v1174 = vpop.f32.mrb[0].mxu0
    %1175 = vdwg.mxu0
    %1176 = vmatprep.subr.mxu0 0.0
    %v1177 = vand.u32 %v562, 4294901760
    %1178 = vmatpush1.msra.mxu0 %v1177
    %1179 = vmatprep.subr.mxu0 0.0
    %v1180 = vand.u32 %v563, 4294901760
    %1181 = vmatpush1.msra.mxu0 %v1180
    %1182 = vmatprep.subr.mxu0 0.0
    %v1183 = vand.u32 %v564, 4294901760
    %1184 = vmatpush1.msra.mxu0 %v1183
    %1185 = vmatprep.subr.mxu0 0.0
    %v1186 = vand.u32 %v565, 4294901760
    %1187 = vmatpush1.msra.mxu0 %v1186
    %1188 = vmatprep.subr.mxu0 0.0
    %v1189 = vand.u32 %v566, 4294901760
    %1190 = vmatpush1.msra.mxu0 %v1189
    %1191 = vmatprep.subr.mxu0 0.0
    %v1192 = vand.u32 %v567, 4294901760
    %1193 = vmatpush1.msra.mxu0 %v1192
    %1194 = vmatprep.subr.mxu0 0.0
    %v1195 = vand.u32 %v568, 4294901760
    %1196 = vmatpush1.msra.mxu0 %v1195
    %1197 = vmatprep.subr.mxu0 0.0
    %v1198 = vand.u32 %v569, 4294901760
    %1199 = vmatpush1.msra.mxu0 %v1198
    %1200 = vmatprep.subr.mxu0 0.0
    %v1201 = vand.u32 %v570, 4294901760
    %1202 = vmatpush1.msra.mxu0 %v1201
    %1203 = vmatprep.subr.mxu0 0.0
    %v1204 = vand.u32 %v571, 4294901760
    %1205 = vmatpush1.msra.mxu0 %v1204
    %1206 = vmatprep.subr.mxu0 0.0
    %v1207 = vand.u32 %v572, 4294901760
    %1208 = vmatpush1.msra.mxu0 %v1207
    %1209 = vmatprep.subr.mxu0 0.0
    %v1210 = vand.u32 %v573, 4294901760
    %1211 = vmatpush1.msra.mxu0 %v1210
    %1212 = vmatprep.subr.mxu0 0.0
    %v1213 = vand.u32 %v574, 4294901760
    %1214 = vmatpush1.msra.mxu0 %v1213
    %1215 = vmatprep.subr.mxu0 0.0
    %v1216 = vand.u32 %v575, 4294901760
    %1217 = vmatpush1.msra.mxu0 %v1216
    %1218 = vmatprep.subr.mxu0 0.0
    %v1219 = vand.u32 %v576, 4294901760
    %1220 = vmatpush1.msra.mxu0 %v1219
    %1221 = vmatprep.subr.mxu0 0.0
    %v1222 = vand.u32 %v577, 4294901760
    %1223 = vmatpush1.msra.mxu0 %v1222
    %1224 = vmatprep.subr.mxu0 0.0
    %1225 = vmatpush1.msra.mxu0 0.0
    %1226 = vmatprep.subr.mxu0 0.0
    %1227 = vmatpush1.msra.mxu0 0.0
    %1228 = vmatprep.subr.mxu0 0.0
    %1229 = vmatpush1.msra.mxu0 0.0
    %1230 = vmatprep.subr.mxu0 0.0
    %1231 = vmatpush1.msra.mxu0 0.0
    %1232 = vmatprep.subr.mxu0 0.0
    %1233 = vmatpush1.msra.mxu0 0.0
    %1234 = vmatprep.subr.mxu0 0.0
    %1235 = vmatpush1.msra.mxu0 0.0
    %1236 = vmatprep.subr.mxu0 0.0
    %1237 = vmatpush1.msra.mxu0 0.0
    %1238 = vmatprep.subr.mxu0 0.0
    %1239 = vmatpush1.msra.mxu0 0.0
    %1240 = vmatprep.subr.mxu0 0.0
    %1241 = vmatpush1.msra.mxu0 0.0
    %1242 = vmatprep.subr.mxu0 0.0
    %1243 = vmatpush1.msra.mxu0 0.0
    %1244 = vmatprep.subr.mxu0 0.0
    %1245 = vmatpush1.msra.mxu0 0.0
    %1246 = vmatprep.subr.mxu0 0.0
    %1247 = vmatpush1.msra.mxu0 0.0
    %1248 = vmatprep.subr.mxu0 0.0
    %1249 = vmatpush1.msra.mxu0 0.0
    %1250 = vmatprep.subr.mxu0 0.0
    %1251 = vmatpush1.msra.mxu0 0.0
    %1252 = vmatprep.subr.mxu0 0.0
    %1253 = vmatpush1.msra.mxu0 0.0
    %1254 = vmatprep.subr.mxu0 0.0
    %1255 = vmatpush1.msra.mxu0 0.0
    %1256 = vmatprep.mubr.f32.mxu0 0.0
    %v1257 = vand.u32 %v560, 4294901760
    %1258 = vmatmul.mubr.f32.gmra.mrb[0].mxu0 %v1257
    %v1259 = vpop.f32.mrb[0].mxu0
    %v1260 = vadd.f32 %v1167, %v1259
    %v1261 = vpop.f32.mrb[0].mxu0
    %1262 = vmatprep.mubr.f32.mxu0 0.0
    %v1263 = vand.u32 %v561, 4294901760
    %1264 = vmatmul.mubr.f32.gmra.mrb[0].mxu0 %v1263
    %v1265 = vpop.f32.mrb[0].mxu0
    %v1266 = vadd.f32 %v1173, %v1265
    %v1267 = vpop.f32.mrb[0].mxu0
    %1268 = vdwg.mxu0
    %v1269 = vmax.f32 %v1260, 0.0
    %v1270 = vmax.f32 %v1266, 0.0
    %v1271 = vld [vmem:[%s5] sm:$0xff]
    %v1272 = vld [vmem:[%s5 + $0x8] sm:$0xff]
    %v1273 = vld [vmem:[%s5 + $0x10] sm:$0xff]
    %v1274 = vld [vmem:[%s5 + $0x18] sm:$0xff]
    %v1275 = vld [vmem:[%s5 + $0x20] sm:$0xff]
    %v1276 = vld [vmem:[%s5 + $0x28] sm:$0xff]
    %v1277 = vld [vmem:[%s5 + $0x30] sm:$0xff]
    %v1278 = vld [vmem:[%s5 + $0x38] sm:$0xff]
    %v1279 = vld [vmem:[%s5 + $0x40] sm:$0xff]
    %v1280 = vld [vmem:[%s5 + $0x48] sm:$0xff]
    %v1281 = vld [vmem:[%s5 + $0x50] sm:$0xff]
    %v1282 = vld [vmem:[%s5 + $0x58] sm:$0xff]
    %v1283 = vld [vmem:[%s5 + $0x60] sm:$0xff]
    %v1284 = vld [vmem:[%s5 + $0x68] sm:$0xff]
    %v1285 = vld [vmem:[%s5 + $0x70] sm:$0xff]
    %v1286 = vld [vmem:[%s5 + $0x78] sm:$0xff]
    %v1287 = vld [vmem:[%s6] sm:$0x1]
    %v1289 = vlaneseq
    %v1290 = vshrl.u32 %v1289, 7
    %v1291 = vsub.s32 0, %v1290
    %v1292 = vrot.slane %v1287, %v1291
    %1294 = vmatprep.subr.mxu0 0.0
    %v1295 = vand.u32 %v1271, 4294901760
    %1296 = vmatpush1.msra.mxu0 %v1295
    %1297 = vmatprep.subr.mxu0 0.0
    %v1298 = vand.u32 %v1272, 4294901760
    %1299 = vmatpush1.msra.mxu0 %v1298
    %1300 = vmatprep.subr.mxu0 0.0
    %v1301 = vand.u32 %v1273, 4294901760
    %1302 = vmatpush1.msra.mxu0 %v1301
    %1303 = vmatprep.subr.mxu0 0.0
    %v1304 = vand.u32 %v1274, 4294901760
    %1305 = vmatpush1.msra.mxu0 %v1304
    %1306 = vmatprep.subr.mxu0 0.0
    %v1307 = vand.u32 %v1275, 4294901760
    %1308 = vmatpush1.msra.mxu0 %v1307
    %1309 = vmatprep.subr.mxu0 0.0
    %v1310 = vand.u32 %v1276, 4294901760
    %1311 = vmatpush1.msra.mxu0 %v1310
    %1312 = vmatprep.subr.mxu0 0.0
    %v1313 = vand.u32 %v1277, 4294901760
    %1314 = vmatpush1.msra.mxu0 %v1313
    %1315 = vmatprep.subr.mxu0 0.0
    %v1316 = vand.u32 %v1278, 4294901760
    %1317 = vmatpush1.msra.mxu0 %v1316
    %1318 = vmatprep.subr.mxu0 0.0
    %v1319 = vand.u32 %v1279, 4294901760
    %1320 = vmatpush1.msra.mxu0 %v1319
    %1321 = vmatprep.subr.mxu0 0.0
    %v1322 = vand.u32 %v1280, 4294901760
    %1323 = vmatpush1.msra.mxu0 %v1322
    %1324 = vmatprep.subr.mxu0 0.0
    %v1325 = vand.u32 %v1281, 4294901760
    %1326 = vmatpush1.msra.mxu0 %v1325
    %1327 = vmatprep.subr.mxu0 0.0
    %v1328 = vand.u32 %v1282, 4294901760
    %1329 = vmatpush1.msra.mxu0 %v1328
    %1330 = vmatprep.subr.mxu0 0.0
    %v1331 = vand.u32 %v1283, 4294901760
    %1332 = vmatpush1.msra.mxu0 %v1331
    %1333 = vmatprep.subr.mxu0 0.0
    %v1334 = vand.u32 %v1284, 4294901760
    %1335 = vmatpush1.msra.mxu0 %v1334
    %1336 = vmatprep.subr.mxu0 0.0
    %v1337 = vand.u32 %v1285, 4294901760
    %1338 = vmatpush1.msra.mxu0 %v1337
    %1339 = vmatprep.subr.mxu0 0.0
    %v1340 = vand.u32 %v1286, 4294901760
    %1341 = vmatpush1.msra.mxu0 %v1340
    %1342 = vmatprep.subr.mxu0 0.0
    %1343 = vmatpush1.msra.mxu0 0.0
    %1344 = vmatprep.subr.mxu0 0.0
    %1345 = vmatpush1.msra.mxu0 0.0
    %1346 = vmatprep.subr.mxu0 0.0
    %1347 = vmatpush1.msra.mxu0 0.0
    %1348 = vmatprep.subr.mxu0 0.0
    %1349 = vmatpush1.msra.mxu0 0.0
    %1350 = vmatprep.subr.mxu0 0.0
    %1351 = vmatpush1.msra.mxu0 0.0
    %1352 = vmatprep.subr.mxu0 0.0
    %1353 = vmatpush1.msra.mxu0 0.0
    %1354 = vmatprep.subr.mxu0 0.0
    %1355 = vmatpush1.msra.mxu0 0.0
    %1356 = vmatprep.subr.mxu0 0.0
    %1357 = vmatpush1.msra.mxu0 0.0
    %1358 = vmatprep.subr.mxu0 0.0
    %1359 = vmatpush1.msra.mxu0 0.0
    %1360 = vmatprep.subr.mxu0 0.0
    %1361 = vmatpush1.msra.mxu0 0.0
    %1362 = vmatprep.subr.mxu0 0.0
    %1363 = vmatpush1.msra.mxu0 0.0
    %1364 = vmatprep.subr.mxu0 0.0
    %1365 = vmatpush1.msra.mxu0 0.0
    %1366 = vmatprep.subr.mxu0 0.0
    %1367 = vmatpush1.msra.mxu0 0.0
    %1368 = vmatprep.subr.mxu0 0.0
    %1369 = vmatpush1.msra.mxu0 0.0
    %1370 = vmatprep.subr.mxu0 0.0
    %1371 = vmatpush1.msra.mxu0 0.0
    %1372 = vmatprep.subr.mxu0 0.0
    %1373 = vmatpush1.msra.mxu0 0.0
    %1374 = vmatprep.mubr.f32.mxu0 0.0
    %v1375 = vand.u32 %v1269, 4294901760
    %v1376 = vsub.f32 %v1269, %v1375
    %v1377 = vand.u32 %v1376, 4294901760
    %v1378 = vsub.f32 %v1376, %v1377
    %v1379 = vand.u32 %v1378, 4294901760
    %1380 = vmatmul.mubr.f32.gmra.mrb[0].mxu0 %v1379
    %v1381 = vpop.f32.mrb[0].mxu0
    %v1382 = vadd.f32 %v1292, %v1381
    %v1383 = vpop.f32.mrb[0].mxu0
    %1384 = vmatprep.mubr.f32.mxu0 0.0
    %v1385 = vand.u32 %v1270, 4294901760
    %v1386 = vsub.f32 %v1270, %v1385
    %v1387 = vand.u32 %v1386, 4294901760
    %v1388 = vsub.f32 %v1386, %v1387
    %v1389 = vand.u32 %v1388, 4294901760
    %1390 = vmatmul.mubr.f32.gmra.mrb[0].mxu0 %v1389
    %v1391 = vpop.f32.mrb[0].mxu0
    %v1392 = vadd.f32 %v1292, %v1391
    %v1393 = vpop.f32.mrb[0].mxu0
    %1394 = vdwg.mxu0
    %1395 = vmatprep.subr.mxu0 0.0
    %v1396 = vand.u32 %v1271, 4294901760
    %v1397 = vsub.f32 %v1271, %v1396
    %v1398 = vand.u32 %v1397, 4294901760
    %v1399 = vsub.f32 %v1397, %v1398
    %v1400 = vand.u32 %v1399, 4294901760
    %1401 = vmatpush1.msra.mxu0 %v1400
    %1402 = vmatprep.subr.mxu0 0.0
    %v1403 = vand.u32 %v1272, 4294901760
    %v1404 = vsub.f32 %v1272, %v1403
    %v1405 = vand.u32 %v1404, 4294901760
    %v1406 = vsub.f32 %v1404, %v1405
    %v1407 = vand.u32 %v1406, 4294901760
    %1408 = vmatpush1.msra.mxu0 %v1407
    %1409 = vmatprep.subr.mxu0 0.0
    %v1410 = vand.u32 %v1273, 4294901760
    %v1411 = vsub.f32 %v1273, %v1410
    %v1412 = vand.u32 %v1411, 4294901760
    %v1413 = vsub.f32 %v1411, %v1412
    %v1414 = vand.u32 %v1413, 4294901760
    %1415 = vmatpush1.msra.mxu0 %v1414
    %1416 = vmatprep.subr.mxu0 0.0
    %v1417 = vand.u32 %v1274, 4294901760
    %v1418 = vsub.f32 %v1274, %v1417
    %v1419 = vand.u32 %v1418, 4294901760
    %v1420 = vsub.f32 %v1418, %v1419
    %v1421 = vand.u32 %v1420, 4294901760
    %1422 = vmatpush1.msra.mxu0 %v1421
    %1423 = vmatprep.subr.mxu0 0.0
    %v1424 = vand.u32 %v1275, 4294901760
    %v1425 = vsub.f32 %v1275, %v1424
    %v1426 = vand.u32 %v1425, 4294901760
    %v1427 = vsub.f32 %v1425, %v1426
    %v1428 = vand.u32 %v1427, 4294901760
    %1429 = vmatpush1.msra.mxu0 %v1428
    %1430 = vmatprep.subr.mxu0 0.0
    %v1431 = vand.u32 %v1276, 4294901760
    %v1432 = vsub.f32 %v1276, %v1431
    %v1433 = vand.u32 %v1432, 4294901760
    %v1434 = vsub.f32 %v1432, %v1433
    %v1435 = vand.u32 %v1434, 4294901760
    %1436 = vmatpush1.msra.mxu0 %v1435
    %1437 = vmatprep.subr.mxu0 0.0
    %v1438 = vand.u32 %v1277, 4294901760
    %v1439 = vsub.f32 %v1277, %v1438
    %v1440 = vand.u32 %v1439, 4294901760
    %v1441 = vsub.f32 %v1439, %v1440
    %v1442 = vand.u32 %v1441, 4294901760
    %1443 = vmatpush1.msra.mxu0 %v1442
    %1444 = vmatprep.subr.mxu0 0.0
    %v1445 = vand.u32 %v1278, 4294901760
    %v1446 = vsub.f32 %v1278, %v1445
    %v1447 = vand.u32 %v1446, 4294901760
    %v1448 = vsub.f32 %v1446, %v1447
    %v1449 = vand.u32 %v1448, 4294901760
    %1450 = vmatpush1.msra.mxu0 %v1449
    %1451 = vmatprep.subr.mxu0 0.0
    %v1452 = vand.u32 %v1279, 4294901760
    %v1453 = vsub.f32 %v1279, %v1452
    %v1454 = vand.u32 %v1453, 4294901760
    %v1455 = vsub.f32 %v1453, %v1454
    %v1456 = vand.u32 %v1455, 4294901760
    %1457 = vmatpush1.msra.mxu0 %v1456
    %1458 = vmatprep.subr.mxu0 0.0
    %v1459 = vand.u32 %v1280, 4294901760
    %v1460 = vsub.f32 %v1280, %v1459
    %v1461 = vand.u32 %v1460, 4294901760
    %v1462 = vsub.f32 %v1460, %v1461
    %v1463 = vand.u32 %v1462, 4294901760
    %1464 = vmatpush1.msra.mxu0 %v1463
    %1465 = vmatprep.subr.mxu0 0.0
    %v1466 = vand.u32 %v1281, 4294901760
    %v1467 = vsub.f32 %v1281, %v1466
    %v1468 = vand.u32 %v1467, 4294901760
    %v1469 = vsub.f32 %v1467, %v1468
    %v1470 = vand.u32 %v1469, 4294901760
    %1471 = vmatpush1.msra.mxu0 %v1470
    %1472 = vmatprep.subr.mxu0 0.0
    %v1473 = vand.u32 %v1282, 4294901760
    %v1474 = vsub.f32 %v1282, %v1473
    %v1475 = vand.u32 %v1474, 4294901760
    %v1476 = vsub.f32 %v1474, %v1475
    %v1477 = vand.u32 %v1476, 4294901760
    %1478 = vmatpush1.msra.mxu0 %v1477
    %1479 = vmatprep.subr.mxu0 0.0
    %v1480 = vand.u32 %v1283, 4294901760
    %v1481 = vsub.f32 %v1283, %v1480
    %v1482 = vand.u32 %v1481, 4294901760
    %v1483 = vsub.f32 %v1481, %v1482
    %v1484 = vand.u32 %v1483, 4294901760
    %1485 = vmatpush1.msra.mxu0 %v1484
    %1486 = vmatprep.subr.mxu0 0.0
    %v1487 = vand.u32 %v1284, 4294901760
    %v1488 = vsub.f32 %v1284, %v1487
    %v1489 = vand.u32 %v1488, 4294901760
    %v1490 = vsub.f32 %v1488, %v1489
    %v1491 = vand.u32 %v1490, 4294901760
    %1492 = vmatpush1.msra.mxu0 %v1491
    %1493 = vmatprep.subr.mxu0 0.0
    %v1494 = vand.u32 %v1285, 4294901760
    %v1495 = vsub.f32 %v1285, %v1494
    %v1496 = vand.u32 %v1495, 4294901760
    %v1497 = vsub.f32 %v1495, %v1496
    %v1498 = vand.u32 %v1497, 4294901760
    %1499 = vmatpush1.msra.mxu0 %v1498
    %1500 = vmatprep.subr.mxu0 0.0
    %v1501 = vand.u32 %v1286, 4294901760
    %v1502 = vsub.f32 %v1286, %v1501
    %v1503 = vand.u32 %v1502, 4294901760
    %v1504 = vsub.f32 %v1502, %v1503
    %v1505 = vand.u32 %v1504, 4294901760
    %1506 = vmatpush1.msra.mxu0 %v1505
    %1507 = vmatprep.subr.mxu0 0.0
    %1508 = vmatpush1.msra.mxu0 0.0
    %1509 = vmatprep.subr.mxu0 0.0
    %1510 = vmatpush1.msra.mxu0 0.0
    %1511 = vmatprep.subr.mxu0 0.0
    %1512 = vmatpush1.msra.mxu0 0.0
    %1513 = vmatprep.subr.mxu0 0.0
    %1514 = vmatpush1.msra.mxu0 0.0
    %1515 = vmatprep.subr.mxu0 0.0
    %1516 = vmatpush1.msra.mxu0 0.0
    %1517 = vmatprep.subr.mxu0 0.0
    %1518 = vmatpush1.msra.mxu0 0.0
    %1519 = vmatprep.subr.mxu0 0.0
    %1520 = vmatpush1.msra.mxu0 0.0
    %1521 = vmatprep.subr.mxu0 0.0
    %1522 = vmatpush1.msra.mxu0 0.0
    %1523 = vmatprep.subr.mxu0 0.0
    %1524 = vmatpush1.msra.mxu0 0.0
    %1525 = vmatprep.subr.mxu0 0.0
    %1526 = vmatpush1.msra.mxu0 0.0
    %1527 = vmatprep.subr.mxu0 0.0
    %1528 = vmatpush1.msra.mxu0 0.0
    %1529 = vmatprep.subr.mxu0 0.0
    %1530 = vmatpush1.msra.mxu0 0.0
    %1531 = vmatprep.subr.mxu0 0.0
    %1532 = vmatpush1.msra.mxu0 0.0
    %1533 = vmatprep.subr.mxu0 0.0
    %1534 = vmatpush1.msra.mxu0 0.0
    %1535 = vmatprep.subr.mxu0 0.0
    %1536 = vmatpush1.msra.mxu0 0.0
    %1537 = vmatprep.subr.mxu0 0.0
    %1538 = vmatpush1.msra.mxu0 0.0
    %1539 = vmatprep.mubr.f32.mxu0 0.0
    %v1540 = vand.u32 %v1269, 4294901760
    %1541 = vmatmul.mubr.f32.gmra.mrb[0].mxu0 %v1540
    %v1542 = vpop.f32.mrb[0].mxu0
    %v1543 = vadd.f32 %v1382, %v1542
    %v1544 = vpop.f32.mrb[0].mxu0
    %1545 = vmatprep.mubr.f32.mxu0 0.0
    %v1546 = vand.u32 %v1270, 4294901760
    %1547 = vmatmul.mubr.f32.gmra.mrb[0].mxu0 %v1546
    %v1548 = vpop.f32.mrb[0].mxu0
    %v1549 = vadd.f32 %v1392, %v1548
    %v1550 = vpop.f32.mrb[0].mxu0
    %1551 = vdwg.mxu0
    %1552 = vmatprep.subr.mxu0 0.0
    %v1553 = vand.u32 %v1271, 4294901760
    %v1554 = vsub.f32 %v1271, %v1553
    %1555 = vmatpush1.msra.mxu0 %v1554
    %1556 = vmatprep.subr.mxu0 0.0
    %v1557 = vand.u32 %v1272, 4294901760
    %v1558 = vsub.f32 %v1272, %v1557
    %1559 = vmatpush1.msra.mxu0 %v1558
    %1560 = vmatprep.subr.mxu0 0.0
    %v1561 = vand.u32 %v1273, 4294901760
    %v1562 = vsub.f32 %v1273, %v1561
    %1563 = vmatpush1.msra.mxu0 %v1562
    %1564 = vmatprep.subr.mxu0 0.0
    %v1565 = vand.u32 %v1274, 4294901760
    %v1566 = vsub.f32 %v1274, %v1565
    %1567 = vmatpush1.msra.mxu0 %v1566
    %1568 = vmatprep.subr.mxu0 0.0
    %v1569 = vand.u32 %v1275, 4294901760
    %v1570 = vsub.f32 %v1275, %v1569
    %1571 = vmatpush1.msra.mxu0 %v1570
    %1572 = vmatprep.subr.mxu0 0.0
    %v1573 = vand.u32 %v1276, 4294901760
    %v1574 = vsub.f32 %v1276, %v1573
    %1575 = vmatpush1.msra.mxu0 %v1574
    %1576 = vmatprep.subr.mxu0 0.0
    %v1577 = vand.u32 %v1277, 4294901760
    %v1578 = vsub.f32 %v1277, %v1577
    %1579 = vmatpush1.msra.mxu0 %v1578
    %1580 = vmatprep.subr.mxu0 0.0
    %v1581 = vand.u32 %v1278, 4294901760
    %v1582 = vsub.f32 %v1278, %v1581
    %1583 = vmatpush1.msra.mxu0 %v1582
    %1584 = vmatprep.subr.mxu0 0.0
    %v1585 = vand.u32 %v1279, 4294901760
    %v1586 = vsub.f32 %v1279, %v1585
    %1587 = vmatpush1.msra.mxu0 %v1586
    %1588 = vmatprep.subr.mxu0 0.0
    %v1589 = vand.u32 %v1280, 4294901760
    %v1590 = vsub.f32 %v1280, %v1589
    %1591 = vmatpush1.msra.mxu0 %v1590
    %1592 = vmatprep.subr.mxu0 0.0
    %v1593 = vand.u32 %v1281, 4294901760
    %v1594 = vsub.f32 %v1281, %v1593
    %1595 = vmatpush1.msra.mxu0 %v1594
    %1596 = vmatprep.subr.mxu0 0.0
    %v1597 = vand.u32 %v1282, 4294901760
    %v1598 = vsub.f32 %v1282, %v1597
    %1599 = vmatpush1.msra.mxu0 %v1598
    %1600 = vmatprep.subr.mxu0 0.0
    %v1601 = vand.u32 %v1283, 4294901760
    %v1602 = vsub.f32 %v1283, %v1601
    %1603 = vmatpush1.msra.mxu0 %v1602
    %1604 = vmatprep.subr.mxu0 0.0
    %v1605 = vand.u32 %v1284, 4294901760
    %v1606 = vsub.f32 %v1284, %v1605
    %1607 = vmatpush1.msra.mxu0 %v1606
    %1608 = vmatprep.subr.mxu0 0.0
    %v1609 = vand.u32 %v1285, 4294901760
    %v1610 = vsub.f32 %v1285, %v1609
    %1611 = vmatpush1.msra.mxu0 %v1610
    %1612 = vmatprep.subr.mxu0 0.0
    %v1613 = vand.u32 %v1286, 4294901760
    %v1614 = vsub.f32 %v1286, %v1613
    %1615 = vmatpush1.msra.mxu0 %v1614
    %1616 = vmatprep.subr.mxu0 0.0
    %1617 = vmatpush1.msra.mxu0 0.0
    %1618 = vmatprep.subr.mxu0 0.0
    %1619 = vmatpush1.msra.mxu0 0.0
    %1620 = vmatprep.subr.mxu0 0.0
    %1621 = vmatpush1.msra.mxu0 0.0
    %1622 = vmatprep.subr.mxu0 0.0
    %1623 = vmatpush1.msra.mxu0 0.0
    %1624 = vmatprep.subr.mxu0 0.0
    %1625 = vmatpush1.msra.mxu0 0.0
    %1626 = vmatprep.subr.mxu0 0.0
    %1627 = vmatpush1.msra.mxu0 0.0
    %1628 = vmatprep.subr.mxu0 0.0
    %1629 = vmatpush1.msra.mxu0 0.0
    %1630 = vmatprep.subr.mxu0 0.0
    %1631 = vmatpush1.msra.mxu0 0.0
    %1632 = vmatprep.subr.mxu0 0.0
    %1633 = vmatpush1.msra.mxu0 0.0
    %1634 = vmatprep.subr.mxu0 0.0
    %1635 = vmatpush1.msra.mxu0 0.0
    %1636 = vmatprep.subr.mxu0 0.0
    %1637 = vmatpush1.msra.mxu0 0.0
    %1638 = vmatprep.subr.mxu0 0.0
    %1639 = vmatpush1.msra.mxu0 0.0
    %1640 = vmatprep.subr.mxu0 0.0
    %1641 = vmatpush1.msra.mxu0 0.0
    %1642 = vmatprep.subr.mxu0 0.0
    %1643 = vmatpush1.msra.mxu0 0.0
    %1644 = vmatprep.subr.mxu0 0.0
    %1645 = vmatpush1.msra.mxu0 0.0
    %1646 = vmatprep.subr.mxu0 0.0
    %1647 = vmatpush1.msra.mxu0 0.0
    %1648 = vmatprep.mubr.f32.mxu0 0.0
    %v1649 = vand.u32 %v1269, 4294901760
    %v1650 = vsub.f32 %v1269, %v1649
    %1651 = vmatmul.mubr.f32.gmra.mrb[0].mxu0 %v1650
    %v1652 = vpop.f32.mrb[0].mxu0
    %v1653 = vadd.f32 %v1543, %v1652
    %v1654 = vpop.f32.mrb[0].mxu0
    %1655 = vmatprep.mubr.f32.mxu0 0.0
    %v1656 = vand.u32 %v1270, 4294901760
    %v1657 = vsub.f32 %v1270, %v1656
    %1658 = vmatmul.mubr.f32.gmra.mrb[0].mxu0 %v1657
    %v1659 = vpop.f32.mrb[0].mxu0
    %v1660 = vadd.f32 %v1549, %v1659
    %v1661 = vpop.f32.mrb[0].mxu0
    %1662 = vdwg.mxu0
    %1663 = vmatprep.subr.mxu0 0.0
    %v1664 = vand.u32 %v1271, 4294901760
    %1665 = vmatpush1.msra.mxu0 %v1664
    %1666 = vmatprep.subr.mxu0 0.0
    %v1667 = vand.u32 %v1272, 4294901760
    %1668 = vmatpush1.msra.mxu0 %v1667
    %1669 = vmatprep.subr.mxu0 0.0
    %v1670 = vand.u32 %v1273, 4294901760
    %1671 = vmatpush1.msra.mxu0 %v1670
    %1672 = vmatprep.subr.mxu0 0.0
    %v1673 = vand.u32 %v1274, 4294901760
    %1674 = vmatpush1.msra.mxu0 %v1673
    %1675 = vmatprep.subr.mxu0 0.0
    %v1676 = vand.u32 %v1275, 4294901760
    %1677 = vmatpush1.msra.mxu0 %v1676
    %1678 = vmatprep.subr.mxu0 0.0
    %v1679 = vand.u32 %v1276, 4294901760
    %1680 = vmatpush1.msra.mxu0 %v1679
    %1681 = vmatprep.subr.mxu0 0.0
    %v1682 = vand.u32 %v1277, 4294901760
    %1683 = vmatpush1.msra.mxu0 %v1682
    %1684 = vmatprep.subr.mxu0 0.0
    %v1685 = vand.u32 %v1278, 4294901760
    %1686 = vmatpush1.msra.mxu0 %v1685
    %1687 = vmatprep.subr.mxu0 0.0
    %v1688 = vand.u32 %v1279, 4294901760
    %1689 = vmatpush1.msra.mxu0 %v1688
    %1690 = vmatprep.subr.mxu0 0.0
    %v1691 = vand.u32 %v1280, 4294901760
    %1692 = vmatpush1.msra.mxu0 %v1691
    %1693 = vmatprep.subr.mxu0 0.0
    %v1694 = vand.u32 %v1281, 4294901760
    %1695 = vmatpush1.msra.mxu0 %v1694
    %1696 = vmatprep.subr.mxu0 0.0
    %v1697 = vand.u32 %v1282, 4294901760
    %1698 = vmatpush1.msra.mxu0 %v1697
    %1699 = vmatprep.subr.mxu0 0.0
    %v1700 = vand.u32 %v1283, 4294901760
    %1701 = vmatpush1.msra.mxu0 %v1700
    %1702 = vmatprep.subr.mxu0 0.0
    %v1703 = vand.u32 %v1284, 4294901760
    %1704 = vmatpush1.msra.mxu0 %v1703
    %1705 = vmatprep.subr.mxu0 0.0
    %v1706 = vand.u32 %v1285, 4294901760
    %1707 = vmatpush1.msra.mxu0 %v1706
    %1708 = vmatprep.subr.mxu0 0.0
    %v1709 = vand.u32 %v1286, 4294901760
    %1710 = vmatpush1.msra.mxu0 %v1709
    %1711 = vmatprep.subr.mxu0 0.0
    %1712 = vmatpush1.msra.mxu0 0.0
    %1713 = vmatprep.subr.mxu0 0.0
    %1714 = vmatpush1.msra.mxu0 0.0
    %1715 = vmatprep.subr.mxu0 0.0
    %1716 = vmatpush1.msra.mxu0 0.0
    %1717 = vmatprep.subr.mxu0 0.0
    %1718 = vmatpush1.msra.mxu0 0.0
    %1719 = vmatprep.subr.mxu0 0.0
    %1720 = vmatpush1.msra.mxu0 0.0
    %1721 = vmatprep.subr.mxu0 0.0
    %1722 = vmatpush1.msra.mxu0 0.0
    %1723 = vmatprep.subr.mxu0 0.0
    %1724 = vmatpush1.msra.mxu0 0.0
    %1725 = vmatprep.subr.mxu0 0.0
    %1726 = vmatpush1.msra.mxu0 0.0
    %1727 = vmatprep.subr.mxu0 0.0
    %1728 = vmatpush1.msra.mxu0 0.0
    %1729 = vmatprep.subr.mxu0 0.0
    %1730 = vmatpush1.msra.mxu0 0.0
    %1731 = vmatprep.subr.mxu0 0.0
    %1732 = vmatpush1.msra.mxu0 0.0
    %1733 = vmatprep.subr.mxu0 0.0
    %1734 = vmatpush1.msra.mxu0 0.0
    %1735 = vmatprep.subr.mxu0 0.0
    %1736 = vmatpush1.msra.mxu0 0.0
    %1737 = vmatprep.subr.mxu0 0.0
    %1738 = vmatpush1.msra.mxu0 0.0
    %1739 = vmatprep.subr.mxu0 0.0
    %1740 = vmatpush1.msra.mxu0 0.0
    %1741 = vmatprep.subr.mxu0 0.0
    %1742 = vmatpush1.msra.mxu0 0.0
    %1743 = vmatprep.mubr.f32.mxu0 0.0
    %v1744 = vand.u32 %v1269, 4294901760
    %v1745 = vsub.f32 %v1269, %v1744
    %v1746 = vand.u32 %v1745, 4294901760
    %1747 = vmatmul.mubr.f32.gmra.mrb[0].mxu0 %v1746
    %v1748 = vpop.f32.mrb[0].mxu0
    %v1749 = vadd.f32 %v1653, %v1748
    %v1750 = vpop.f32.mrb[0].mxu0
    %1751 = vmatprep.mubr.f32.mxu0 0.0
    %v1752 = vand.u32 %v1270, 4294901760
    %v1753 = vsub.f32 %v1270, %v1752
    %v1754 = vand.u32 %v1753, 4294901760
    %1755 = vmatmul.mubr.f32.gmra.mrb[0].mxu0 %v1754
    %v1756 = vpop.f32.mrb[0].mxu0
    %v1757 = vadd.f32 %v1660, %v1756
    %v1758 = vpop.f32.mrb[0].mxu0
    %1759 = vdwg.mxu0
    %1760 = vmatprep.subr.mxu0 0.0
    %v1761 = vand.u32 %v1271, 4294901760
    %v1762 = vsub.f32 %v1271, %v1761
    %v1763 = vand.u32 %v1762, 4294901760
    %1764 = vmatpush1.msra.mxu0 %v1763
    %1765 = vmatprep.subr.mxu0 0.0
    %v1766 = vand.u32 %v1272, 4294901760
    %v1767 = vsub.f32 %v1272, %v1766
    %v1768 = vand.u32 %v1767, 4294901760
    %1769 = vmatpush1.msra.mxu0 %v1768
    %1770 = vmatprep.subr.mxu0 0.0
    %v1771 = vand.u32 %v1273, 4294901760
    %v1772 = vsub.f32 %v1273, %v1771
    %v1773 = vand.u32 %v1772, 4294901760
    %1774 = vmatpush1.msra.mxu0 %v1773
    %1775 = vmatprep.subr.mxu0 0.0
    %v1776 = vand.u32 %v1274, 4294901760
    %v1777 = vsub.f32 %v1274, %v1776
    %v1778 = vand.u32 %v1777, 4294901760
    %1779 = vmatpush1.msra.mxu0 %v1778
    %1780 = vmatprep.subr.mxu0 0.0
    %v1781 = vand.u32 %v1275, 4294901760
    %v1782 = vsub.f32 %v1275, %v1781
    %v1783 = vand.u32 %v1782, 4294901760
    %1784 = vmatpush1.msra.mxu0 %v1783
    %1785 = vmatprep.subr.mxu0 0.0
    %v1786 = vand.u32 %v1276, 4294901760
    %v1787 = vsub.f32 %v1276, %v1786
    %v1788 = vand.u32 %v1787, 4294901760
    %1789 = vmatpush1.msra.mxu0 %v1788
    %1790 = vmatprep.subr.mxu0 0.0
    %v1791 = vand.u32 %v1277, 4294901760
    %v1792 = vsub.f32 %v1277, %v1791
    %v1793 = vand.u32 %v1792, 4294901760
    %1794 = vmatpush1.msra.mxu0 %v1793
    %1795 = vmatprep.subr.mxu0 0.0
    %v1796 = vand.u32 %v1278, 4294901760
    %v1797 = vsub.f32 %v1278, %v1796
    %v1798 = vand.u32 %v1797, 4294901760
    %1799 = vmatpush1.msra.mxu0 %v1798
    %1800 = vmatprep.subr.mxu0 0.0
    %v1801 = vand.u32 %v1279, 4294901760
    %v1802 = vsub.f32 %v1279, %v1801
    %v1803 = vand.u32 %v1802, 4294901760
    %1804 = vmatpush1.msra.mxu0 %v1803
    %1805 = vmatprep.subr.mxu0 0.0
    %v1806 = vand.u32 %v1280, 4294901760
    %v1807 = vsub.f32 %v1280, %v1806
    %v1808 = vand.u32 %v1807, 4294901760
    %1809 = vmatpush1.msra.mxu0 %v1808
    %1810 = vmatprep.subr.mxu0 0.0
    %v1811 = vand.u32 %v1281, 4294901760
    %v1812 = vsub.f32 %v1281, %v1811
    %v1813 = vand.u32 %v1812, 4294901760
    %1814 = vmatpush1.msra.mxu0 %v1813
    %1815 = vmatprep.subr.mxu0 0.0
    %v1816 = vand.u32 %v1282, 4294901760
    %v1817 = vsub.f32 %v1282, %v1816
    %v1818 = vand.u32 %v1817, 4294901760
    %1819 = vmatpush1.msra.mxu0 %v1818
    %1820 = vmatprep.subr.mxu0 0.0
    %v1821 = vand.u32 %v1283, 4294901760
    %v1822 = vsub.f32 %v1283, %v1821
    %v1823 = vand.u32 %v1822, 4294901760
    %1824 = vmatpush1.msra.mxu0 %v1823
    %1825 = vmatprep.subr.mxu0 0.0
    %v1826 = vand.u32 %v1284, 4294901760
    %v1827 = vsub.f32 %v1284, %v1826
    %v1828 = vand.u32 %v1827, 4294901760
    %1829 = vmatpush1.msra.mxu0 %v1828
    %1830 = vmatprep.subr.mxu0 0.0
    %v1831 = vand.u32 %v1285, 4294901760
    %v1832 = vsub.f32 %v1285, %v1831
    %v1833 = vand.u32 %v1832, 4294901760
    %1834 = vmatpush1.msra.mxu0 %v1833
    %1835 = vmatprep.subr.mxu0 0.0
    %v1836 = vand.u32 %v1286, 4294901760
    %v1837 = vsub.f32 %v1286, %v1836
    %v1838 = vand.u32 %v1837, 4294901760
    %1839 = vmatpush1.msra.mxu0 %v1838
    %1840 = vmatprep.subr.mxu0 0.0
    %1841 = vmatpush1.msra.mxu0 0.0
    %1842 = vmatprep.subr.mxu0 0.0
    %1843 = vmatpush1.msra.mxu0 0.0
    %1844 = vmatprep.subr.mxu0 0.0
    %1845 = vmatpush1.msra.mxu0 0.0
    %1846 = vmatprep.subr.mxu0 0.0
    %1847 = vmatpush1.msra.mxu0 0.0
    %1848 = vmatprep.subr.mxu0 0.0
    %1849 = vmatpush1.msra.mxu0 0.0
    %1850 = vmatprep.subr.mxu0 0.0
    %1851 = vmatpush1.msra.mxu0 0.0
    %1852 = vmatprep.subr.mxu0 0.0
    %1853 = vmatpush1.msra.mxu0 0.0
    %1854 = vmatprep.subr.mxu0 0.0
    %1855 = vmatpush1.msra.mxu0 0.0
    %1856 = vmatprep.subr.mxu0 0.0
    %1857 = vmatpush1.msra.mxu0 0.0
    %1858 = vmatprep.subr.mxu0 0.0
    %1859 = vmatpush1.msra.mxu0 0.0
    %1860 = vmatprep.subr.mxu0 0.0
    %1861 = vmatpush1.msra.mxu0 0.0
    %1862 = vmatprep.subr.mxu0 0.0
    %1863 = vmatpush1.msra.mxu0 0.0
    %1864 = vmatprep.subr.mxu0 0.0
    %1865 = vmatpush1.msra.mxu0 0.0
    %1866 = vmatprep.subr.mxu0 0.0
    %1867 = vmatpush1.msra.mxu0 0.0
    %1868 = vmatprep.subr.mxu0 0.0
    %1869 = vmatpush1.msra.mxu0 0.0
    %1870 = vmatprep.subr.mxu0 0.0
    %1871 = vmatpush1.msra.mxu0 0.0
    %1872 = vmatprep.mubr.f32.mxu0 0.0
    %v1873 = vand.u32 %v1269, 4294901760
    %1874 = vmatmul.mubr.f32.gmra.mrb[0].mxu0 %v1873
    %v1875 = vpop.f32.mrb[0].mxu0
    %v1876 = vadd.f32 %v1749, %v1875
    %v1877 = vpop.f32.mrb[0].mxu0
    %1878 = vmatprep.mubr.f32.mxu0 0.0
    %v1879 = vand.u32 %v1270, 4294901760
    %1880 = vmatmul.mubr.f32.gmra.mrb[0].mxu0 %v1879
    %v1881 = vpop.f32.mrb[0].mxu0
    %v1882 = vadd.f32 %v1757, %v1881
    %v1883 = vpop.f32.mrb[0].mxu0
    %1884 = vdwg.mxu0
    %1885 = vmatprep.subr.mxu0 0.0
    %v1886 = vand.u32 %v1271, 4294901760
    %1887 = vmatpush1.msra.mxu0 %v1886
    %1888 = vmatprep.subr.mxu0 0.0
    %v1889 = vand.u32 %v1272, 4294901760
    %1890 = vmatpush1.msra.mxu0 %v1889
    %1891 = vmatprep.subr.mxu0 0.0
    %v1892 = vand.u32 %v1273, 4294901760
    %1893 = vmatpush1.msra.mxu0 %v1892
    %1894 = vmatprep.subr.mxu0 0.0
    %v1895 = vand.u32 %v1274, 4294901760
    %1896 = vmatpush1.msra.mxu0 %v1895
    %1897 = vmatprep.subr.mxu0 0.0
    %v1898 = vand.u32 %v1275, 4294901760
    %1899 = vmatpush1.msra.mxu0 %v1898
    %1900 = vmatprep.subr.mxu0 0.0
    %v1901 = vand.u32 %v1276, 4294901760
    %1902 = vmatpush1.msra.mxu0 %v1901
    %1903 = vmatprep.subr.mxu0 0.0
    %v1904 = vand.u32 %v1277, 4294901760
    %1905 = vmatpush1.msra.mxu0 %v1904
    %1906 = vmatprep.subr.mxu0 0.0
    %v1907 = vand.u32 %v1278, 4294901760
    %1908 = vmatpush1.msra.mxu0 %v1907
    %1909 = vmatprep.subr.mxu0 0.0
    %v1910 = vand.u32 %v1279, 4294901760
    %1911 = vmatpush1.msra.mxu0 %v1910
    %1912 = vmatprep.subr.mxu0 0.0
    %v1913 = vand.u32 %v1280, 4294901760
    %1914 = vmatpush1.msra.mxu0 %v1913
    %1915 = vmatprep.subr.mxu0 0.0
    %v1916 = vand.u32 %v1281, 4294901760
    %1917 = vmatpush1.msra.mxu0 %v1916
    %1918 = vmatprep.subr.mxu0 0.0
    %v1919 = vand.u32 %v1282, 4294901760
    %1920 = vmatpush1.msra.mxu0 %v1919
    %1921 = vmatprep.subr.mxu0 0.0
    %v1922 = vand.u32 %v1283, 4294901760
    %1923 = vmatpush1.msra.mxu0 %v1922
    %1924 = vmatprep.subr.mxu0 0.0
    %v1925 = vand.u32 %v1284, 4294901760
    %1926 = vmatpush1.msra.mxu0 %v1925
    %1927 = vmatprep.subr.mxu0 0.0
    %v1928 = vand.u32 %v1285, 4294901760
    %1929 = vmatpush1.msra.mxu0 %v1928
    %1930 = vmatprep.subr.mxu0 0.0
    %v1931 = vand.u32 %v1286, 4294901760
    %1932 = vmatpush1.msra.mxu0 %v1931
    %1933 = vmatprep.subr.mxu0 0.0
    %1934 = vmatpush1.msra.mxu0 0.0
    %1935 = vmatprep.subr.mxu0 0.0
    %1936 = vmatpush1.msra.mxu0 0.0
    %1937 = vmatprep.subr.mxu0 0.0
    %1938 = vmatpush1.msra.mxu0 0.0
    %1939 = vmatprep.subr.mxu0 0.0
    %1940 = vmatpush1.msra.mxu0 0.0
    %1941 = vmatprep.subr.mxu0 0.0
    %1942 = vmatpush1.msra.mxu0 0.0
    %1943 = vmatprep.subr.mxu0 0.0
    %1944 = vmatpush1.msra.mxu0 0.0
    %1945 = vmatprep.subr.mxu0 0.0
    %1946 = vmatpush1.msra.mxu0 0.0
    %1947 = vmatprep.subr.mxu0 0.0
    %1948 = vmatpush1.msra.mxu0 0.0
    %1949 = vmatprep.subr.mxu0 0.0
    %1950 = vmatpush1.msra.mxu0 0.0
    %1951 = vmatprep.subr.mxu0 0.0
    %1952 = vmatpush1.msra.mxu0 0.0
    %1953 = vmatprep.subr.mxu0 0.0
    %1954 = vmatpush1.msra.mxu0 0.0
    %1955 = vmatprep.subr.mxu0 0.0
    %1956 = vmatpush1.msra.mxu0 0.0
    %1957 = vmatprep.subr.mxu0 0.0
    %1958 = vmatpush1.msra.mxu0 0.0
    %1959 = vmatprep.subr.mxu0 0.0
    %1960 = vmatpush1.msra.mxu0 0.0
    %1961 = vmatprep.subr.mxu0 0.0
    %1962 = vmatpush1.msra.mxu0 0.0
    %1963 = vmatprep.subr.mxu0 0.0
    %1964 = vmatpush1.msra.mxu0 0.0
    %1965 = vmatprep.mubr.f32.mxu0 0.0
    %v1966 = vand.u32 %v1269, 4294901760
    %1967 = vmatmul.mubr.f32.gmra.mrb[0].mxu0 %v1966
    %v1968 = vpop.f32.mrb[0].mxu0
    %v1969 = vadd.f32 %v1876, %v1968
    %v1970 = vpop.f32.mrb[0].mxu0
    %1971 = vmatprep.mubr.f32.mxu0 0.0
    %v1972 = vand.u32 %v1270, 4294901760
    %1973 = vmatmul.mubr.f32.gmra.mrb[0].mxu0 %v1972
    %v1974 = vpop.f32.mrb[0].mxu0
    %v1975 = vadd.f32 %v1882, %v1974
    %v1976 = vpop.f32.mrb[0].mxu0
    %1977 = vdwg.mxu0
    %vm1978 = vcmask 64512
    %1979 = vst.msk [vmem:[%s7] sm:$0xff] %vm1978, %v1969
    %1980 = vst.msk [vmem:[%s7 + $0x8] sm:$0xff] %vm1978, %v1975
    // Predicated region
    $region34: #{tpu_custom_call.1} parent=1 // pred_check
      _
    $region35: #{tpu_custom_call.1} parent=1 // pred_check_branch
      %1982 = sbr.rel (0) target = $region37
    $region36: #{tpu_custom_call.1} parent=1 // pred_region
      _
    $region37: #{tpu_custom_call.1} parent=1 // pred_fallthru
      _
    // Predicated region
    $region38: #{tpu_custom_call.1} parent=1 // pred_check
      _
    $region39: #{tpu_custom_call.1} parent=1 // pred_check_branch
      %1984 = sbr.rel (0) target = $region41
    $region40: #{tpu_custom_call.1} parent=1 // pred_region
      _
    $region41: #{tpu_custom_call.1} parent=1 // pred_fallthru
      _
    %1985 = vsyncpa [#allocation3], 1

</llo_original>
